<compile_context>
chip_gen: v7x
topology: tpu7x:2x2x1
jax: 0.10.0
libtpu: 0.0.40
codegen_flags: <defaults>
</compile_context>

<pallas_src>
import math
from functools import partial

import jax
import jax.numpy as jnp
from jax import lax
from jax.experimental import pallas as pl
from jax.experimental.pallas import tpu as pltpu


@partial(jax.jit, static_argnames=("hidden", "out_size"))
def decoder_block_forward(x, flat_params, *, hidden, out_size):
    """x: (B, S, D) float32, batch-first (matches the PyTorch module).

    Returns (B, S, out_size) float32 (eval mode: dropout=identity, BN running stats).
    """
    B, S, D = x.shape
    H = hidden
    E = out_size
    H2, H3, H6 = 2 * H, 3 * H, 6 * H
    assert 2 * H == D, "bidirectional GRU with hidden=D//2 must give 2H == D"

    # ---- host-side prep (fused into this jit): time-major, batch padded to 8 ----
    Bp = max(8, ((B + 7) // 8) * 8)
    x_tm = jnp.transpose(x, (1, 0, 2)).astype(jnp.float32)            # (S, B, D)
    if Bp != B:
        x_tm = jnp.pad(x_tm, ((0, 0), (0, Bp - B), (0, 0)))
    SB = S * Bp

    # ---- host-side parameter packing ---------------------------------------
    # Per layer: [W_ih_f|W_ih_b]^T -> (D,6H); block-diag [W_hh_f^T,0;0,W_hh_b^T]
    # -> (2H,6H); fused bias b_ih + [b_hh_r, b_hh_z, 0] per direction -> (1,6H);
    # b_hh_n (fwd|bwd) -> (1,2H).
    wih_l, whh_l, bias_l, bhhn_l = [], [], [], []
    for layer in range(2):
        base = layer * 8
        wih_f, whh_f, bih_f, bhh_f = flat_params[base:base + 4]
        wih_b, whh_b, bih_b, bhh_b = flat_params[base + 4:base + 8]
        zeros_h3 = jnp.zeros((H, H3), jnp.float32)
        wih_l.append(jnp.concatenate([wih_f, wih_b], axis=1))          # (D, 6H)
        whh_l.append(jnp.concatenate(
            [jnp.concatenate([whh_f, zeros_h3], axis=1),
             jnp.concatenate([zeros_h3, whh_b], axis=1)], axis=0))     # (2H, 6H)
        zrow = jnp.zeros((1, H), jnp.float32)
        bias_f = bih_f + jnp.concatenate([bhh_f[:, :H2], zrow], axis=1)
        bias_b = bih_b + jnp.concatenate([bhh_b[:, :H2], zrow], axis=1)
        bias_l.append(jnp.concatenate([bias_f, bias_b], axis=1))       # (1, 6H)
        bhhn_l.append(jnp.concatenate([bhh_f[:, H2:], bhh_b[:, H2:]], axis=1))  # (1, 2H)

    wih = jnp.stack(wih_l).astype(jnp.bfloat16)                        # (2, D, 6H)
    whh = jnp.stack(whh_l).astype(jnp.bfloat16)                        # (2, 2H, 6H)
    bias = jnp.stack(bias_l).astype(jnp.float32)                       # (2, 1, 6H)
    bhhn = jnp.stack(bhhn_l).astype(jnp.float32)                       # (2, 1, 2H)

    # Fold eval-mode BatchNorm1d into the Linear: y = LeakyReLU(h) @ W' + b'.
    bn_g, bn_b, bn_m, bn_v = flat_params[16:20]                        # (1, D) each
    lin_w, lin_b = flat_params[20], flat_params[21]                    # (D, E), (1, E)
    s = bn_g * lax.rsqrt(bn_v + 1e-5)                                  # (1, D)
    lin_w_f = (s.reshape(D, 1) * lin_w).astype(jnp.bfloat16)           # (D, E)
    lin_b_f = (lin_b + jnp.dot(bn_b - bn_m * s, lin_w)).astype(jnp.float32)  # (1, E)

    def kernel(x_ref, wih_ref, whh_ref, bias_ref, bhhn_ref, linw_ref, linb_ref,
               o_ref, gi_ref, hist_ref):
        # Whole-sequence input projection for BOTH directions of `layer`:
        #   gi = x @ [W_ih_f | W_ih_b]^T + fused_bias   -> (S*Bp, 6H)
        def project(x_flat_bf16, layer):
            gi_ref[...] = jnp.dot(x_flat_bf16, wih_ref[layer],
                                  preferred_element_type=jnp.float32) + bias_ref[layer]

        # Fused fwd+bwd recurrence: one (Bp,2H)@(2H,6H) matmul per step.
        def run_layer(layer):
            whh_blk = whh_ref[layer]                                   # (2H, 6H) bf16
            bhhn_lr = bhhn_ref[layer]                                  # (1, 2H)  f32
            bhhn_f = bhhn_lr[:, 0:H]
            bhhn_b = bhhn_lr[:, H:H2]

            def gates(gi, gh, h, bn):                                  # PyTorch [r,z,n]
                r = jax.nn.sigmoid(gi[:, 0:H] + gh[:, 0:H])
                z = jax.nn.sigmoid(gi[:, H:H2] + gh[:, H:H2])
                n = jnp.tanh(gi[:, H2:H3] + r * (gh[:, H2:H3] + bn))
                return (1.0 - z) * n + z * h

            def step(i, h_cat):                                        # h_cat: (Bp, 2H)
                tf = pl.multiple_of(i * Bp, Bp)
                tb = pl.multiple_of((S - 1 - i) * Bp, Bp)
                gh = jnp.dot(h_cat.astype(jnp.bfloat16), whh_blk,
                             preferred_element_type=jnp.float32)       # (Bp, 6H)
                gi_f = gi_ref[pl.ds(tf, Bp), 0:H3]
                gi_b = gi_ref[pl.ds(tb, Bp), H3:H6]
                hf = gates(gi_f, gh[:, 0:H3], h_cat[:, 0:H], bhhn_f)
                hb = gates(gi_b, gh[:, H3:H6], h_cat[:, H:H2], bhhn_b)
                hist_ref[pl.ds(tf, Bp), 0:H] = hf
                hist_ref[pl.ds(tb, Bp), H:H2] = hb
                return jnp.concatenate([hf, hb], axis=-1)

            h0 = jnp.zeros((Bp, H2), jnp.float32)
            lax.fori_loop(0, S, step, h0, unroll=True)

        # ----- GRU layer 0 (input = x) -----
        project(x_ref[...].reshape(SB, D).astype(jnp.bfloat16), 0)
        run_layer(0)
        # ----- GRU layer 1 (input = layer-0 fwd|bwd history; 2H == D) -----
        project(hist_ref[...].astype(jnp.bfloat16), 1)
        run_layer(1)                                   # overwrites hist in place

        # ----- expander (eval mode): LeakyReLU(0.2) -> (BN folded into) Linear -----
        # TODO(synk): training-mode Dropout masking and BatchNorm1d batch-statistic
        # updates have no state here; eval-mode semantics only.
        seq = hist_ref[...]                                            # (S*Bp, 2H)
        v = jnp.where(seq >= 0.0, seq, 0.2 * seq)
        y = jnp.dot(v.astype(jnp.bfloat16), linw_ref[...],
                    preferred_element_type=jnp.float32) + linb_ref[...]
        o_ref[...] = y.reshape(S, Bp, E)

    # TODO(synk): for large B on v7x, add a parallel grid axis over batch tiles
    # (dimension_semantics=("parallel",)) so the second TensorCore is used; at
    # B <= 8 a single program is the right shape.
    out = pl.pallas_call(
        kernel,
        out_shape=jax.ShapeDtypeStruct((S, Bp, E), jnp.float32),
        in_specs=[pl.BlockSpec(memory_space=pltpu.MemorySpace.VMEM)] * 7,
        out_specs=pl.BlockSpec(memory_space=pltpu.MemorySpace.VMEM),
        scratch_shapes=[
            pltpu.VMEM((SB, H6), jnp.float32),   # gi   (reused by both layers)
            pltpu.VMEM((SB, H2), jnp.float32),   # hist (reused by both layers)
        ],
    )(x_tm, wih, whh, bias, bhhn, lin_w_f, lin_b_f)

    y = jnp.transpose(out, (1, 0, 2))                                  # (Bp, S, E)
    return y[:B]


def init_params(key, input_size, output_size):
    """Deterministic synthetic parameters matching the PyTorch module's shapes."""
    D = input_size
    H = input_size // 2
    E = output_size
    keys = iter(jax.random.split(key, 64))

    def unif(k, shape, bound):
        return jax.random.uniform(k, shape, jnp.float32, -bound, bound)

    params = []
    k_gru = 1.0 / math.sqrt(H)
    # 2 layers x (forward, backward); layer-1 input size is 2H == D.
    for layer in range(2):
        din = D if layer == 0 else 2 * H
        for _direction in range(2):
            params.append(unif(next(keys), (din, 3 * H), k_gru))   # W_ih^T
            params.append(unif(next(keys), (H, 3 * H), k_gru))     # W_hh^T
            params.append(unif(next(keys), (1, 3 * H), k_gru))     # b_ih
            params.append(unif(next(keys), (1, 3 * H), k_gru))     # b_hh

    # BatchNorm1d(num_features=D): gamma, beta, running_mean, running_var
    params.append(jnp.ones((1, D), jnp.float32) + 0.1 * unif(next(keys), (1, D), 1.0))
    params.append(0.1 * unif(next(keys), (1, D), 1.0))
    params.append(jnp.zeros((1, D), jnp.float32))
    params.append(jnp.ones((1, D), jnp.float32))

    # Linear(D, E)
    k_lin = 1.0 / math.sqrt(D)
    params.append(unif(next(keys), (D, E), k_lin))                 # W^T
    params.append(unif(next(keys), (1, E), k_lin))                 # b
    return params


if __name__ == "__main__":
    B, S = 4, 8            # batch, seq_len
    INPUT_SIZE = 32        # n_features (must be even: hidden = input_size // 2)
    OUTPUT_SIZE = 24
    HIDDEN = INPUT_SIZE // 2

    key = jax.random.PRNGKey(0)
    kx, kp = jax.random.split(key)
    x = jax.random.normal(kx, (B, S, INPUT_SIZE), jnp.float32)
    params = init_params(kp, INPUT_SIZE, OUTPUT_SIZE)

    y = decoder_block_forward(x, params, hidden=HIDDEN, out_size=OUTPUT_SIZE)
    y = jax.block_until_ready(y)

    assert y.shape == (B, S, OUTPUT_SIZE), y.shape
    assert bool(jnp.all(jnp.isfinite(y)))
    print("KERNEL_OK")
</pallas_src>

<mosaic_0001>
module attributes {stable_mosaic.version = 11 : i64} {
  func.func @kernel(%arg0: memref<8x8x32xf32, #tpu.memory_space<vmem>>, %arg1: memref<2x32x96xbf16, #tpu.memory_space<vmem>>, %arg2: memref<2x32x96xbf16, #tpu.memory_space<vmem>>, %arg3: memref<2x1x96xf32, #tpu.memory_space<vmem>>, %arg4: memref<2x1x32xf32, #tpu.memory_space<vmem>>, %arg5: memref<32x24xbf16, #tpu.memory_space<vmem>>, %arg6: memref<1x24xf32, #tpu.memory_space<vmem>>, %arg7: memref<8x8x24xf32, #tpu.memory_space<vmem>>, %arg8: memref<64x96xf32, #tpu.memory_space<vmem>>, %arg9: memref<64x32xf32, #tpu.memory_space<vmem>>) attributes {dimension_semantics = [], scalar_prefetch = 0 : i64, scratch_operands = 2 : i64, tpu.core_type = #tpu.core_type<tc>} {
    %c0 = arith.constant 0 : index
    %c0_0 = arith.constant 0 : index
    %c0_1 = arith.constant 0 : index
    %0 = vector.load %arg0[%c0, %c0_0, %c0_1] : memref<8x8x32xf32, #tpu.memory_space<vmem>>, vector<8x8x32xf32>
    %1 = vector.shape_cast %0 : vector<8x8x32xf32> to vector<64x32xf32>
    %2 = arith.truncf %1 : vector<64x32xf32> to vector<64x32xbf16>
    %c0_2 = arith.constant 0 : index
    %c0_3 = arith.constant 0 : index
    %c0_4 = arith.constant 0 : index
    %3 = vector.load %arg1[%c0_2, %c0_3, %c0_4] : memref<2x32x96xbf16, #tpu.memory_space<vmem>>, vector<1x32x96xbf16>
    %4 = vector.shape_cast %3 : vector<1x32x96xbf16> to vector<32x96xbf16>
    %cst = arith.constant dense<0.000000e+00> : vector<64x96xf32>
    %5 = tpu.matmul %2, %4, %cst {dimension_numbers = #tpu.dot_dimension_numbers<[1], [0], [0], [1], [0, 0, 1, 1], [], []>} : vector<64x32xbf16>, vector<32x96xbf16>, vector<64x96xf32> -> vector<64x96xf32>
    %c0_5 = arith.constant 0 : index
    %c0_6 = arith.constant 0 : index
    %c0_7 = arith.constant 0 : index
    %6 = vector.load %arg3[%c0_5, %c0_6, %c0_7] : memref<2x1x96xf32, #tpu.memory_space<vmem>>, vector<1x1x96xf32>
    %7 = vector.shape_cast %6 : vector<1x1x96xf32> to vector<1x96xf32>
    %8 = vector.broadcast %7 : vector<1x96xf32> to vector<64x96xf32>
    %9 = arith.addf %5, %8 : vector<64x96xf32>
    %c0_8 = arith.constant 0 : index
    %c0_9 = arith.constant 0 : index
    %10 = vector.load %arg8[%c0_8, %c0_9] : memref<64x96xf32, #tpu.memory_space<vmem>>, vector<64x96xf32>
    tpu.vector_store %arg8[%c0_8, %c0_9], %9 {strides = array<i32>} : memref<64x96xf32, #tpu.memory_space<vmem>>, vector<64x96xf32>,
    %c0_10 = arith.constant 0 : index
    %c0_11 = arith.constant 0 : index
    %c0_12 = arith.constant 0 : index
    %11 = vector.load %arg2[%c0_10, %c0_11, %c0_12] : memref<2x32x96xbf16, #tpu.memory_space<vmem>>, vector<1x32x96xbf16>
    %12 = vector.shape_cast %11 : vector<1x32x96xbf16> to vector<32x96xbf16>
    %c0_13 = arith.constant 0 : index
    %c0_14 = arith.constant 0 : index
    %c0_15 = arith.constant 0 : index
    %13 = vector.load %arg4[%c0_13, %c0_14, %c0_15] : memref<2x1x32xf32, #tpu.memory_space<vmem>>, vector<1x1x32xf32>
    %14 = vector.shape_cast %13 : vector<1x1x32xf32> to vector<1x32xf32>
    %15 = vector.extract_strided_slice %14 {offsets = [0, 0], sizes = [1, 16], strides = [1, 1]} : vector<1x32xf32> to vector<1x16xf32>
    %16 = vector.extract_strided_slice %14 {offsets = [0, 16], sizes = [1, 16], strides = [1, 1]} : vector<1x32xf32> to vector<1x16xf32>
    %cst_16 = arith.constant 0.000000e+00 : f32
    %17 = vector.broadcast %cst_16 : f32 to vector<8x32xf32>
    %c0_i32 = arith.constant 0 : i32
    %c8_i32 = arith.constant 8 : i32
    %18 = arith.muli %c0_i32, %c8_i32 : i32
    %19 = tpu.assume_multiple %18, 8 : i32
    %c7_i32 = arith.constant 7 : i32
    %20 = arith.subi %c7_i32, %c0_i32 : i32
    %c8_i32_17 = arith.constant 8 : i32
    %21 = arith.muli %20, %c8_i32_17 : i32
    %22 = tpu.assume_multiple %21, 8 : i32
    %23 = arith.truncf %17 : vector<8x32xf32> to vector<8x32xbf16>
    %cst_18 = arith.constant dense<0.000000e+00> : vector<8x96xf32>
    %24 = tpu.matmul %23, %12, %cst_18 {dimension_numbers = #tpu.dot_dimension_numbers<[1], [0], [0], [1], [0, 0, 1, 1], [], []>} : vector<8x32xbf16>, vector<32x96xbf16>, vector<8x96xf32> -> vector<8x96xf32>
    %25 = arith.index_cast %19 : i32 to index
    %c0_19 = arith.constant 0 : index
    %26 = vector.load %arg8[%25, %c0_19] : memref<64x96xf32, #tpu.memory_space<vmem>>, vector<8x48xf32>
    %27 = arith.index_cast %22 : i32 to index
    %c48 = arith.constant 48 : index
    %28 = vector.load %arg8[%27, %c48] : memref<64x96xf32, #tpu.memory_space<vmem>>, vector<8x48xf32>
    %29 = vector.extract_strided_slice %24 {offsets = [0, 0], sizes = [8, 48], strides = [1, 1]} : vector<8x96xf32> to vector<8x48xf32>
    %30 = vector.extract_strided_slice %17 {offsets = [0, 0], sizes = [8, 16], strides = [1, 1]} : vector<8x32xf32> to vector<8x16xf32>
    %31 = vector.extract_strided_slice %26 {offsets = [0, 0], sizes = [8, 16], strides = [1, 1]} : vector<8x48xf32> to vector<8x16xf32>
    %32 = vector.extract_strided_slice %29 {offsets = [0, 0], sizes = [8, 16], strides = [1, 1]} : vector<8x48xf32> to vector<8x16xf32>
    %33 = arith.addf %31, %32 : vector<8x16xf32>
    %34 = arith.negf %33 : vector<8x16xf32>
    %35 = math.exp %34 : vector<8x16xf32>
    %cst_20 = arith.constant 1.000000e+00 : f32
    %36 = vector.broadcast %cst_20 : f32 to vector<8x16xf32>
    %37 = arith.addf %36, %35 : vector<8x16xf32>
    %38 = arith.divf %36, %37 : vector<8x16xf32>
    %39 = vector.extract_strided_slice %26 {offsets = [0, 16], sizes = [8, 16], strides = [1, 1]} : vector<8x48xf32> to vector<8x16xf32>
    %40 = vector.extract_strided_slice %29 {offsets = [0, 16], sizes = [8, 16], strides = [1, 1]} : vector<8x48xf32> to vector<8x16xf32>
    %41 = arith.addf %39, %40 : vector<8x16xf32>
    %42 = arith.negf %41 : vector<8x16xf32>
    %43 = math.exp %42 : vector<8x16xf32>
    %cst_21 = arith.constant 1.000000e+00 : f32
    %44 = vector.broadcast %cst_21 : f32 to vector<8x16xf32>
    %45 = arith.addf %44, %43 : vector<8x16xf32>
    %46 = arith.divf %44, %45 : vector<8x16xf32>
    %47 = vector.extract_strided_slice %26 {offsets = [0, 32], sizes = [8, 16], strides = [1, 1]} : vector<8x48xf32> to vector<8x16xf32>
    %48 = vector.extract_strided_slice %29 {offsets = [0, 32], sizes = [8, 16], strides = [1, 1]} : vector<8x48xf32> to vector<8x16xf32>
    %49 = vector.broadcast %15 : vector<1x16xf32> to vector<8x16xf32>
    %50 = arith.addf %48, %49 : vector<8x16xf32>
    %51 = arith.mulf %38, %50 : vector<8x16xf32>
    %52 = arith.addf %47, %51 : vector<8x16xf32>
    %53 = math.tanh %52 : vector<8x16xf32>
    %cst_22 = arith.constant 1.000000e+00 : f32
    %54 = vector.broadcast %cst_22 : f32 to vector<8x16xf32>
    %55 = arith.subf %54, %46 : vector<8x16xf32>
    %56 = arith.mulf %55, %53 : vector<8x16xf32>
    %57 = arith.mulf %46, %30 : vector<8x16xf32>
    %58 = arith.addf %56, %57 : vector<8x16xf32>
    %59 = vector.extract_strided_slice %24 {offsets = [0, 48], sizes = [8, 48], strides = [1, 1]} : vector<8x96xf32> to vector<8x48xf32>
    %60 = vector.extract_strided_slice %17 {offsets = [0, 16], sizes = [8, 16], strides = [1, 1]} : vector<8x32xf32> to vector<8x16xf32>
    %61 = vector.extract_strided_slice %28 {offsets = [0, 0], sizes = [8, 16], strides = [1, 1]} : vector<8x48xf32> to vector<8x16xf32>
    %62 = vector.extract_strided_slice %59 {offsets = [0, 0], sizes = [8, 16], strides = [1, 1]} : vector<8x48xf32> to vector<8x16xf32>
    %63 = arith.addf %61, %62 : vector<8x16xf32>
    %64 = arith.negf %63 : vector<8x16xf32>
    %65 = math.exp %64 : vector<8x16xf32>
    %cst_23 = arith.constant 1.000000e+00 : f32
    %66 = vector.broadcast %cst_23 : f32 to vector<8x16xf32>
    %67 = arith.addf %66, %65 : vector<8x16xf32>
    %68 = arith.divf %66, %67 : vector<8x16xf32>
    %69 = vector.extract_strided_slice %28 {offsets = [0, 16], sizes = [8, 16], strides = [1, 1]} : vector<8x48xf32> to vector<8x16xf32>
    %70 = vector.extract_strided_slice %59 {offsets = [0, 16], sizes = [8, 16], strides = [1, 1]} : vector<8x48xf32> to vector<8x16xf32>
    %71 = arith.addf %69, %70 : vector<8x16xf32>
    %72 = arith.negf %71 : vector<8x16xf32>
    %73 = math.exp %72 : vector<8x16xf32>
    %cst_24 = arith.constant 1.000000e+00 : f32
    %74 = vector.broadcast %cst_24 : f32 to vector<8x16xf32>
    %75 = arith.addf %74, %73 : vector<8x16xf32>
    %76 = arith.divf %74, %75 : vector<8x16xf32>
    %77 = vector.extract_strided_slice %28 {offsets = [0, 32], sizes = [8, 16], strides = [1, 1]} : vector<8x48xf32> to vector<8x16xf32>
    %78 = vector.extract_strided_slice %59 {offsets = [0, 32], sizes = [8, 16], strides = [1, 1]} : vector<8x48xf32> to vector<8x16xf32>
    %79 = vector.broadcast %16 : vector<1x16xf32> to vector<8x16xf32>
    %80 = arith.addf %78, %79 : vector<8x16xf32>
    %81 = arith.mulf %68, %80 : vector<8x16xf32>
    %82 = arith.addf %77, %81 : vector<8x16xf32>
    %83 = math.tanh %82 : vector<8x16xf32>
    %cst_25 = arith.constant 1.000000e+00 : f32
    %84 = vector.broadcast %cst_25 : f32 to vector<8x16xf32>
    %85 = arith.subf %84, %76 : vector<8x16xf32>
    %86 = arith.mulf %85, %83 : vector<8x16xf32>
    %87 = arith.mulf %76, %60 : vector<8x16xf32>
    %88 = arith.addf %86, %87 : vector<8x16xf32>
    %89 = arith.index_cast %19 : i32 to index
    %c0_26 = arith.constant 0 : index
    %90 = vector.load %arg9[%89, %c0_26] : memref<64x32xf32, #tpu.memory_space<vmem>>, vector<8x16xf32>
    tpu.vector_store %arg9[%89, %c0_26], %58 {strides = array<i32>} : memref<64x32xf32, #tpu.memory_space<vmem>>, vector<8x16xf32>,
    %91 = arith.index_cast %22 : i32 to index
    %c16 = arith.constant 16 : index
    %92 = vector.load %arg9[%91, %c16] : memref<64x32xf32, #tpu.memory_space<vmem>>, vector<8x16xf32>
    tpu.vector_store %arg9[%91, %c16], %88 {strides = array<i32>} : memref<64x32xf32, #tpu.memory_space<vmem>>, vector<8x16xf32>,
    %93 = tpu.concatenate %58, %88 in 1 : vector<8x16xf32>, vector<8x16xf32> -> vector<8x32xf32>
    %c1_i32 = arith.constant 1 : i32
    %c8_i32_27 = arith.constant 8 : i32
    %94 = arith.muli %c1_i32, %c8_i32_27 : i32
    %95 = tpu.assume_multiple %94, 8 : i32
    %c7_i32_28 = arith.constant 7 : i32
    %96 = arith.subi %c7_i32_28, %c1_i32 : i32
    %c8_i32_29 = arith.constant 8 : i32
    %97 = arith.muli %96, %c8_i32_29 : i32
    %98 = tpu.assume_multiple %97, 8 : i32
    %99 = arith.truncf %93 : vector<8x32xf32> to vector<8x32xbf16>
    %cst_30 = arith.constant dense<0.000000e+00> : vector<8x96xf32>
    %100 = tpu.matmul %99, %12, %cst_30 {dimension_numbers = #tpu.dot_dimension_numbers<[1], [0], [0], [1], [0, 0, 1, 1], [], []>} : vector<8x32xbf16>, vector<32x96xbf16>, vector<8x96xf32> -> vector<8x96xf32>
    %101 = arith.index_cast %95 : i32 to index
    %c0_31 = arith.constant 0 : index
    %102 = vector.load %arg8[%101, %c0_31] : memref<64x96xf32, #tpu.memory_space<vmem>>, vector<8x48xf32>
    %103 = arith.index_cast %98 : i32 to index
    %c48_32 = arith.constant 48 : index
    %104 = vector.load %arg8[%103, %c48_32] : memref<64x96xf32, #tpu.memory_space<vmem>>, vector<8x48xf32>
    %105 = vector.extract_strided_slice %100 {offsets = [0, 0], sizes = [8, 48], strides = [1, 1]} : vector<8x96xf32> to vector<8x48xf32>
    %106 = vector.extract_strided_slice %93 {offsets = [0, 0], sizes = [8, 16], strides = [1, 1]} : vector<8x32xf32> to vector<8x16xf32>
    %107 = vector.extract_strided_slice %102 {offsets = [0, 0], sizes = [8, 16], strides = [1, 1]} : vector<8x48xf32> to vector<8x16xf32>
    %108 = vector.extract_strided_slice %105 {offsets = [0, 0], sizes = [8, 16], strides = [1, 1]} : vector<8x48xf32> to vector<8x16xf32>
    %109 = arith.addf %107, %108 : vector<8x16xf32>
    %110 = arith.negf %109 : vector<8x16xf32>
    %111 = math.exp %110 : vector<8x16xf32>
    %cst_33 = arith.constant 1.000000e+00 : f32
    %112 = vector.broadcast %cst_33 : f32 to vector<8x16xf32>
    %113 = arith.addf %112, %111 : vector<8x16xf32>
    %114 = arith.divf %112, %113 : vector<8x16xf32>
    %115 = vector.extract_strided_slice %102 {offsets = [0, 16], sizes = [8, 16], strides = [1, 1]} : vector<8x48xf32> to vector<8x16xf32>
    %116 = vector.extract_strided_slice %105 {offsets = [0, 16], sizes = [8, 16], strides = [1, 1]} : vector<8x48xf32> to vector<8x16xf32>
    %117 = arith.addf %115, %116 : vector<8x16xf32>
    %118 = arith.negf %117 : vector<8x16xf32>
    %119 = math.exp %118 : vector<8x16xf32>
    %cst_34 = arith.constant 1.000000e+00 : f32
    %120 = vector.broadcast %cst_34 : f32 to vector<8x16xf32>
    %121 = arith.addf %120, %119 : vector<8x16xf32>
    %122 = arith.divf %120, %121 : vector<8x16xf32>
    %123 = vector.extract_strided_slice %102 {offsets = [0, 32], sizes = [8, 16], strides = [1, 1]} : vector<8x48xf32> to vector<8x16xf32>
    %124 = vector.extract_strided_slice %105 {offsets = [0, 32], sizes = [8, 16], strides = [1, 1]} : vector<8x48xf32> to vector<8x16xf32>
    %125 = vector.broadcast %15 : vector<1x16xf32> to vector<8x16xf32>
    %126 = arith.addf %124, %125 : vector<8x16xf32>
    %127 = arith.mulf %114, %126 : vector<8x16xf32>
    %128 = arith.addf %123, %127 : vector<8x16xf32>
    %129 = math.tanh %128 : vector<8x16xf32>
    %cst_35 = arith.constant 1.000000e+00 : f32
    %130 = vector.broadcast %cst_35 : f32 to vector<8x16xf32>
    %131 = arith.subf %130, %122 : vector<8x16xf32>
    %132 = arith.mulf %131, %129 : vector<8x16xf32>
    %133 = arith.mulf %122, %106 : vector<8x16xf32>
    %134 = arith.addf %132, %133 : vector<8x16xf32>
    %135 = vector.extract_strided_slice %100 {offsets = [0, 48], sizes = [8, 48], strides = [1, 1]} : vector<8x96xf32> to vector<8x48xf32>
    %136 = vector.extract_strided_slice %93 {offsets = [0, 16], sizes = [8, 16], strides = [1, 1]} : vector<8x32xf32> to vector<8x16xf32>
    %137 = vector.extract_strided_slice %104 {offsets = [0, 0], sizes = [8, 16], strides = [1, 1]} : vector<8x48xf32> to vector<8x16xf32>
    %138 = vector.extract_strided_slice %135 {offsets = [0, 0], sizes = [8, 16], strides = [1, 1]} : vector<8x48xf32> to vector<8x16xf32>
    %139 = arith.addf %137, %138 : vector<8x16xf32>
    %140 = arith.negf %139 : vector<8x16xf32>
    %141 = math.exp %140 : vector<8x16xf32>
    %cst_36 = arith.constant 1.000000e+00 : f32
    %142 = vector.broadcast %cst_36 : f32 to vector<8x16xf32>
    %143 = arith.addf %142, %141 : vector<8x16xf32>
    %144 = arith.divf %142, %143 : vector<8x16xf32>
    %145 = vector.extract_strided_slice %104 {offsets = [0, 16], sizes = [8, 16], strides = [1, 1]} : vector<8x48xf32> to vector<8x16xf32>
    %146 = vector.extract_strided_slice %135 {offsets = [0, 16], sizes = [8, 16], strides = [1, 1]} : vector<8x48xf32> to vector<8x16xf32>
    %147 = arith.addf %145, %146 : vector<8x16xf32>
    %148 = arith.negf %147 : vector<8x16xf32>
    %149 = math.exp %148 : vector<8x16xf32>
    %cst_37 = arith.constant 1.000000e+00 : f32
    %150 = vector.broadcast %cst_37 : f32 to vector<8x16xf32>
    %151 = arith.addf %150, %149 : vector<8x16xf32>
    %152 = arith.divf %150, %151 : vector<8x16xf32>
    %153 = vector.extract_strided_slice %104 {offsets = [0, 32], sizes = [8, 16], strides = [1, 1]} : vector<8x48xf32> to vector<8x16xf32>
    %154 = vector.extract_strided_slice %135 {offsets = [0, 32], sizes = [8, 16], strides = [1, 1]} : vector<8x48xf32> to vector<8x16xf32>
    %155 = vector.broadcast %16 : vector<1x16xf32> to vector<8x16xf32>
    %156 = arith.addf %154, %155 : vector<8x16xf32>
    %157 = arith.mulf %144, %156 : vector<8x16xf32>
    %158 = arith.addf %153, %157 : vector<8x16xf32>
    %159 = math.tanh %158 : vector<8x16xf32>
    %cst_38 = arith.constant 1.000000e+00 : f32
    %160 = vector.broadcast %cst_38 : f32 to vector<8x16xf32>
    %161 = arith.subf %160, %152 : vector<8x16xf32>
    %162 = arith.mulf %161, %159 : vector<8x16xf32>
    %163 = arith.mulf %152, %136 : vector<8x16xf32>
    %164 = arith.addf %162, %163 : vector<8x16xf32>
    %165 = arith.index_cast %95 : i32 to index
    %c0_39 = arith.constant 0 : index
    %166 = vector.load %arg9[%165, %c0_39] : memref<64x32xf32, #tpu.memory_space<vmem>>, vector<8x16xf32>
    tpu.vector_store %arg9[%165, %c0_39], %134 {strides = array<i32>} : memref<64x32xf32, #tpu.memory_space<vmem>>, vector<8x16xf32>,
    %167 = arith.index_cast %98 : i32 to index
    %c16_40 = arith.constant 16 : index
    %168 = vector.load %arg9[%167, %c16_40] : memref<64x32xf32, #tpu.memory_space<vmem>>, vector<8x16xf32>
    tpu.vector_store %arg9[%167, %c16_40], %164 {strides = array<i32>} : memref<64x32xf32, #tpu.memory_space<vmem>>, vector<8x16xf32>,
    %169 = tpu.concatenate %134, %164 in 1 : vector<8x16xf32>, vector<8x16xf32> -> vector<8x32xf32>
    %c2_i32 = arith.constant 2 : i32
    %c8_i32_41 = arith.constant 8 : i32
    %170 = arith.muli %c2_i32, %c8_i32_41 : i32
    %171 = tpu.assume_multiple %170, 8 : i32
    %c7_i32_42 = arith.constant 7 : i32
    %172 = arith.subi %c7_i32_42, %c2_i32 : i32
    %c8_i32_43 = arith.constant 8 : i32
    %173 = arith.muli %172, %c8_i32_43 : i32
    %174 = tpu.assume_multiple %173, 8 : i32
    %175 = arith.truncf %169 : vector<8x32xf32> to vector<8x32xbf16>
    %cst_44 = arith.constant dense<0.000000e+00> : vector<8x96xf32>
    %176 = tpu.matmul %175, %12, %cst_44 {dimension_numbers = #tpu.dot_dimension_numbers<[1], [0], [0], [1], [0, 0, 1, 1], [], []>} : vector<8x32xbf16>, vector<32x96xbf16>, vector<8x96xf32> -> vector<8x96xf32>
    %177 = arith.index_cast %171 : i32 to index
    %c0_45 = arith.constant 0 : index
    %178 = vector.load %arg8[%177, %c0_45] : memref<64x96xf32, #tpu.memory_space<vmem>>, vector<8x48xf32>
    %179 = arith.index_cast %174 : i32 to index
    %c48_46 = arith.constant 48 : index
    %180 = vector.load %arg8[%179, %c48_46] : memref<64x96xf32, #tpu.memory_space<vmem>>, vector<8x48xf32>
    %181 = vector.extract_strided_slice %176 {offsets = [0, 0], sizes = [8, 48], strides = [1, 1]} : vector<8x96xf32> to vector<8x48xf32>
    %182 = vector.extract_strided_slice %169 {offsets = [0, 0], sizes = [8, 16], strides = [1, 1]} : vector<8x32xf32> to vector<8x16xf32>
    %183 = vector.extract_strided_slice %178 {offsets = [0, 0], sizes = [8, 16], strides = [1, 1]} : vector<8x48xf32> to vector<8x16xf32>
    %184 = vector.extract_strided_slice %181 {offsets = [0, 0], sizes = [8, 16], strides = [1, 1]} : vector<8x48xf32> to vector<8x16xf32>
    %185 = arith.addf %183, %184 : vector<8x16xf32>
    %186 = arith.negf %185 : vector<8x16xf32>
    %187 = math.exp %186 : vector<8x16xf32>
    %cst_47 = arith.constant 1.000000e+00 : f32
    %188 = vector.broadcast %cst_47 : f32 to vector<8x16xf32>
    %189 = arith.addf %188, %187 : vector<8x16xf32>
    %190 = arith.divf %188, %189 : vector<8x16xf32>
    %191 = vector.extract_strided_slice %178 {offsets = [0, 16], sizes = [8, 16], strides = [1, 1]} : vector<8x48xf32> to vector<8x16xf32>
    %192 = vector.extract_strided_slice %181 {offsets = [0, 16], sizes = [8, 16], strides = [1, 1]} : vector<8x48xf32> to vector<8x16xf32>
    %193 = arith.addf %191, %192 : vector<8x16xf32>
    %194 = arith.negf %193 : vector<8x16xf32>
    %195 = math.exp %194 : vector<8x16xf32>
    %cst_48 = arith.constant 1.000000e+00 : f32
    %196 = vector.broadcast %cst_48 : f32 to vector<8x16xf32>
    %197 = arith.addf %196, %195 : vector<8x16xf32>
    %198 = arith.divf %196, %197 : vector<8x16xf32>
    %199 = vector.extract_strided_slice %178 {offsets = [0, 32], sizes = [8, 16], strides = [1, 1]} : vector<8x48xf32> to vector<8x16xf32>
    %200 = vector.extract_strided_slice %181 {offsets = [0, 32], sizes = [8, 16], strides = [1, 1]} : vector<8x48xf32> to vector<8x16xf32>
    %201 = vector.broadcast %15 : vector<1x16xf32> to vector<8x16xf32>
    %202 = arith.addf %200, %201 : vector<8x16xf32>
    %203 = arith.mulf %190, %202 : vector<8x16xf32>
    %204 = arith.addf %199, %203 : vector<8x16xf32>
    %205 = math.tanh %204 : vector<8x16xf32>
    %cst_49 = arith.constant 1.000000e+00 : f32
    %206 = vector.broadcast %cst_49 : f32 to vector<8x16xf32>
    %207 = arith.subf %206, %198 : vector<8x16xf32>
    %208 = arith.mulf %207, %205 : vector<8x16xf32>
    %209 = arith.mulf %198, %182 : vector<8x16xf32>
    %210 = arith.addf %208, %209 : vector<8x16xf32>
    %211 = vector.extract_strided_slice %176 {offsets = [0, 48], sizes = [8, 48], strides = [1, 1]} : vector<8x96xf32> to vector<8x48xf32>
    %212 = vector.extract_strided_slice %169 {offsets = [0, 16], sizes = [8, 16], strides = [1, 1]} : vector<8x32xf32> to vector<8x16xf32>
    %213 = vector.extract_strided_slice %180 {offsets = [0, 0], sizes = [8, 16], strides = [1, 1]} : vector<8x48xf32> to vector<8x16xf32>
    %214 = vector.extract_strided_slice %211 {offsets = [0, 0], sizes = [8, 16], strides = [1, 1]} : vector<8x48xf32> to vector<8x16xf32>
    %215 = arith.addf %213, %214 : vector<8x16xf32>
    %216 = arith.negf %215 : vector<8x16xf32>
    %217 = math.exp %216 : vector<8x16xf32>
    %cst_50 = arith.constant 1.000000e+00 : f32
    %218 = vector.broadcast %cst_50 : f32 to vector<8x16xf32>
    %219 = arith.addf %218, %217 : vector<8x16xf32>
    %220 = arith.divf %218, %219 : vector<8x16xf32>
    %221 = vector.extract_strided_slice %180 {offsets = [0, 16], sizes = [8, 16], strides = [1, 1]} : vector<8x48xf32> to vector<8x16xf32>
    %222 = vector.extract_strided_slice %211 {offsets = [0, 16], sizes = [8, 16], strides = [1, 1]} : vector<8x48xf32> to vector<8x16xf32>
    %223 = arith.addf %221, %222 : vector<8x16xf32>
    %224 = arith.negf %223 : vector<8x16xf32>
    %225 = math.exp %224 : vector<8x16xf32>
    %cst_51 = arith.constant 1.000000e+00 : f32
    %226 = vector.broadcast %cst_51 : f32 to vector<8x16xf32>
    %227 = arith.addf %226, %225 : vector<8x16xf32>
    %228 = arith.divf %226, %227 : vector<8x16xf32>
    %229 = vector.extract_strided_slice %180 {offsets = [0, 32], sizes = [8, 16], strides = [1, 1]} : vector<8x48xf32> to vector<8x16xf32>
    %230 = vector.extract_strided_slice %211 {offsets = [0, 32], sizes = [8, 16], strides = [1, 1]} : vector<8x48xf32> to vector<8x16xf32>
    %231 = vector.broadcast %16 : vector<1x16xf32> to vector<8x16xf32>
    %232 = arith.addf %230, %231 : vector<8x16xf32>
    %233 = arith.mulf %220, %232 : vector<8x16xf32>
    %234 = arith.addf %229, %233 : vector<8x16xf32>
    %235 = math.tanh %234 : vector<8x16xf32>
    %cst_52 = arith.constant 1.000000e+00 : f32
    %236 = vector.broadcast %cst_52 : f32 to vector<8x16xf32>
    %237 = arith.subf %236, %228 : vector<8x16xf32>
    %238 = arith.mulf %237, %235 : vector<8x16xf32>
    %239 = arith.mulf %228, %212 : vector<8x16xf32>
    %240 = arith.addf %238, %239 : vector<8x16xf32>
    %241 = arith.index_cast %171 : i32 to index
    %c0_53 = arith.constant 0 : index
    %242 = vector.load %arg9[%241, %c0_53] : memref<64x32xf32, #tpu.memory_space<vmem>>, vector<8x16xf32>
    tpu.vector_store %arg9[%241, %c0_53], %210 {strides = array<i32>} : memref<64x32xf32, #tpu.memory_space<vmem>>, vector<8x16xf32>,
    %243 = arith.index_cast %174 : i32 to index
    %c16_54 = arith.constant 16 : index
    %244 = vector.load %arg9[%243, %c16_54] : memref<64x32xf32, #tpu.memory_space<vmem>>, vector<8x16xf32>
    tpu.vector_store %arg9[%243, %c16_54], %240 {strides = array<i32>} : memref<64x32xf32, #tpu.memory_space<vmem>>, vector<8x16xf32>,
    %245 = tpu.concatenate %210, %240 in 1 : vector<8x16xf32>, vector<8x16xf32> -> vector<8x32xf32>
    %c3_i32 = arith.constant 3 : i32
    %c8_i32_55 = arith.constant 8 : i32
    %246 = arith.muli %c3_i32, %c8_i32_55 : i32
    %247 = tpu.assume_multiple %246, 8 : i32
    %c7_i32_56 = arith.constant 7 : i32
    %248 = arith.subi %c7_i32_56, %c3_i32 : i32
    %c8_i32_57 = arith.constant 8 : i32
    %249 = arith.muli %248, %c8_i32_57 : i32
    %250 = tpu.assume_multiple %249, 8 : i32
    %251 = arith.truncf %245 : vector<8x32xf32> to vector<8x32xbf16>
    %cst_58 = arith.constant dense<0.000000e+00> : vector<8x96xf32>
    %252 = tpu.matmul %251, %12, %cst_58 {dimension_numbers = #tpu.dot_dimension_numbers<[1], [0], [0], [1], [0, 0, 1, 1], [], []>} : vector<8x32xbf16>, vector<32x96xbf16>, vector<8x96xf32> -> vector<8x96xf32>
    %253 = arith.index_cast %247 : i32 to index
    %c0_59 = arith.constant 0 : index
    %254 = vector.load %arg8[%253, %c0_59] : memref<64x96xf32, #tpu.memory_space<vmem>>, vector<8x48xf32>
    %255 = arith.index_cast %250 : i32 to index
    %c48_60 = arith.constant 48 : index
    %256 = vector.load %arg8[%255, %c48_60] : memref<64x96xf32, #tpu.memory_space<vmem>>, vector<8x48xf32>
    %257 = vector.extract_strided_slice %252 {offsets = [0, 0], sizes = [8, 48], strides = [1, 1]} : vector<8x96xf32> to vector<8x48xf32>
    %258 = vector.extract_strided_slice %245 {offsets = [0, 0], sizes = [8, 16], strides = [1, 1]} : vector<8x32xf32> to vector<8x16xf32>
    %259 = vector.extract_strided_slice %254 {offsets = [0, 0], sizes = [8, 16], strides = [1, 1]} : vector<8x48xf32> to vector<8x16xf32>
    %260 = vector.extract_strided_slice %257 {offsets = [0, 0], sizes = [8, 16], strides = [1, 1]} : vector<8x48xf32> to vector<8x16xf32>
    %261 = arith.addf %259, %260 : vector<8x16xf32>
    %262 = arith.negf %261 : vector<8x16xf32>
    %263 = math.exp %262 : vector<8x16xf32>
    %cst_61 = arith.constant 1.000000e+00 : f32
    %264 = vector.broadcast %cst_61 : f32 to vector<8x16xf32>
    %265 = arith.addf %264, %263 : vector<8x16xf32>
    %266 = arith.divf %264, %265 : vector<8x16xf32>
    %267 = vector.extract_strided_slice %254 {offsets = [0, 16], sizes = [8, 16], strides = [1, 1]} : vector<8x48xf32> to vector<8x16xf32>
    %268 = vector.extract_strided_slice %257 {offsets = [0, 16], sizes = [8, 16], strides = [1, 1]} : vector<8x48xf32> to vector<8x16xf32>
    %269 = arith.addf %267, %268 : vector<8x16xf32>
    %270 = arith.negf %269 : vector<8x16xf32>
    %271 = math.exp %270 : vector<8x16xf32>
    %cst_62 = arith.constant 1.000000e+00 : f32
    %272 = vector.broadcast %cst_62 : f32 to vector<8x16xf32>
    %273 = arith.addf %272, %271 : vector<8x16xf32>
    %274 = arith.divf %272, %273 : vector<8x16xf32>
    %275 = vector.extract_strided_slice %254 {offsets = [0, 32], sizes = [8, 16], strides = [1, 1]} : vector<8x48xf32> to vector<8x16xf32>
    %276 = vector.extract_strided_slice %257 {offsets = [0, 32], sizes = [8, 16], strides = [1, 1]} : vector<8x48xf32> to vector<8x16xf32>
    %277 = vector.broadcast %15 : vector<1x16xf32> to vector<8x16xf32>
    %278 = arith.addf %276, %277 : vector<8x16xf32>
    %279 = arith.mulf %266, %278 : vector<8x16xf32>
    %280 = arith.addf %275, %279 : vector<8x16xf32>
    %281 = math.tanh %280 : vector<8x16xf32>
    %cst_63 = arith.constant 1.000000e+00 : f32
    %282 = vector.broadcast %cst_63 : f32 to vector<8x16xf32>
    %283 = arith.subf %282, %274 : vector<8x16xf32>
    %284 = arith.mulf %283, %281 : vector<8x16xf32>
    %285 = arith.mulf %274, %258 : vector<8x16xf32>
    %286 = arith.addf %284, %285 : vector<8x16xf32>
    %287 = vector.extract_strided_slice %252 {offsets = [0, 48], sizes = [8, 48], strides = [1, 1]} : vector<8x96xf32> to vector<8x48xf32>
    %288 = vector.extract_strided_slice %245 {offsets = [0, 16], sizes = [8, 16], strides = [1, 1]} : vector<8x32xf32> to vector<8x16xf32>
    %289 = vector.extract_strided_slice %256 {offsets = [0, 0], sizes = [8, 16], strides = [1, 1]} : vector<8x48xf32> to vector<8x16xf32>
    %290 = vector.extract_strided_slice %287 {offsets = [0, 0], sizes = [8, 16], strides = [1, 1]} : vector<8x48xf32> to vector<8x16xf32>
    %291 = arith.addf %289, %290 : vector<8x16xf32>
    %292 = arith.negf %291 : vector<8x16xf32>
    %293 = math.exp %292 : vector<8x16xf32>
    %cst_64 = arith.constant 1.000000e+00 : f32
    %294 = vector.broadcast %cst_64 : f32 to vector<8x16xf32>
    %295 = arith.addf %294, %293 : vector<8x16xf32>
    %296 = arith.divf %294, %295 : vector<8x16xf32>
    %297 = vector.extract_strided_slice %256 {offsets = [0, 16], sizes = [8, 16], strides = [1, 1]} : vector<8x48xf32> to vector<8x16xf32>
    %298 = vector.extract_strided_slice %287 {offsets = [0, 16], sizes = [8, 16], strides = [1, 1]} : vector<8x48xf32> to vector<8x16xf32>
    %299 = arith.addf %297, %298 : vector<8x16xf32>
    %300 = arith.negf %299 : vector<8x16xf32>
    %301 = math.exp %300 : vector<8x16xf32>
    %cst_65 = arith.constant 1.000000e+00 : f32
    %302 = vector.broadcast %cst_65 : f32 to vector<8x16xf32>
    %303 = arith.addf %302, %301 : vector<8x16xf32>
    %304 = arith.divf %302, %303 : vector<8x16xf32>
    %305 = vector.extract_strided_slice %256 {offsets = [0, 32], sizes = [8, 16], strides = [1, 1]} : vector<8x48xf32> to vector<8x16xf32>
    %306 = vector.extract_strided_slice %287 {offsets = [0, 32], sizes = [8, 16], strides = [1, 1]} : vector<8x48xf32> to vector<8x16xf32>
    %307 = vector.broadcast %16 : vector<1x16xf32> to vector<8x16xf32>
    %308 = arith.addf %306, %307 : vector<8x16xf32>
    %309 = arith.mulf %296, %308 : vector<8x16xf32>
    %310 = arith.addf %305, %309 : vector<8x16xf32>
    %311 = math.tanh %310 : vector<8x16xf32>
    %cst_66 = arith.constant 1.000000e+00 : f32
    %312 = vector.broadcast %cst_66 : f32 to vector<8x16xf32>
    %313 = arith.subf %312, %304 : vector<8x16xf32>
    %314 = arith.mulf %313, %311 : vector<8x16xf32>
    %315 = arith.mulf %304, %288 : vector<8x16xf32>
    %316 = arith.addf %314, %315 : vector<8x16xf32>
    %317 = arith.index_cast %247 : i32 to index
    %c0_67 = arith.constant 0 : index
    %318 = vector.load %arg9[%317, %c0_67] : memref<64x32xf32, #tpu.memory_space<vmem>>, vector<8x16xf32>
    tpu.vector_store %arg9[%317, %c0_67], %286 {strides = array<i32>} : memref<64x32xf32, #tpu.memory_space<vmem>>, vector<8x16xf32>,
    %319 = arith.index_cast %250 : i32 to index
    %c16_68 = arith.constant 16 : index
    %320 = vector.load %arg9[%319, %c16_68] : memref<64x32xf32, #tpu.memory_space<vmem>>, vector<8x16xf32>
    tpu.vector_store %arg9[%319, %c16_68], %316 {strides = array<i32>} : memref<64x32xf32, #tpu.memory_space<vmem>>, vector<8x16xf32>,
    %321 = tpu.concatenate %286, %316 in 1 : vector<8x16xf32>, vector<8x16xf32> -> vector<8x32xf32>
    %c4_i32 = arith.constant 4 : i32
    %c8_i32_69 = arith.constant 8 : i32
    %322 = arith.muli %c4_i32, %c8_i32_69 : i32
    %323 = tpu.assume_multiple %322, 8 : i32
    %c7_i32_70 = arith.constant 7 : i32
    %324 = arith.subi %c7_i32_70, %c4_i32 : i32
    %c8_i32_71 = arith.constant 8 : i32
    %325 = arith.muli %324, %c8_i32_71 : i32
    %326 = tpu.assume_multiple %325, 8 : i32
    %327 = arith.truncf %321 : vector<8x32xf32> to vector<8x32xbf16>
    %cst_72 = arith.constant dense<0.000000e+00> : vector<8x96xf32>
    %328 = tpu.matmul %327, %12, %cst_72 {dimension_numbers = #tpu.dot_dimension_numbers<[1], [0], [0], [1], [0, 0, 1, 1], [], []>} : vector<8x32xbf16>, vector<32x96xbf16>, vector<8x96xf32> -> vector<8x96xf32>
    %329 = arith.index_cast %323 : i32 to index
    %c0_73 = arith.constant 0 : index
    %330 = vector.load %arg8[%329, %c0_73] : memref<64x96xf32, #tpu.memory_space<vmem>>, vector<8x48xf32>
    %331 = arith.index_cast %326 : i32 to index
    %c48_74 = arith.constant 48 : index
    %332 = vector.load %arg8[%331, %c48_74] : memref<64x96xf32, #tpu.memory_space<vmem>>, vector<8x48xf32>
    %333 = vector.extract_strided_slice %328 {offsets = [0, 0], sizes = [8, 48], strides = [1, 1]} : vector<8x96xf32> to vector<8x48xf32>
    %334 = vector.extract_strided_slice %321 {offsets = [0, 0], sizes = [8, 16], strides = [1, 1]} : vector<8x32xf32> to vector<8x16xf32>
    %335 = vector.extract_strided_slice %330 {offsets = [0, 0], sizes = [8, 16], strides = [1, 1]} : vector<8x48xf32> to vector<8x16xf32>
    %336 = vector.extract_strided_slice %333 {offsets = [0, 0], sizes = [8, 16], strides = [1, 1]} : vector<8x48xf32> to vector<8x16xf32>
    %337 = arith.addf %335, %336 : vector<8x16xf32>
    %338 = arith.negf %337 : vector<8x16xf32>
    %339 = math.exp %338 : vector<8x16xf32>
    %cst_75 = arith.constant 1.000000e+00 : f32
    %340 = vector.broadcast %cst_75 : f32 to vector<8x16xf32>
    %341 = arith.addf %340, %339 : vector<8x16xf32>
    %342 = arith.divf %340, %341 : vector<8x16xf32>
    %343 = vector.extract_strided_slice %330 {offsets = [0, 16], sizes = [8, 16], strides = [1, 1]} : vector<8x48xf32> to vector<8x16xf32>
    %344 = vector.extract_strided_slice %333 {offsets = [0, 16], sizes = [8, 16], strides = [1, 1]} : vector<8x48xf32> to vector<8x16xf32>
    %345 = arith.addf %343, %344 : vector<8x16xf32>
    %346 = arith.negf %345 : vector<8x16xf32>
    %347 = math.exp %346 : vector<8x16xf32>
    %cst_76 = arith.constant 1.000000e+00 : f32
    %348 = vector.broadcast %cst_76 : f32 to vector<8x16xf32>
    %349 = arith.addf %348, %347 : vector<8x16xf32>
    %350 = arith.divf %348, %349 : vector<8x16xf32>
    %351 = vector.extract_strided_slice %330 {offsets = [0, 32], sizes = [8, 16], strides = [1, 1]} : vector<8x48xf32> to vector<8x16xf32>
    %352 = vector.extract_strided_slice %333 {offsets = [0, 32], sizes = [8, 16], strides = [1, 1]} : vector<8x48xf32> to vector<8x16xf32>
    %353 = vector.broadcast %15 : vector<1x16xf32> to vector<8x16xf32>
    %354 = arith.addf %352, %353 : vector<8x16xf32>
    %355 = arith.mulf %342, %354 : vector<8x16xf32>
    %356 = arith.addf %351, %355 : vector<8x16xf32>
    %357 = math.tanh %356 : vector<8x16xf32>
    %cst_77 = arith.constant 1.000000e+00 : f32
    %358 = vector.broadcast %cst_77 : f32 to vector<8x16xf32>
    %359 = arith.subf %358, %350 : vector<8x16xf32>
    %360 = arith.mulf %359, %357 : vector<8x16xf32>
    %361 = arith.mulf %350, %334 : vector<8x16xf32>
    %362 = arith.addf %360, %361 : vector<8x16xf32>
    %363 = vector.extract_strided_slice %328 {offsets = [0, 48], sizes = [8, 48], strides = [1, 1]} : vector<8x96xf32> to vector<8x48xf32>
    %364 = vector.extract_strided_slice %321 {offsets = [0, 16], sizes = [8, 16], strides = [1, 1]} : vector<8x32xf32> to vector<8x16xf32>
    %365 = vector.extract_strided_slice %332 {offsets = [0, 0], sizes = [8, 16], strides = [1, 1]} : vector<8x48xf32> to vector<8x16xf32>
    %366 = vector.extract_strided_slice %363 {offsets = [0, 0], sizes = [8, 16], strides = [1, 1]} : vector<8x48xf32> to vector<8x16xf32>
    %367 = arith.addf %365, %366 : vector<8x16xf32>
    %368 = arith.negf %367 : vector<8x16xf32>
    %369 = math.exp %368 : vector<8x16xf32>
    %cst_78 = arith.constant 1.000000e+00 : f32
    %370 = vector.broadcast %cst_78 : f32 to vector<8x16xf32>
    %371 = arith.addf %370, %369 : vector<8x16xf32>
    %372 = arith.divf %370, %371 : vector<8x16xf32>
    %373 = vector.extract_strided_slice %332 {offsets = [0, 16], sizes = [8, 16], strides = [1, 1]} : vector<8x48xf32> to vector<8x16xf32>
    %374 = vector.extract_strided_slice %363 {offsets = [0, 16], sizes = [8, 16], strides = [1, 1]} : vector<8x48xf32> to vector<8x16xf32>
    %375 = arith.addf %373, %374 : vector<8x16xf32>
    %376 = arith.negf %375 : vector<8x16xf32>
    %377 = math.exp %376 : vector<8x16xf32>
    %cst_79 = arith.constant 1.000000e+00 : f32
    %378 = vector.broadcast %cst_79 : f32 to vector<8x16xf32>
    %379 = arith.addf %378, %377 : vector<8x16xf32>
    %380 = arith.divf %378, %379 : vector<8x16xf32>
    %381 = vector.extract_strided_slice %332 {offsets = [0, 32], sizes = [8, 16], strides = [1, 1]} : vector<8x48xf32> to vector<8x16xf32>
    %382 = vector.extract_strided_slice %363 {offsets = [0, 32], sizes = [8, 16], strides = [1, 1]} : vector<8x48xf32> to vector<8x16xf32>
    %383 = vector.broadcast %16 : vector<1x16xf32> to vector<8x16xf32>
    %384 = arith.addf %382, %383 : vector<8x16xf32>
    %385 = arith.mulf %372, %384 : vector<8x16xf32>
    %386 = arith.addf %381, %385 : vector<8x16xf32>
    %387 = math.tanh %386 : vector<8x16xf32>
    %cst_80 = arith.constant 1.000000e+00 : f32
    %388 = vector.broadcast %cst_80 : f32 to vector<8x16xf32>
    %389 = arith.subf %388, %380 : vector<8x16xf32>
    %390 = arith.mulf %389, %387 : vector<8x16xf32>
    %391 = arith.mulf %380, %364 : vector<8x16xf32>
    %392 = arith.addf %390, %391 : vector<8x16xf32>
    %393 = arith.index_cast %323 : i32 to index
    %c0_81 = arith.constant 0 : index
    %394 = vector.load %arg9[%393, %c0_81] : memref<64x32xf32, #tpu.memory_space<vmem>>, vector<8x16xf32>
    tpu.vector_store %arg9[%393, %c0_81], %362 {strides = array<i32>} : memref<64x32xf32, #tpu.memory_space<vmem>>, vector<8x16xf32>,
    %395 = arith.index_cast %326 : i32 to index
    %c16_82 = arith.constant 16 : index
    %396 = vector.load %arg9[%395, %c16_82] : memref<64x32xf32, #tpu.memory_space<vmem>>, vector<8x16xf32>
    tpu.vector_store %arg9[%395, %c16_82], %392 {strides = array<i32>} : memref<64x32xf32, #tpu.memory_space<vmem>>, vector<8x16xf32>,
    %397 = tpu.concatenate %362, %392 in 1 : vector<8x16xf32>, vector<8x16xf32> -> vector<8x32xf32>
    %c5_i32 = arith.constant 5 : i32
    %c8_i32_83 = arith.constant 8 : i32
    %398 = arith.muli %c5_i32, %c8_i32_83 : i32
    %399 = tpu.assume_multiple %398, 8 : i32
    %c7_i32_84 = arith.constant 7 : i32
    %400 = arith.subi %c7_i32_84, %c5_i32 : i32
    %c8_i32_85 = arith.constant 8 : i32
    %401 = arith.muli %400, %c8_i32_85 : i32
    %402 = tpu.assume_multiple %401, 8 : i32
    %403 = arith.truncf %397 : vector<8x32xf32> to vector<8x32xbf16>
    %cst_86 = arith.constant dense<0.000000e+00> : vector<8x96xf32>
    %404 = tpu.matmul %403, %12, %cst_86 {dimension_numbers = #tpu.dot_dimension_numbers<[1], [0], [0], [1], [0, 0, 1, 1], [], []>} : vector<8x32xbf16>, vector<32x96xbf16>, vector<8x96xf32> -> vector<8x96xf32>
    %405 = arith.index_cast %399 : i32 to index
    %c0_87 = arith.constant 0 : index
    %406 = vector.load %arg8[%405, %c0_87] : memref<64x96xf32, #tpu.memory_space<vmem>>, vector<8x48xf32>
    %407 = arith.index_cast %402 : i32 to index
    %c48_88 = arith.constant 48 : index
    %408 = vector.load %arg8[%407, %c48_88] : memref<64x96xf32, #tpu.memory_space<vmem>>, vector<8x48xf32>
    %409 = vector.extract_strided_slice %404 {offsets = [0, 0], sizes = [8, 48], strides = [1, 1]} : vector<8x96xf32> to vector<8x48xf32>
    %410 = vector.extract_strided_slice %397 {offsets = [0, 0], sizes = [8, 16], strides = [1, 1]} : vector<8x32xf32> to vector<8x16xf32>
    %411 = vector.extract_strided_slice %406 {offsets = [0, 0], sizes = [8, 16], strides = [1, 1]} : vector<8x48xf32> to vector<8x16xf32>
    %412 = vector.extract_strided_slice %409 {offsets = [0, 0], sizes = [8, 16], strides = [1, 1]} : vector<8x48xf32> to vector<8x16xf32>
    %413 = arith.addf %411, %412 : vector<8x16xf32>
    %414 = arith.negf %413 : vector<8x16xf32>
    %415 = math.exp %414 : vector<8x16xf32>
    %cst_89 = arith.constant 1.000000e+00 : f32
    %416 = vector.broadcast %cst_89 : f32 to vector<8x16xf32>
    %417 = arith.addf %416, %415 : vector<8x16xf32>
    %418 = arith.divf %416, %417 : vector<8x16xf32>
    %419 = vector.extract_strided_slice %406 {offsets = [0, 16], sizes = [8, 16], strides = [1, 1]} : vector<8x48xf32> to vector<8x16xf32>
    %420 = vector.extract_strided_slice %409 {offsets = [0, 16], sizes = [8, 16], strides = [1, 1]} : vector<8x48xf32> to vector<8x16xf32>
    %421 = arith.addf %419, %420 : vector<8x16xf32>
    %422 = arith.negf %421 : vector<8x16xf32>
    %423 = math.exp %422 : vector<8x16xf32>
    %cst_90 = arith.constant 1.000000e+00 : f32
    %424 = vector.broadcast %cst_90 : f32 to vector<8x16xf32>
    %425 = arith.addf %424, %423 : vector<8x16xf32>
    %426 = arith.divf %424, %425 : vector<8x16xf32>
    %427 = vector.extract_strided_slice %406 {offsets = [0, 32], sizes = [8, 16], strides = [1, 1]} : vector<8x48xf32> to vector<8x16xf32>
    %428 = vector.extract_strided_slice %409 {offsets = [0, 32], sizes = [8, 16], strides = [1, 1]} : vector<8x48xf32> to vector<8x16xf32>
    %429 = vector.broadcast %15 : vector<1x16xf32> to vector<8x16xf32>
    %430 = arith.addf %428, %429 : vector<8x16xf32>
    %431 = arith.mulf %418, %430 : vector<8x16xf32>
    %432 = arith.addf %427, %431 : vector<8x16xf32>
    %433 = math.tanh %432 : vector<8x16xf32>
    %cst_91 = arith.constant 1.000000e+00 : f32
    %434 = vector.broadcast %cst_91 : f32 to vector<8x16xf32>
    %435 = arith.subf %434, %426 : vector<8x16xf32>
    %436 = arith.mulf %435, %433 : vector<8x16xf32>
    %437 = arith.mulf %426, %410 : vector<8x16xf32>
    %438 = arith.addf %436, %437 : vector<8x16xf32>
    %439 = vector.extract_strided_slice %404 {offsets = [0, 48], sizes = [8, 48], strides = [1, 1]} : vector<8x96xf32> to vector<8x48xf32>
    %440 = vector.extract_strided_slice %397 {offsets = [0, 16], sizes = [8, 16], strides = [1, 1]} : vector<8x32xf32> to vector<8x16xf32>
    %441 = vector.extract_strided_slice %408 {offsets = [0, 0], sizes = [8, 16], strides = [1, 1]} : vector<8x48xf32> to vector<8x16xf32>
    %442 = vector.extract_strided_slice %439 {offsets = [0, 0], sizes = [8, 16], strides = [1, 1]} : vector<8x48xf32> to vector<8x16xf32>
    %443 = arith.addf %441, %442 : vector<8x16xf32>
    %444 = arith.negf %443 : vector<8x16xf32>
    %445 = math.exp %444 : vector<8x16xf32>
    %cst_92 = arith.constant 1.000000e+00 : f32
    %446 = vector.broadcast %cst_92 : f32 to vector<8x16xf32>
    %447 = arith.addf %446, %445 : vector<8x16xf32>
    %448 = arith.divf %446, %447 : vector<8x16xf32>
    %449 = vector.extract_strided_slice %408 {offsets = [0, 16], sizes = [8, 16], strides = [1, 1]} : vector<8x48xf32> to vector<8x16xf32>
    %450 = vector.extract_strided_slice %439 {offsets = [0, 16], sizes = [8, 16], strides = [1, 1]} : vector<8x48xf32> to vector<8x16xf32>
    %451 = arith.addf %449, %450 : vector<8x16xf32>
    %452 = arith.negf %451 : vector<8x16xf32>
    %453 = math.exp %452 : vector<8x16xf32>
    %cst_93 = arith.constant 1.000000e+00 : f32
    %454 = vector.broadcast %cst_93 : f32 to vector<8x16xf32>
    %455 = arith.addf %454, %453 : vector<8x16xf32>
    %456 = arith.divf %454, %455 : vector<8x16xf32>
    %457 = vector.extract_strided_slice %408 {offsets = [0, 32], sizes = [8, 16], strides = [1, 1]} : vector<8x48xf32> to vector<8x16xf32>
    %458 = vector.extract_strided_slice %439 {offsets = [0, 32], sizes = [8, 16], strides = [1, 1]} : vector<8x48xf32> to vector<8x16xf32>
    %459 = vector.broadcast %16 : vector<1x16xf32> to vector<8x16xf32>
    %460 = arith.addf %458, %459 : vector<8x16xf32>
    %461 = arith.mulf %448, %460 : vector<8x16xf32>
    %462 = arith.addf %457, %461 : vector<8x16xf32>
    %463 = math.tanh %462 : vector<8x16xf32>
    %cst_94 = arith.constant 1.000000e+00 : f32
    %464 = vector.broadcast %cst_94 : f32 to vector<8x16xf32>
    %465 = arith.subf %464, %456 : vector<8x16xf32>
    %466 = arith.mulf %465, %463 : vector<8x16xf32>
    %467 = arith.mulf %456, %440 : vector<8x16xf32>
    %468 = arith.addf %466, %467 : vector<8x16xf32>
    %469 = arith.index_cast %399 : i32 to index
    %c0_95 = arith.constant 0 : index
    %470 = vector.load %arg9[%469, %c0_95] : memref<64x32xf32, #tpu.memory_space<vmem>>, vector<8x16xf32>
    tpu.vector_store %arg9[%469, %c0_95], %438 {strides = array<i32>} : memref<64x32xf32, #tpu.memory_space<vmem>>, vector<8x16xf32>,
    %471 = arith.index_cast %402 : i32 to index
    %c16_96 = arith.constant 16 : index
    %472 = vector.load %arg9[%471, %c16_96] : memref<64x32xf32, #tpu.memory_space<vmem>>, vector<8x16xf32>
    tpu.vector_store %arg9[%471, %c16_96], %468 {strides = array<i32>} : memref<64x32xf32, #tpu.memory_space<vmem>>, vector<8x16xf32>,
    %473 = tpu.concatenate %438, %468 in 1 : vector<8x16xf32>, vector<8x16xf32> -> vector<8x32xf32>
    %c6_i32 = arith.constant 6 : i32
    %c8_i32_97 = arith.constant 8 : i32
    %474 = arith.muli %c6_i32, %c8_i32_97 : i32
    %475 = tpu.assume_multiple %474, 8 : i32
    %c7_i32_98 = arith.constant 7 : i32
    %476 = arith.subi %c7_i32_98, %c6_i32 : i32
    %c8_i32_99 = arith.constant 8 : i32
    %477 = arith.muli %476, %c8_i32_99 : i32
    %478 = tpu.assume_multiple %477, 8 : i32
    %479 = arith.truncf %473 : vector<8x32xf32> to vector<8x32xbf16>
    %cst_100 = arith.constant dense<0.000000e+00> : vector<8x96xf32>
    %480 = tpu.matmul %479, %12, %cst_100 {dimension_numbers = #tpu.dot_dimension_numbers<[1], [0], [0], [1], [0, 0, 1, 1], [], []>} : vector<8x32xbf16>, vector<32x96xbf16>, vector<8x96xf32> -> vector<8x96xf32>
    %481 = arith.index_cast %475 : i32 to index
    %c0_101 = arith.constant 0 : index
    %482 = vector.load %arg8[%481, %c0_101] : memref<64x96xf32, #tpu.memory_space<vmem>>, vector<8x48xf32>
    %483 = arith.index_cast %478 : i32 to index
    %c48_102 = arith.constant 48 : index
    %484 = vector.load %arg8[%483, %c48_102] : memref<64x96xf32, #tpu.memory_space<vmem>>, vector<8x48xf32>
    %485 = vector.extract_strided_slice %480 {offsets = [0, 0], sizes = [8, 48], strides = [1, 1]} : vector<8x96xf32> to vector<8x48xf32>
    %486 = vector.extract_strided_slice %473 {offsets = [0, 0], sizes = [8, 16], strides = [1, 1]} : vector<8x32xf32> to vector<8x16xf32>
    %487 = vector.extract_strided_slice %482 {offsets = [0, 0], sizes = [8, 16], strides = [1, 1]} : vector<8x48xf32> to vector<8x16xf32>
    %488 = vector.extract_strided_slice %485 {offsets = [0, 0], sizes = [8, 16], strides = [1, 1]} : vector<8x48xf32> to vector<8x16xf32>
    %489 = arith.addf %487, %488 : vector<8x16xf32>
    %490 = arith.negf %489 : vector<8x16xf32>
    %491 = math.exp %490 : vector<8x16xf32>
    %cst_103 = arith.constant 1.000000e+00 : f32
    %492 = vector.broadcast %cst_103 : f32 to vector<8x16xf32>
    %493 = arith.addf %492, %491 : vector<8x16xf32>
    %494 = arith.divf %492, %493 : vector<8x16xf32>
    %495 = vector.extract_strided_slice %482 {offsets = [0, 16], sizes = [8, 16], strides = [1, 1]} : vector<8x48xf32> to vector<8x16xf32>
    %496 = vector.extract_strided_slice %485 {offsets = [0, 16], sizes = [8, 16], strides = [1, 1]} : vector<8x48xf32> to vector<8x16xf32>
    %497 = arith.addf %495, %496 : vector<8x16xf32>
    %498 = arith.negf %497 : vector<8x16xf32>
    %499 = math.exp %498 : vector<8x16xf32>
    %cst_104 = arith.constant 1.000000e+00 : f32
    %500 = vector.broadcast %cst_104 : f32 to vector<8x16xf32>
    %501 = arith.addf %500, %499 : vector<8x16xf32>
    %502 = arith.divf %500, %501 : vector<8x16xf32>
    %503 = vector.extract_strided_slice %482 {offsets = [0, 32], sizes = [8, 16], strides = [1, 1]} : vector<8x48xf32> to vector<8x16xf32>
    %504 = vector.extract_strided_slice %485 {offsets = [0, 32], sizes = [8, 16], strides = [1, 1]} : vector<8x48xf32> to vector<8x16xf32>
    %505 = vector.broadcast %15 : vector<1x16xf32> to vector<8x16xf32>
    %506 = arith.addf %504, %505 : vector<8x16xf32>
    %507 = arith.mulf %494, %506 : vector<8x16xf32>
    %508 = arith.addf %503, %507 : vector<8x16xf32>
    %509 = math.tanh %508 : vector<8x16xf32>
    %cst_105 = arith.constant 1.000000e+00 : f32
    %510 = vector.broadcast %cst_105 : f32 to vector<8x16xf32>
    %511 = arith.subf %510, %502 : vector<8x16xf32>
    %512 = arith.mulf %511, %509 : vector<8x16xf32>
    %513 = arith.mulf %502, %486 : vector<8x16xf32>
    %514 = arith.addf %512, %513 : vector<8x16xf32>
    %515 = vector.extract_strided_slice %480 {offsets = [0, 48], sizes = [8, 48], strides = [1, 1]} : vector<8x96xf32> to vector<8x48xf32>
    %516 = vector.extract_strided_slice %473 {offsets = [0, 16], sizes = [8, 16], strides = [1, 1]} : vector<8x32xf32> to vector<8x16xf32>
    %517 = vector.extract_strided_slice %484 {offsets = [0, 0], sizes = [8, 16], strides = [1, 1]} : vector<8x48xf32> to vector<8x16xf32>
    %518 = vector.extract_strided_slice %515 {offsets = [0, 0], sizes = [8, 16], strides = [1, 1]} : vector<8x48xf32> to vector<8x16xf32>
    %519 = arith.addf %517, %518 : vector<8x16xf32>
    %520 = arith.negf %519 : vector<8x16xf32>
    %521 = math.exp %520 : vector<8x16xf32>
    %cst_106 = arith.constant 1.000000e+00 : f32
    %522 = vector.broadcast %cst_106 : f32 to vector<8x16xf32>
    %523 = arith.addf %522, %521 : vector<8x16xf32>
    %524 = arith.divf %522, %523 : vector<8x16xf32>
    %525 = vector.extract_strided_slice %484 {offsets = [0, 16], sizes = [8, 16], strides = [1, 1]} : vector<8x48xf32> to vector<8x16xf32>
    %526 = vector.extract_strided_slice %515 {offsets = [0, 16], sizes = [8, 16], strides = [1, 1]} : vector<8x48xf32> to vector<8x16xf32>
    %527 = arith.addf %525, %526 : vector<8x16xf32>
    %528 = arith.negf %527 : vector<8x16xf32>
    %529 = math.exp %528 : vector<8x16xf32>
    %cst_107 = arith.constant 1.000000e+00 : f32
    %530 = vector.broadcast %cst_107 : f32 to vector<8x16xf32>
    %531 = arith.addf %530, %529 : vector<8x16xf32>
    %532 = arith.divf %530, %531 : vector<8x16xf32>
    %533 = vector.extract_strided_slice %484 {offsets = [0, 32], sizes = [8, 16], strides = [1, 1]} : vector<8x48xf32> to vector<8x16xf32>
    %534 = vector.extract_strided_slice %515 {offsets = [0, 32], sizes = [8, 16], strides = [1, 1]} : vector<8x48xf32> to vector<8x16xf32>
    %535 = vector.broadcast %16 : vector<1x16xf32> to vector<8x16xf32>
    %536 = arith.addf %534, %535 : vector<8x16xf32>
    %537 = arith.mulf %524, %536 : vector<8x16xf32>
    %538 = arith.addf %533, %537 : vector<8x16xf32>
    %539 = math.tanh %538 : vector<8x16xf32>
    %cst_108 = arith.constant 1.000000e+00 : f32
    %540 = vector.broadcast %cst_108 : f32 to vector<8x16xf32>
    %541 = arith.subf %540, %532 : vector<8x16xf32>
    %542 = arith.mulf %541, %539 : vector<8x16xf32>
    %543 = arith.mulf %532, %516 : vector<8x16xf32>
    %544 = arith.addf %542, %543 : vector<8x16xf32>
    %545 = arith.index_cast %475 : i32 to index
    %c0_109 = arith.constant 0 : index
    %546 = vector.load %arg9[%545, %c0_109] : memref<64x32xf32, #tpu.memory_space<vmem>>, vector<8x16xf32>
    tpu.vector_store %arg9[%545, %c0_109], %514 {strides = array<i32>} : memref<64x32xf32, #tpu.memory_space<vmem>>, vector<8x16xf32>,
    %547 = arith.index_cast %478 : i32 to index
    %c16_110 = arith.constant 16 : index
    %548 = vector.load %arg9[%547, %c16_110] : memref<64x32xf32, #tpu.memory_space<vmem>>, vector<8x16xf32>
    tpu.vector_store %arg9[%547, %c16_110], %544 {strides = array<i32>} : memref<64x32xf32, #tpu.memory_space<vmem>>, vector<8x16xf32>,
    %549 = tpu.concatenate %514, %544 in 1 : vector<8x16xf32>, vector<8x16xf32> -> vector<8x32xf32>
    %c7_i32_111 = arith.constant 7 : i32
    %c8_i32_112 = arith.constant 8 : i32
    %550 = arith.muli %c7_i32_111, %c8_i32_112 : i32
    %551 = tpu.assume_multiple %550, 8 : i32
    %c7_i32_113 = arith.constant 7 : i32
    %552 = arith.subi %c7_i32_113, %c7_i32_111 : i32
    %c8_i32_114 = arith.constant 8 : i32
    %553 = arith.muli %552, %c8_i32_114 : i32
    %554 = tpu.assume_multiple %553, 8 : i32
    %555 = arith.truncf %549 : vector<8x32xf32> to vector<8x32xbf16>
    %cst_115 = arith.constant dense<0.000000e+00> : vector<8x96xf32>
    %556 = tpu.matmul %555, %12, %cst_115 {dimension_numbers = #tpu.dot_dimension_numbers<[1], [0], [0], [1], [0, 0, 1, 1], [], []>} : vector<8x32xbf16>, vector<32x96xbf16>, vector<8x96xf32> -> vector<8x96xf32>
    %557 = arith.index_cast %551 : i32 to index
    %c0_116 = arith.constant 0 : index
    %558 = vector.load %arg8[%557, %c0_116] : memref<64x96xf32, #tpu.memory_space<vmem>>, vector<8x48xf32>
    %559 = arith.index_cast %554 : i32 to index
    %c48_117 = arith.constant 48 : index
    %560 = vector.load %arg8[%559, %c48_117] : memref<64x96xf32, #tpu.memory_space<vmem>>, vector<8x48xf32>
    %561 = vector.extract_strided_slice %556 {offsets = [0, 0], sizes = [8, 48], strides = [1, 1]} : vector<8x96xf32> to vector<8x48xf32>
    %562 = vector.extract_strided_slice %549 {offsets = [0, 0], sizes = [8, 16], strides = [1, 1]} : vector<8x32xf32> to vector<8x16xf32>
    %563 = vector.extract_strided_slice %558 {offsets = [0, 0], sizes = [8, 16], strides = [1, 1]} : vector<8x48xf32> to vector<8x16xf32>
    %564 = vector.extract_strided_slice %561 {offsets = [0, 0], sizes = [8, 16], strides = [1, 1]} : vector<8x48xf32> to vector<8x16xf32>
    %565 = arith.addf %563, %564 : vector<8x16xf32>
    %566 = arith.negf %565 : vector<8x16xf32>
    %567 = math.exp %566 : vector<8x16xf32>
    %cst_118 = arith.constant 1.000000e+00 : f32
    %568 = vector.broadcast %cst_118 : f32 to vector<8x16xf32>
    %569 = arith.addf %568, %567 : vector<8x16xf32>
    %570 = arith.divf %568, %569 : vector<8x16xf32>
    %571 = vector.extract_strided_slice %558 {offsets = [0, 16], sizes = [8, 16], strides = [1, 1]} : vector<8x48xf32> to vector<8x16xf32>
    %572 = vector.extract_strided_slice %561 {offsets = [0, 16], sizes = [8, 16], strides = [1, 1]} : vector<8x48xf32> to vector<8x16xf32>
    %573 = arith.addf %571, %572 : vector<8x16xf32>
    %574 = arith.negf %573 : vector<8x16xf32>
    %575 = math.exp %574 : vector<8x16xf32>
    %cst_119 = arith.constant 1.000000e+00 : f32
    %576 = vector.broadcast %cst_119 : f32 to vector<8x16xf32>
    %577 = arith.addf %576, %575 : vector<8x16xf32>
    %578 = arith.divf %576, %577 : vector<8x16xf32>
    %579 = vector.extract_strided_slice %558 {offsets = [0, 32], sizes = [8, 16], strides = [1, 1]} : vector<8x48xf32> to vector<8x16xf32>
    %580 = vector.extract_strided_slice %561 {offsets = [0, 32], sizes = [8, 16], strides = [1, 1]} : vector<8x48xf32> to vector<8x16xf32>
    %581 = vector.broadcast %15 : vector<1x16xf32> to vector<8x16xf32>
    %582 = arith.addf %580, %581 : vector<8x16xf32>
    %583 = arith.mulf %570, %582 : vector<8x16xf32>
    %584 = arith.addf %579, %583 : vector<8x16xf32>
    %585 = math.tanh %584 : vector<8x16xf32>
    %cst_120 = arith.constant 1.000000e+00 : f32
    %586 = vector.broadcast %cst_120 : f32 to vector<8x16xf32>
    %587 = arith.subf %586, %578 : vector<8x16xf32>
    %588 = arith.mulf %587, %585 : vector<8x16xf32>
    %589 = arith.mulf %578, %562 : vector<8x16xf32>
    %590 = arith.addf %588, %589 : vector<8x16xf32>
    %591 = vector.extract_strided_slice %556 {offsets = [0, 48], sizes = [8, 48], strides = [1, 1]} : vector<8x96xf32> to vector<8x48xf32>
    %592 = vector.extract_strided_slice %549 {offsets = [0, 16], sizes = [8, 16], strides = [1, 1]} : vector<8x32xf32> to vector<8x16xf32>
    %593 = vector.extract_strided_slice %560 {offsets = [0, 0], sizes = [8, 16], strides = [1, 1]} : vector<8x48xf32> to vector<8x16xf32>
    %594 = vector.extract_strided_slice %591 {offsets = [0, 0], sizes = [8, 16], strides = [1, 1]} : vector<8x48xf32> to vector<8x16xf32>
    %595 = arith.addf %593, %594 : vector<8x16xf32>
    %596 = arith.negf %595 : vector<8x16xf32>
    %597 = math.exp %596 : vector<8x16xf32>
    %cst_121 = arith.constant 1.000000e+00 : f32
    %598 = vector.broadcast %cst_121 : f32 to vector<8x16xf32>
    %599 = arith.addf %598, %597 : vector<8x16xf32>
    %600 = arith.divf %598, %599 : vector<8x16xf32>
    %601 = vector.extract_strided_slice %560 {offsets = [0, 16], sizes = [8, 16], strides = [1, 1]} : vector<8x48xf32> to vector<8x16xf32>
    %602 = vector.extract_strided_slice %591 {offsets = [0, 16], sizes = [8, 16], strides = [1, 1]} : vector<8x48xf32> to vector<8x16xf32>
    %603 = arith.addf %601, %602 : vector<8x16xf32>
    %604 = arith.negf %603 : vector<8x16xf32>
    %605 = math.exp %604 : vector<8x16xf32>
    %cst_122 = arith.constant 1.000000e+00 : f32
    %606 = vector.broadcast %cst_122 : f32 to vector<8x16xf32>
    %607 = arith.addf %606, %605 : vector<8x16xf32>
    %608 = arith.divf %606, %607 : vector<8x16xf32>
    %609 = vector.extract_strided_slice %560 {offsets = [0, 32], sizes = [8, 16], strides = [1, 1]} : vector<8x48xf32> to vector<8x16xf32>
    %610 = vector.extract_strided_slice %591 {offsets = [0, 32], sizes = [8, 16], strides = [1, 1]} : vector<8x48xf32> to vector<8x16xf32>
    %611 = vector.broadcast %16 : vector<1x16xf32> to vector<8x16xf32>
    %612 = arith.addf %610, %611 : vector<8x16xf32>
    %613 = arith.mulf %600, %612 : vector<8x16xf32>
    %614 = arith.addf %609, %613 : vector<8x16xf32>
    %615 = math.tanh %614 : vector<8x16xf32>
    %cst_123 = arith.constant 1.000000e+00 : f32
    %616 = vector.broadcast %cst_123 : f32 to vector<8x16xf32>
    %617 = arith.subf %616, %608 : vector<8x16xf32>
    %618 = arith.mulf %617, %615 : vector<8x16xf32>
    %619 = arith.mulf %608, %592 : vector<8x16xf32>
    %620 = arith.addf %618, %619 : vector<8x16xf32>
    %621 = arith.index_cast %551 : i32 to index
    %c0_124 = arith.constant 0 : index
    %622 = vector.load %arg9[%621, %c0_124] : memref<64x32xf32, #tpu.memory_space<vmem>>, vector<8x16xf32>
    tpu.vector_store %arg9[%621, %c0_124], %590 {strides = array<i32>} : memref<64x32xf32, #tpu.memory_space<vmem>>, vector<8x16xf32>,
    %623 = arith.index_cast %554 : i32 to index
    %c16_125 = arith.constant 16 : index
    %624 = vector.load %arg9[%623, %c16_125] : memref<64x32xf32, #tpu.memory_space<vmem>>, vector<8x16xf32>
    tpu.vector_store %arg9[%623, %c16_125], %620 {strides = array<i32>} : memref<64x32xf32, #tpu.memory_space<vmem>>, vector<8x16xf32>,
    %625 = tpu.concatenate %590, %620 in 1 : vector<8x16xf32>, vector<8x16xf32> -> vector<8x32xf32>
    %c8_i32_126 = arith.constant 8 : i32
    %c0_127 = arith.constant 0 : index
    %c0_128 = arith.constant 0 : index
    %626 = vector.load %arg9[%c0_127, %c0_128] : memref<64x32xf32, #tpu.memory_space<vmem>>, vector<64x32xf32>
    %627 = arith.truncf %626 : vector<64x32xf32> to vector<64x32xbf16>
    %c1 = arith.constant 1 : index
    %c0_129 = arith.constant 0 : index
    %c0_130 = arith.constant 0 : index
    %628 = vector.load %arg1[%c1, %c0_129, %c0_130] : memref<2x32x96xbf16, #tpu.memory_space<vmem>>, vector<1x32x96xbf16>
    %629 = vector.shape_cast %628 : vector<1x32x96xbf16> to vector<32x96xbf16>
    %cst_131 = arith.constant dense<0.000000e+00> : vector<64x96xf32>
    %630 = tpu.matmul %627, %629, %cst_131 {dimension_numbers = #tpu.dot_dimension_numbers<[1], [0], [0], [1], [0, 0, 1, 1], [], []>} : vector<64x32xbf16>, vector<32x96xbf16>, vector<64x96xf32> -> vector<64x96xf32>
    %c1_132 = arith.constant 1 : index
    %c0_133 = arith.constant 0 : index
    %c0_134 = arith.constant 0 : index
    %631 = vector.load %arg3[%c1_132, %c0_133, %c0_134] : memref<2x1x96xf32, #tpu.memory_space<vmem>>, vector<1x1x96xf32>
    %632 = vector.shape_cast %631 : vector<1x1x96xf32> to vector<1x96xf32>
    %633 = vector.broadcast %632 : vector<1x96xf32> to vector<64x96xf32>
    %634 = arith.addf %630, %633 : vector<64x96xf32>
    %c0_135 = arith.constant 0 : index
    %c0_136 = arith.constant 0 : index
    %635 = vector.load %arg8[%c0_135, %c0_136] : memref<64x96xf32, #tpu.memory_space<vmem>>, vector<64x96xf32>
    tpu.vector_store %arg8[%c0_135, %c0_136], %634 {strides = array<i32>} : memref<64x96xf32, #tpu.memory_space<vmem>>, vector<64x96xf32>,
    %c1_137 = arith.constant 1 : index
    %c0_138 = arith.constant 0 : index
    %c0_139 = arith.constant 0 : index
    %636 = vector.load %arg2[%c1_137, %c0_138, %c0_139] : memref<2x32x96xbf16, #tpu.memory_space<vmem>>, vector<1x32x96xbf16>
    %637 = vector.shape_cast %636 : vector<1x32x96xbf16> to vector<32x96xbf16>
    %c1_140 = arith.constant 1 : index
    %c0_141 = arith.constant 0 : index
    %c0_142 = arith.constant 0 : index
    %638 = vector.load %arg4[%c1_140, %c0_141, %c0_142] : memref<2x1x32xf32, #tpu.memory_space<vmem>>, vector<1x1x32xf32>
    %639 = vector.shape_cast %638 : vector<1x1x32xf32> to vector<1x32xf32>
    %640 = vector.extract_strided_slice %639 {offsets = [0, 0], sizes = [1, 16], strides = [1, 1]} : vector<1x32xf32> to vector<1x16xf32>
    %641 = vector.extract_strided_slice %639 {offsets = [0, 16], sizes = [1, 16], strides = [1, 1]} : vector<1x32xf32> to vector<1x16xf32>
    %cst_143 = arith.constant 0.000000e+00 : f32
    %642 = vector.broadcast %cst_143 : f32 to vector<8x32xf32>
    %c0_i32_144 = arith.constant 0 : i32
    %c8_i32_145 = arith.constant 8 : i32
    %643 = arith.muli %c0_i32_144, %c8_i32_145 : i32
    %644 = tpu.assume_multiple %643, 8 : i32
    %c7_i32_146 = arith.constant 7 : i32
    %645 = arith.subi %c7_i32_146, %c0_i32_144 : i32
    %c8_i32_147 = arith.constant 8 : i32
    %646 = arith.muli %645, %c8_i32_147 : i32
    %647 = tpu.assume_multiple %646, 8 : i32
    %648 = arith.truncf %642 : vector<8x32xf32> to vector<8x32xbf16>
    %cst_148 = arith.constant dense<0.000000e+00> : vector<8x96xf32>
    %649 = tpu.matmul %648, %637, %cst_148 {dimension_numbers = #tpu.dot_dimension_numbers<[1], [0], [0], [1], [0, 0, 1, 1], [], []>} : vector<8x32xbf16>, vector<32x96xbf16>, vector<8x96xf32> -> vector<8x96xf32>
    %650 = arith.index_cast %644 : i32 to index
    %c0_149 = arith.constant 0 : index
    %651 = vector.load %arg8[%650, %c0_149] : memref<64x96xf32, #tpu.memory_space<vmem>>, vector<8x48xf32>
    %652 = arith.index_cast %647 : i32 to index
    %c48_150 = arith.constant 48 : index
    %653 = vector.load %arg8[%652, %c48_150] : memref<64x96xf32, #tpu.memory_space<vmem>>, vector<8x48xf32>
    %654 = vector.extract_strided_slice %649 {offsets = [0, 0], sizes = [8, 48], strides = [1, 1]} : vector<8x96xf32> to vector<8x48xf32>
    %655 = vector.extract_strided_slice %642 {offsets = [0, 0], sizes = [8, 16], strides = [1, 1]} : vector<8x32xf32> to vector<8x16xf32>
    %656 = vector.extract_strided_slice %651 {offsets = [0, 0], sizes = [8, 16], strides = [1, 1]} : vector<8x48xf32> to vector<8x16xf32>
    %657 = vector.extract_strided_slice %654 {offsets = [0, 0], sizes = [8, 16], strides = [1, 1]} : vector<8x48xf32> to vector<8x16xf32>
    %658 = arith.addf %656, %657 : vector<8x16xf32>
    %659 = arith.negf %658 : vector<8x16xf32>
    %660 = math.exp %659 : vector<8x16xf32>
    %cst_151 = arith.constant 1.000000e+00 : f32
    %661 = vector.broadcast %cst_151 : f32 to vector<8x16xf32>
    %662 = arith.addf %661, %660 : vector<8x16xf32>
    %663 = arith.divf %661, %662 : vector<8x16xf32>
    %664 = vector.extract_strided_slice %651 {offsets = [0, 16], sizes = [8, 16], strides = [1, 1]} : vector<8x48xf32> to vector<8x16xf32>
    %665 = vector.extract_strided_slice %654 {offsets = [0, 16], sizes = [8, 16], strides = [1, 1]} : vector<8x48xf32> to vector<8x16xf32>
    %666 = arith.addf %664, %665 : vector<8x16xf32>
    %667 = arith.negf %666 : vector<8x16xf32>
    %668 = math.exp %667 : vector<8x16xf32>
    %cst_152 = arith.constant 1.000000e+00 : f32
    %669 = vector.broadcast %cst_152 : f32 to vector<8x16xf32>
    %670 = arith.addf %669, %668 : vector<8x16xf32>
    %671 = arith.divf %669, %670 : vector<8x16xf32>
    %672 = vector.extract_strided_slice %651 {offsets = [0, 32], sizes = [8, 16], strides = [1, 1]} : vector<8x48xf32> to vector<8x16xf32>
    %673 = vector.extract_strided_slice %654 {offsets = [0, 32], sizes = [8, 16], strides = [1, 1]} : vector<8x48xf32> to vector<8x16xf32>
    %674 = vector.broadcast %640 : vector<1x16xf32> to vector<8x16xf32>
    %675 = arith.addf %673, %674 : vector<8x16xf32>
    %676 = arith.mulf %663, %675 : vector<8x16xf32>
    %677 = arith.addf %672, %676 : vector<8x16xf32>
    %678 = math.tanh %677 : vector<8x16xf32>
    %cst_153 = arith.constant 1.000000e+00 : f32
    %679 = vector.broadcast %cst_153 : f32 to vector<8x16xf32>
    %680 = arith.subf %679, %671 : vector<8x16xf32>
    %681 = arith.mulf %680, %678 : vector<8x16xf32>
    %682 = arith.mulf %671, %655 : vector<8x16xf32>
    %683 = arith.addf %681, %682 : vector<8x16xf32>
    %684 = vector.extract_strided_slice %649 {offsets = [0, 48], sizes = [8, 48], strides = [1, 1]} : vector<8x96xf32> to vector<8x48xf32>
    %685 = vector.extract_strided_slice %642 {offsets = [0, 16], sizes = [8, 16], strides = [1, 1]} : vector<8x32xf32> to vector<8x16xf32>
    %686 = vector.extract_strided_slice %653 {offsets = [0, 0], sizes = [8, 16], strides = [1, 1]} : vector<8x48xf32> to vector<8x16xf32>
    %687 = vector.extract_strided_slice %684 {offsets = [0, 0], sizes = [8, 16], strides = [1, 1]} : vector<8x48xf32> to vector<8x16xf32>
    %688 = arith.addf %686, %687 : vector<8x16xf32>
    %689 = arith.negf %688 : vector<8x16xf32>
    %690 = math.exp %689 : vector<8x16xf32>
    %cst_154 = arith.constant 1.000000e+00 : f32
    %691 = vector.broadcast %cst_154 : f32 to vector<8x16xf32>
    %692 = arith.addf %691, %690 : vector<8x16xf32>
    %693 = arith.divf %691, %692 : vector<8x16xf32>
    %694 = vector.extract_strided_slice %653 {offsets = [0, 16], sizes = [8, 16], strides = [1, 1]} : vector<8x48xf32> to vector<8x16xf32>
    %695 = vector.extract_strided_slice %684 {offsets = [0, 16], sizes = [8, 16], strides = [1, 1]} : vector<8x48xf32> to vector<8x16xf32>
    %696 = arith.addf %694, %695 : vector<8x16xf32>
    %697 = arith.negf %696 : vector<8x16xf32>
    %698 = math.exp %697 : vector<8x16xf32>
    %cst_155 = arith.constant 1.000000e+00 : f32
    %699 = vector.broadcast %cst_155 : f32 to vector<8x16xf32>
    %700 = arith.addf %699, %698 : vector<8x16xf32>
    %701 = arith.divf %699, %700 : vector<8x16xf32>
    %702 = vector.extract_strided_slice %653 {offsets = [0, 32], sizes = [8, 16], strides = [1, 1]} : vector<8x48xf32> to vector<8x16xf32>
    %703 = vector.extract_strided_slice %684 {offsets = [0, 32], sizes = [8, 16], strides = [1, 1]} : vector<8x48xf32> to vector<8x16xf32>
    %704 = vector.broadcast %641 : vector<1x16xf32> to vector<8x16xf32>
    %705 = arith.addf %703, %704 : vector<8x16xf32>
    %706 = arith.mulf %693, %705 : vector<8x16xf32>
    %707 = arith.addf %702, %706 : vector<8x16xf32>
    %708 = math.tanh %707 : vector<8x16xf32>
    %cst_156 = arith.constant 1.000000e+00 : f32
    %709 = vector.broadcast %cst_156 : f32 to vector<8x16xf32>
    %710 = arith.subf %709, %701 : vector<8x16xf32>
    %711 = arith.mulf %710, %708 : vector<8x16xf32>
    %712 = arith.mulf %701, %685 : vector<8x16xf32>
    %713 = arith.addf %711, %712 : vector<8x16xf32>
    %714 = arith.index_cast %644 : i32 to index
    %c0_157 = arith.constant 0 : index
    %715 = vector.load %arg9[%714, %c0_157] : memref<64x32xf32, #tpu.memory_space<vmem>>, vector<8x16xf32>
    tpu.vector_store %arg9[%714, %c0_157], %683 {strides = array<i32>} : memref<64x32xf32, #tpu.memory_space<vmem>>, vector<8x16xf32>,
    %716 = arith.index_cast %647 : i32 to index
    %c16_158 = arith.constant 16 : index
    %717 = vector.load %arg9[%716, %c16_158] : memref<64x32xf32, #tpu.memory_space<vmem>>, vector<8x16xf32>
    tpu.vector_store %arg9[%716, %c16_158], %713 {strides = array<i32>} : memref<64x32xf32, #tpu.memory_space<vmem>>, vector<8x16xf32>,
    %718 = tpu.concatenate %683, %713 in 1 : vector<8x16xf32>, vector<8x16xf32> -> vector<8x32xf32>
    %c1_i32_159 = arith.constant 1 : i32
    %c8_i32_160 = arith.constant 8 : i32
    %719 = arith.muli %c1_i32_159, %c8_i32_160 : i32
    %720 = tpu.assume_multiple %719, 8 : i32
    %c7_i32_161 = arith.constant 7 : i32
    %721 = arith.subi %c7_i32_161, %c1_i32_159 : i32
    %c8_i32_162 = arith.constant 8 : i32
    %722 = arith.muli %721, %c8_i32_162 : i32
    %723 = tpu.assume_multiple %722, 8 : i32
    %724 = arith.truncf %718 : vector<8x32xf32> to vector<8x32xbf16>
    %cst_163 = arith.constant dense<0.000000e+00> : vector<8x96xf32>
    %725 = tpu.matmul %724, %637, %cst_163 {dimension_numbers = #tpu.dot_dimension_numbers<[1], [0], [0], [1], [0, 0, 1, 1], [], []>} : vector<8x32xbf16>, vector<32x96xbf16>, vector<8x96xf32> -> vector<8x96xf32>
    %726 = arith.index_cast %720 : i32 to index
    %c0_164 = arith.constant 0 : index
    %727 = vector.load %arg8[%726, %c0_164] : memref<64x96xf32, #tpu.memory_space<vmem>>, vector<8x48xf32>
    %728 = arith.index_cast %723 : i32 to index
    %c48_165 = arith.constant 48 : index
    %729 = vector.load %arg8[%728, %c48_165] : memref<64x96xf32, #tpu.memory_space<vmem>>, vector<8x48xf32>
    %730 = vector.extract_strided_slice %725 {offsets = [0, 0], sizes = [8, 48], strides = [1, 1]} : vector<8x96xf32> to vector<8x48xf32>
    %731 = vector.extract_strided_slice %718 {offsets = [0, 0], sizes = [8, 16], strides = [1, 1]} : vector<8x32xf32> to vector<8x16xf32>
    %732 = vector.extract_strided_slice %727 {offsets = [0, 0], sizes = [8, 16], strides = [1, 1]} : vector<8x48xf32> to vector<8x16xf32>
    %733 = vector.extract_strided_slice %730 {offsets = [0, 0], sizes = [8, 16], strides = [1, 1]} : vector<8x48xf32> to vector<8x16xf32>
    %734 = arith.addf %732, %733 : vector<8x16xf32>
    %735 = arith.negf %734 : vector<8x16xf32>
    %736 = math.exp %735 : vector<8x16xf32>
    %cst_166 = arith.constant 1.000000e+00 : f32
    %737 = vector.broadcast %cst_166 : f32 to vector<8x16xf32>
    %738 = arith.addf %737, %736 : vector<8x16xf32>
    %739 = arith.divf %737, %738 : vector<8x16xf32>
    %740 = vector.extract_strided_slice %727 {offsets = [0, 16], sizes = [8, 16], strides = [1, 1]} : vector<8x48xf32> to vector<8x16xf32>
    %741 = vector.extract_strided_slice %730 {offsets = [0, 16], sizes = [8, 16], strides = [1, 1]} : vector<8x48xf32> to vector<8x16xf32>
    %742 = arith.addf %740, %741 : vector<8x16xf32>
    %743 = arith.negf %742 : vector<8x16xf32>
    %744 = math.exp %743 : vector<8x16xf32>
    %cst_167 = arith.constant 1.000000e+00 : f32
    %745 = vector.broadcast %cst_167 : f32 to vector<8x16xf32>
    %746 = arith.addf %745, %744 : vector<8x16xf32>
    %747 = arith.divf %745, %746 : vector<8x16xf32>
    %748 = vector.extract_strided_slice %727 {offsets = [0, 32], sizes = [8, 16], strides = [1, 1]} : vector<8x48xf32> to vector<8x16xf32>
    %749 = vector.extract_strided_slice %730 {offsets = [0, 32], sizes = [8, 16], strides = [1, 1]} : vector<8x48xf32> to vector<8x16xf32>
    %750 = vector.broadcast %640 : vector<1x16xf32> to vector<8x16xf32>
    %751 = arith.addf %749, %750 : vector<8x16xf32>
    %752 = arith.mulf %739, %751 : vector<8x16xf32>
    %753 = arith.addf %748, %752 : vector<8x16xf32>
    %754 = math.tanh %753 : vector<8x16xf32>
    %cst_168 = arith.constant 1.000000e+00 : f32
    %755 = vector.broadcast %cst_168 : f32 to vector<8x16xf32>
    %756 = arith.subf %755, %747 : vector<8x16xf32>
    %757 = arith.mulf %756, %754 : vector<8x16xf32>
    %758 = arith.mulf %747, %731 : vector<8x16xf32>
    %759 = arith.addf %757, %758 : vector<8x16xf32>
    %760 = vector.extract_strided_slice %725 {offsets = [0, 48], sizes = [8, 48], strides = [1, 1]} : vector<8x96xf32> to vector<8x48xf32>
    %761 = vector.extract_strided_slice %718 {offsets = [0, 16], sizes = [8, 16], strides = [1, 1]} : vector<8x32xf32> to vector<8x16xf32>
    %762 = vector.extract_strided_slice %729 {offsets = [0, 0], sizes = [8, 16], strides = [1, 1]} : vector<8x48xf32> to vector<8x16xf32>
    %763 = vector.extract_strided_slice %760 {offsets = [0, 0], sizes = [8, 16], strides = [1, 1]} : vector<8x48xf32> to vector<8x16xf32>
    %764 = arith.addf %762, %763 : vector<8x16xf32>
    %765 = arith.negf %764 : vector<8x16xf32>
    %766 = math.exp %765 : vector<8x16xf32>
    %cst_169 = arith.constant 1.000000e+00 : f32
    %767 = vector.broadcast %cst_169 : f32 to vector<8x16xf32>
    %768 = arith.addf %767, %766 : vector<8x16xf32>
    %769 = arith.divf %767, %768 : vector<8x16xf32>
    %770 = vector.extract_strided_slice %729 {offsets = [0, 16], sizes = [8, 16], strides = [1, 1]} : vector<8x48xf32> to vector<8x16xf32>
    %771 = vector.extract_strided_slice %760 {offsets = [0, 16], sizes = [8, 16], strides = [1, 1]} : vector<8x48xf32> to vector<8x16xf32>
    %772 = arith.addf %770, %771 : vector<8x16xf32>
    %773 = arith.negf %772 : vector<8x16xf32>
    %774 = math.exp %773 : vector<8x16xf32>
    %cst_170 = arith.constant 1.000000e+00 : f32
    %775 = vector.broadcast %cst_170 : f32 to vector<8x16xf32>
    %776 = arith.addf %775, %774 : vector<8x16xf32>
    %777 = arith.divf %775, %776 : vector<8x16xf32>
    %778 = vector.extract_strided_slice %729 {offsets = [0, 32], sizes = [8, 16], strides = [1, 1]} : vector<8x48xf32> to vector<8x16xf32>
    %779 = vector.extract_strided_slice %760 {offsets = [0, 32], sizes = [8, 16], strides = [1, 1]} : vector<8x48xf32> to vector<8x16xf32>
    %780 = vector.broadcast %641 : vector<1x16xf32> to vector<8x16xf32>
    %781 = arith.addf %779, %780 : vector<8x16xf32>
    %782 = arith.mulf %769, %781 : vector<8x16xf32>
    %783 = arith.addf %778, %782 : vector<8x16xf32>
    %784 = math.tanh %783 : vector<8x16xf32>
    %cst_171 = arith.constant 1.000000e+00 : f32
    %785 = vector.broadcast %cst_171 : f32 to vector<8x16xf32>
    %786 = arith.subf %785, %777 : vector<8x16xf32>
    %787 = arith.mulf %786, %784 : vector<8x16xf32>
    %788 = arith.mulf %777, %761 : vector<8x16xf32>
    %789 = arith.addf %787, %788 : vector<8x16xf32>
    %790 = arith.index_cast %720 : i32 to index
    %c0_172 = arith.constant 0 : index
    %791 = vector.load %arg9[%790, %c0_172] : memref<64x32xf32, #tpu.memory_space<vmem>>, vector<8x16xf32>
    tpu.vector_store %arg9[%790, %c0_172], %759 {strides = array<i32>} : memref<64x32xf32, #tpu.memory_space<vmem>>, vector<8x16xf32>,
    %792 = arith.index_cast %723 : i32 to index
    %c16_173 = arith.constant 16 : index
    %793 = vector.load %arg9[%792, %c16_173] : memref<64x32xf32, #tpu.memory_space<vmem>>, vector<8x16xf32>
    tpu.vector_store %arg9[%792, %c16_173], %789 {strides = array<i32>} : memref<64x32xf32, #tpu.memory_space<vmem>>, vector<8x16xf32>,
    %794 = tpu.concatenate %759, %789 in 1 : vector<8x16xf32>, vector<8x16xf32> -> vector<8x32xf32>
    %c2_i32_174 = arith.constant 2 : i32
    %c8_i32_175 = arith.constant 8 : i32
    %795 = arith.muli %c2_i32_174, %c8_i32_175 : i32
    %796 = tpu.assume_multiple %795, 8 : i32
    %c7_i32_176 = arith.constant 7 : i32
    %797 = arith.subi %c7_i32_176, %c2_i32_174 : i32
    %c8_i32_177 = arith.constant 8 : i32
    %798 = arith.muli %797, %c8_i32_177 : i32
    %799 = tpu.assume_multiple %798, 8 : i32
    %800 = arith.truncf %794 : vector<8x32xf32> to vector<8x32xbf16>
    %cst_178 = arith.constant dense<0.000000e+00> : vector<8x96xf32>
    %801 = tpu.matmul %800, %637, %cst_178 {dimension_numbers = #tpu.dot_dimension_numbers<[1], [0], [0], [1], [0, 0, 1, 1], [], []>} : vector<8x32xbf16>, vector<32x96xbf16>, vector<8x96xf32> -> vector<8x96xf32>
    %802 = arith.index_cast %796 : i32 to index
    %c0_179 = arith.constant 0 : index
    %803 = vector.load %arg8[%802, %c0_179] : memref<64x96xf32, #tpu.memory_space<vmem>>, vector<8x48xf32>
    %804 = arith.index_cast %799 : i32 to index
    %c48_180 = arith.constant 48 : index
    %805 = vector.load %arg8[%804, %c48_180] : memref<64x96xf32, #tpu.memory_space<vmem>>, vector<8x48xf32>
    %806 = vector.extract_strided_slice %801 {offsets = [0, 0], sizes = [8, 48], strides = [1, 1]} : vector<8x96xf32> to vector<8x48xf32>
    %807 = vector.extract_strided_slice %794 {offsets = [0, 0], sizes = [8, 16], strides = [1, 1]} : vector<8x32xf32> to vector<8x16xf32>
    %808 = vector.extract_strided_slice %803 {offsets = [0, 0], sizes = [8, 16], strides = [1, 1]} : vector<8x48xf32> to vector<8x16xf32>
    %809 = vector.extract_strided_slice %806 {offsets = [0, 0], sizes = [8, 16], strides = [1, 1]} : vector<8x48xf32> to vector<8x16xf32>
    %810 = arith.addf %808, %809 : vector<8x16xf32>
    %811 = arith.negf %810 : vector<8x16xf32>
    %812 = math.exp %811 : vector<8x16xf32>
    %cst_181 = arith.constant 1.000000e+00 : f32
    %813 = vector.broadcast %cst_181 : f32 to vector<8x16xf32>
    %814 = arith.addf %813, %812 : vector<8x16xf32>
    %815 = arith.divf %813, %814 : vector<8x16xf32>
    %816 = vector.extract_strided_slice %803 {offsets = [0, 16], sizes = [8, 16], strides = [1, 1]} : vector<8x48xf32> to vector<8x16xf32>
    %817 = vector.extract_strided_slice %806 {offsets = [0, 16], sizes = [8, 16], strides = [1, 1]} : vector<8x48xf32> to vector<8x16xf32>
    %818 = arith.addf %816, %817 : vector<8x16xf32>
    %819 = arith.negf %818 : vector<8x16xf32>
    %820 = math.exp %819 : vector<8x16xf32>
    %cst_182 = arith.constant 1.000000e+00 : f32
    %821 = vector.broadcast %cst_182 : f32 to vector<8x16xf32>
    %822 = arith.addf %821, %820 : vector<8x16xf32>
    %823 = arith.divf %821, %822 : vector<8x16xf32>
    %824 = vector.extract_strided_slice %803 {offsets = [0, 32], sizes = [8, 16], strides = [1, 1]} : vector<8x48xf32> to vector<8x16xf32>
    %825 = vector.extract_strided_slice %806 {offsets = [0, 32], sizes = [8, 16], strides = [1, 1]} : vector<8x48xf32> to vector<8x16xf32>
    %826 = vector.broadcast %640 : vector<1x16xf32> to vector<8x16xf32>
    %827 = arith.addf %825, %826 : vector<8x16xf32>
    %828 = arith.mulf %815, %827 : vector<8x16xf32>
    %829 = arith.addf %824, %828 : vector<8x16xf32>
    %830 = math.tanh %829 : vector<8x16xf32>
    %cst_183 = arith.constant 1.000000e+00 : f32
    %831 = vector.broadcast %cst_183 : f32 to vector<8x16xf32>
    %832 = arith.subf %831, %823 : vector<8x16xf32>
    %833 = arith.mulf %832, %830 : vector<8x16xf32>
    %834 = arith.mulf %823, %807 : vector<8x16xf32>
    %835 = arith.addf %833, %834 : vector<8x16xf32>
    %836 = vector.extract_strided_slice %801 {offsets = [0, 48], sizes = [8, 48], strides = [1, 1]} : vector<8x96xf32> to vector<8x48xf32>
    %837 = vector.extract_strided_slice %794 {offsets = [0, 16], sizes = [8, 16], strides = [1, 1]} : vector<8x32xf32> to vector<8x16xf32>
    %838 = vector.extract_strided_slice %805 {offsets = [0, 0], sizes = [8, 16], strides = [1, 1]} : vector<8x48xf32> to vector<8x16xf32>
    %839 = vector.extract_strided_slice %836 {offsets = [0, 0], sizes = [8, 16], strides = [1, 1]} : vector<8x48xf32> to vector<8x16xf32>
    %840 = arith.addf %838, %839 : vector<8x16xf32>
    %841 = arith.negf %840 : vector<8x16xf32>
    %842 = math.exp %841 : vector<8x16xf32>
    %cst_184 = arith.constant 1.000000e+00 : f32
    %843 = vector.broadcast %cst_184 : f32 to vector<8x16xf32>
    %844 = arith.addf %843, %842 : vector<8x16xf32>
    %845 = arith.divf %843, %844 : vector<8x16xf32>
    %846 = vector.extract_strided_slice %805 {offsets = [0, 16], sizes = [8, 16], strides = [1, 1]} : vector<8x48xf32> to vector<8x16xf32>
    %847 = vector.extract_strided_slice %836 {offsets = [0, 16], sizes = [8, 16], strides = [1, 1]} : vector<8x48xf32> to vector<8x16xf32>
    %848 = arith.addf %846, %847 : vector<8x16xf32>
    %849 = arith.negf %848 : vector<8x16xf32>
    %850 = math.exp %849 : vector<8x16xf32>
    %cst_185 = arith.constant 1.000000e+00 : f32
    %851 = vector.broadcast %cst_185 : f32 to vector<8x16xf32>
    %852 = arith.addf %851, %850 : vector<8x16xf32>
    %853 = arith.divf %851, %852 : vector<8x16xf32>
    %854 = vector.extract_strided_slice %805 {offsets = [0, 32], sizes = [8, 16], strides = [1, 1]} : vector<8x48xf32> to vector<8x16xf32>
    %855 = vector.extract_strided_slice %836 {offsets = [0, 32], sizes = [8, 16], strides = [1, 1]} : vector<8x48xf32> to vector<8x16xf32>
    %856 = vector.broadcast %641 : vector<1x16xf32> to vector<8x16xf32>
    %857 = arith.addf %855, %856 : vector<8x16xf32>
    %858 = arith.mulf %845, %857 : vector<8x16xf32>
    %859 = arith.addf %854, %858 : vector<8x16xf32>
    %860 = math.tanh %859 : vector<8x16xf32>
    %cst_186 = arith.constant 1.000000e+00 : f32
    %861 = vector.broadcast %cst_186 : f32 to vector<8x16xf32>
    %862 = arith.subf %861, %853 : vector<8x16xf32>
    %863 = arith.mulf %862, %860 : vector<8x16xf32>
    %864 = arith.mulf %853, %837 : vector<8x16xf32>
    %865 = arith.addf %863, %864 : vector<8x16xf32>
    %866 = arith.index_cast %796 : i32 to index
    %c0_187 = arith.constant 0 : index
    %867 = vector.load %arg9[%866, %c0_187] : memref<64x32xf32, #tpu.memory_space<vmem>>, vector<8x16xf32>
    tpu.vector_store %arg9[%866, %c0_187], %835 {strides = array<i32>} : memref<64x32xf32, #tpu.memory_space<vmem>>, vector<8x16xf32>,
    %868 = arith.index_cast %799 : i32 to index
    %c16_188 = arith.constant 16 : index
    %869 = vector.load %arg9[%868, %c16_188] : memref<64x32xf32, #tpu.memory_space<vmem>>, vector<8x16xf32>
    tpu.vector_store %arg9[%868, %c16_188], %865 {strides = array<i32>} : memref<64x32xf32, #tpu.memory_space<vmem>>, vector<8x16xf32>,
    %870 = tpu.concatenate %835, %865 in 1 : vector<8x16xf32>, vector<8x16xf32> -> vector<8x32xf32>
    %c3_i32_189 = arith.constant 3 : i32
    %c8_i32_190 = arith.constant 8 : i32
    %871 = arith.muli %c3_i32_189, %c8_i32_190 : i32
    %872 = tpu.assume_multiple %871, 8 : i32
    %c7_i32_191 = arith.constant 7 : i32
    %873 = arith.subi %c7_i32_191, %c3_i32_189 : i32
    %c8_i32_192 = arith.constant 8 : i32
    %874 = arith.muli %873, %c8_i32_192 : i32
    %875 = tpu.assume_multiple %874, 8 : i32
    %876 = arith.truncf %870 : vector<8x32xf32> to vector<8x32xbf16>
    %cst_193 = arith.constant dense<0.000000e+00> : vector<8x96xf32>
    %877 = tpu.matmul %876, %637, %cst_193 {dimension_numbers = #tpu.dot_dimension_numbers<[1], [0], [0], [1], [0, 0, 1, 1], [], []>} : vector<8x32xbf16>, vector<32x96xbf16>, vector<8x96xf32> -> vector<8x96xf32>
    %878 = arith.index_cast %872 : i32 to index
    %c0_194 = arith.constant 0 : index
    %879 = vector.load %arg8[%878, %c0_194] : memref<64x96xf32, #tpu.memory_space<vmem>>, vector<8x48xf32>
    %880 = arith.index_cast %875 : i32 to index
    %c48_195 = arith.constant 48 : index
    %881 = vector.load %arg8[%880, %c48_195] : memref<64x96xf32, #tpu.memory_space<vmem>>, vector<8x48xf32>
    %882 = vector.extract_strided_slice %877 {offsets = [0, 0], sizes = [8, 48], strides = [1, 1]} : vector<8x96xf32> to vector<8x48xf32>
    %883 = vector.extract_strided_slice %870 {offsets = [0, 0], sizes = [8, 16], strides = [1, 1]} : vector<8x32xf32> to vector<8x16xf32>
    %884 = vector.extract_strided_slice %879 {offsets = [0, 0], sizes = [8, 16], strides = [1, 1]} : vector<8x48xf32> to vector<8x16xf32>
    %885 = vector.extract_strided_slice %882 {offsets = [0, 0], sizes = [8, 16], strides = [1, 1]} : vector<8x48xf32> to vector<8x16xf32>
    %886 = arith.addf %884, %885 : vector<8x16xf32>
    %887 = arith.negf %886 : vector<8x16xf32>
    %888 = math.exp %887 : vector<8x16xf32>
    %cst_196 = arith.constant 1.000000e+00 : f32
    %889 = vector.broadcast %cst_196 : f32 to vector<8x16xf32>
    %890 = arith.addf %889, %888 : vector<8x16xf32>
    %891 = arith.divf %889, %890 : vector<8x16xf32>
    %892 = vector.extract_strided_slice %879 {offsets = [0, 16], sizes = [8, 16], strides = [1, 1]} : vector<8x48xf32> to vector<8x16xf32>
    %893 = vector.extract_strided_slice %882 {offsets = [0, 16], sizes = [8, 16], strides = [1, 1]} : vector<8x48xf32> to vector<8x16xf32>
    %894 = arith.addf %892, %893 : vector<8x16xf32>
    %895 = arith.negf %894 : vector<8x16xf32>
    %896 = math.exp %895 : vector<8x16xf32>
    %cst_197 = arith.constant 1.000000e+00 : f32
    %897 = vector.broadcast %cst_197 : f32 to vector<8x16xf32>
    %898 = arith.addf %897, %896 : vector<8x16xf32>
    %899 = arith.divf %897, %898 : vector<8x16xf32>
    %900 = vector.extract_strided_slice %879 {offsets = [0, 32], sizes = [8, 16], strides = [1, 1]} : vector<8x48xf32> to vector<8x16xf32>
    %901 = vector.extract_strided_slice %882 {offsets = [0, 32], sizes = [8, 16], strides = [1, 1]} : vector<8x48xf32> to vector<8x16xf32>
    %902 = vector.broadcast %640 : vector<1x16xf32> to vector<8x16xf32>
    %903 = arith.addf %901, %902 : vector<8x16xf32>
    %904 = arith.mulf %891, %903 : vector<8x16xf32>
    %905 = arith.addf %900, %904 : vector<8x16xf32>
    %906 = math.tanh %905 : vector<8x16xf32>
    %cst_198 = arith.constant 1.000000e+00 : f32
    %907 = vector.broadcast %cst_198 : f32 to vector<8x16xf32>
    %908 = arith.subf %907, %899 : vector<8x16xf32>
    %909 = arith.mulf %908, %906 : vector<8x16xf32>
    %910 = arith.mulf %899, %883 : vector<8x16xf32>
    %911 = arith.addf %909, %910 : vector<8x16xf32>
    %912 = vector.extract_strided_slice %877 {offsets = [0, 48], sizes = [8, 48], strides = [1, 1]} : vector<8x96xf32> to vector<8x48xf32>
    %913 = vector.extract_strided_slice %870 {offsets = [0, 16], sizes = [8, 16], strides = [1, 1]} : vector<8x32xf32> to vector<8x16xf32>
    %914 = vector.extract_strided_slice %881 {offsets = [0, 0], sizes = [8, 16], strides = [1, 1]} : vector<8x48xf32> to vector<8x16xf32>
    %915 = vector.extract_strided_slice %912 {offsets = [0, 0], sizes = [8, 16], strides = [1, 1]} : vector<8x48xf32> to vector<8x16xf32>
    %916 = arith.addf %914, %915 : vector<8x16xf32>
    %917 = arith.negf %916 : vector<8x16xf32>
    %918 = math.exp %917 : vector<8x16xf32>
    %cst_199 = arith.constant 1.000000e+00 : f32
    %919 = vector.broadcast %cst_199 : f32 to vector<8x16xf32>
    %920 = arith.addf %919, %918 : vector<8x16xf32>
    %921 = arith.divf %919, %920 : vector<8x16xf32>
    %922 = vector.extract_strided_slice %881 {offsets = [0, 16], sizes = [8, 16], strides = [1, 1]} : vector<8x48xf32> to vector<8x16xf32>
    %923 = vector.extract_strided_slice %912 {offsets = [0, 16], sizes = [8, 16], strides = [1, 1]} : vector<8x48xf32> to vector<8x16xf32>
    %924 = arith.addf %922, %923 : vector<8x16xf32>
    %925 = arith.negf %924 : vector<8x16xf32>
    %926 = math.exp %925 : vector<8x16xf32>
    %cst_200 = arith.constant 1.000000e+00 : f32
    %927 = vector.broadcast %cst_200 : f32 to vector<8x16xf32>
    %928 = arith.addf %927, %926 : vector<8x16xf32>
    %929 = arith.divf %927, %928 : vector<8x16xf32>
    %930 = vector.extract_strided_slice %881 {offsets = [0, 32], sizes = [8, 16], strides = [1, 1]} : vector<8x48xf32> to vector<8x16xf32>
    %931 = vector.extract_strided_slice %912 {offsets = [0, 32], sizes = [8, 16], strides = [1, 1]} : vector<8x48xf32> to vector<8x16xf32>
    %932 = vector.broadcast %641 : vector<1x16xf32> to vector<8x16xf32>
    %933 = arith.addf %931, %932 : vector<8x16xf32>
    %934 = arith.mulf %921, %933 : vector<8x16xf32>
    %935 = arith.addf %930, %934 : vector<8x16xf32>
    %936 = math.tanh %935 : vector<8x16xf32>
    %cst_201 = arith.constant 1.000000e+00 : f32
    %937 = vector.broadcast %cst_201 : f32 to vector<8x16xf32>
    %938 = arith.subf %937, %929 : vector<8x16xf32>
    %939 = arith.mulf %938, %936 : vector<8x16xf32>
    %940 = arith.mulf %929, %913 : vector<8x16xf32>
    %941 = arith.addf %939, %940 : vector<8x16xf32>
    %942 = arith.index_cast %872 : i32 to index
    %c0_202 = arith.constant 0 : index
    %943 = vector.load %arg9[%942, %c0_202] : memref<64x32xf32, #tpu.memory_space<vmem>>, vector<8x16xf32>
    tpu.vector_store %arg9[%942, %c0_202], %911 {strides = array<i32>} : memref<64x32xf32, #tpu.memory_space<vmem>>, vector<8x16xf32>,
    %944 = arith.index_cast %875 : i32 to index
    %c16_203 = arith.constant 16 : index
    %945 = vector.load %arg9[%944, %c16_203] : memref<64x32xf32, #tpu.memory_space<vmem>>, vector<8x16xf32>
    tpu.vector_store %arg9[%944, %c16_203], %941 {strides = array<i32>} : memref<64x32xf32, #tpu.memory_space<vmem>>, vector<8x16xf32>,
    %946 = tpu.concatenate %911, %941 in 1 : vector<8x16xf32>, vector<8x16xf32> -> vector<8x32xf32>
    %c4_i32_204 = arith.constant 4 : i32
    %c8_i32_205 = arith.constant 8 : i32
    %947 = arith.muli %c4_i32_204, %c8_i32_205 : i32
    %948 = tpu.assume_multiple %947, 8 : i32
    %c7_i32_206 = arith.constant 7 : i32
    %949 = arith.subi %c7_i32_206, %c4_i32_204 : i32
    %c8_i32_207 = arith.constant 8 : i32
    %950 = arith.muli %949, %c8_i32_207 : i32
    %951 = tpu.assume_multiple %950, 8 : i32
    %952 = arith.truncf %946 : vector<8x32xf32> to vector<8x32xbf16>
    %cst_208 = arith.constant dense<0.000000e+00> : vector<8x96xf32>
    %953 = tpu.matmul %952, %637, %cst_208 {dimension_numbers = #tpu.dot_dimension_numbers<[1], [0], [0], [1], [0, 0, 1, 1], [], []>} : vector<8x32xbf16>, vector<32x96xbf16>, vector<8x96xf32> -> vector<8x96xf32>
    %954 = arith.index_cast %948 : i32 to index
    %c0_209 = arith.constant 0 : index
    %955 = vector.load %arg8[%954, %c0_209] : memref<64x96xf32, #tpu.memory_space<vmem>>, vector<8x48xf32>
    %956 = arith.index_cast %951 : i32 to index
    %c48_210 = arith.constant 48 : index
    %957 = vector.load %arg8[%956, %c48_210] : memref<64x96xf32, #tpu.memory_space<vmem>>, vector<8x48xf32>
    %958 = vector.extract_strided_slice %953 {offsets = [0, 0], sizes = [8, 48], strides = [1, 1]} : vector<8x96xf32> to vector<8x48xf32>
    %959 = vector.extract_strided_slice %946 {offsets = [0, 0], sizes = [8, 16], strides = [1, 1]} : vector<8x32xf32> to vector<8x16xf32>
    %960 = vector.extract_strided_slice %955 {offsets = [0, 0], sizes = [8, 16], strides = [1, 1]} : vector<8x48xf32> to vector<8x16xf32>
    %961 = vector.extract_strided_slice %958 {offsets = [0, 0], sizes = [8, 16], strides = [1, 1]} : vector<8x48xf32> to vector<8x16xf32>
    %962 = arith.addf %960, %961 : vector<8x16xf32>
    %963 = arith.negf %962 : vector<8x16xf32>
    %964 = math.exp %963 : vector<8x16xf32>
    %cst_211 = arith.constant 1.000000e+00 : f32
    %965 = vector.broadcast %cst_211 : f32 to vector<8x16xf32>
    %966 = arith.addf %965, %964 : vector<8x16xf32>
    %967 = arith.divf %965, %966 : vector<8x16xf32>
    %968 = vector.extract_strided_slice %955 {offsets = [0, 16], sizes = [8, 16], strides = [1, 1]} : vector<8x48xf32> to vector<8x16xf32>
    %969 = vector.extract_strided_slice %958 {offsets = [0, 16], sizes = [8, 16], strides = [1, 1]} : vector<8x48xf32> to vector<8x16xf32>
    %970 = arith.addf %968, %969 : vector<8x16xf32>
    %971 = arith.negf %970 : vector<8x16xf32>
    %972 = math.exp %971 : vector<8x16xf32>
    %cst_212 = arith.constant 1.000000e+00 : f32
    %973 = vector.broadcast %cst_212 : f32 to vector<8x16xf32>
    %974 = arith.addf %973, %972 : vector<8x16xf32>
    %975 = arith.divf %973, %974 : vector<8x16xf32>
    %976 = vector.extract_strided_slice %955 {offsets = [0, 32], sizes = [8, 16], strides = [1, 1]} : vector<8x48xf32> to vector<8x16xf32>
    %977 = vector.extract_strided_slice %958 {offsets = [0, 32], sizes = [8, 16], strides = [1, 1]} : vector<8x48xf32> to vector<8x16xf32>
    %978 = vector.broadcast %640 : vector<1x16xf32> to vector<8x16xf32>
    %979 = arith.addf %977, %978 : vector<8x16xf32>
    %980 = arith.mulf %967, %979 : vector<8x16xf32>
    %981 = arith.addf %976, %980 : vector<8x16xf32>
    %982 = math.tanh %981 : vector<8x16xf32>
    %cst_213 = arith.constant 1.000000e+00 : f32
    %983 = vector.broadcast %cst_213 : f32 to vector<8x16xf32>
    %984 = arith.subf %983, %975 : vector<8x16xf32>
    %985 = arith.mulf %984, %982 : vector<8x16xf32>
    %986 = arith.mulf %975, %959 : vector<8x16xf32>
    %987 = arith.addf %985, %986 : vector<8x16xf32>
    %988 = vector.extract_strided_slice %953 {offsets = [0, 48], sizes = [8, 48], strides = [1, 1]} : vector<8x96xf32> to vector<8x48xf32>
    %989 = vector.extract_strided_slice %946 {offsets = [0, 16], sizes = [8, 16], strides = [1, 1]} : vector<8x32xf32> to vector<8x16xf32>
    %990 = vector.extract_strided_slice %957 {offsets = [0, 0], sizes = [8, 16], strides = [1, 1]} : vector<8x48xf32> to vector<8x16xf32>
    %991 = vector.extract_strided_slice %988 {offsets = [0, 0], sizes = [8, 16], strides = [1, 1]} : vector<8x48xf32> to vector<8x16xf32>
    %992 = arith.addf %990, %991 : vector<8x16xf32>
    %993 = arith.negf %992 : vector<8x16xf32>
    %994 = math.exp %993 : vector<8x16xf32>
    %cst_214 = arith.constant 1.000000e+00 : f32
    %995 = vector.broadcast %cst_214 : f32 to vector<8x16xf32>
    %996 = arith.addf %995, %994 : vector<8x16xf32>
    %997 = arith.divf %995, %996 : vector<8x16xf32>
    %998 = vector.extract_strided_slice %957 {offsets = [0, 16], sizes = [8, 16], strides = [1, 1]} : vector<8x48xf32> to vector<8x16xf32>
    %999 = vector.extract_strided_slice %988 {offsets = [0, 16], sizes = [8, 16], strides = [1, 1]} : vector<8x48xf32> to vector<8x16xf32>
    %1000 = arith.addf %998, %999 : vector<8x16xf32>
    %1001 = arith.negf %1000 : vector<8x16xf32>
    %1002 = math.exp %1001 : vector<8x16xf32>
    %cst_215 = arith.constant 1.000000e+00 : f32
    %1003 = vector.broadcast %cst_215 : f32 to vector<8x16xf32>
    %1004 = arith.addf %1003, %1002 : vector<8x16xf32>
    %1005 = arith.divf %1003, %1004 : vector<8x16xf32>
    %1006 = vector.extract_strided_slice %957 {offsets = [0, 32], sizes = [8, 16], strides = [1, 1]} : vector<8x48xf32> to vector<8x16xf32>
    %1007 = vector.extract_strided_slice %988 {offsets = [0, 32], sizes = [8, 16], strides = [1, 1]} : vector<8x48xf32> to vector<8x16xf32>
    %1008 = vector.broadcast %641 : vector<1x16xf32> to vector<8x16xf32>
    %1009 = arith.addf %1007, %1008 : vector<8x16xf32>
    %1010 = arith.mulf %997, %1009 : vector<8x16xf32>
    %1011 = arith.addf %1006, %1010 : vector<8x16xf32>
    %1012 = math.tanh %1011 : vector<8x16xf32>
    %cst_216 = arith.constant 1.000000e+00 : f32
    %1013 = vector.broadcast %cst_216 : f32 to vector<8x16xf32>
    %1014 = arith.subf %1013, %1005 : vector<8x16xf32>
    %1015 = arith.mulf %1014, %1012 : vector<8x16xf32>
    %1016 = arith.mulf %1005, %989 : vector<8x16xf32>
    %1017 = arith.addf %1015, %1016 : vector<8x16xf32>
    %1018 = arith.index_cast %948 : i32 to index
    %c0_217 = arith.constant 0 : index
    %1019 = vector.load %arg9[%1018, %c0_217] : memref<64x32xf32, #tpu.memory_space<vmem>>, vector<8x16xf32>
    tpu.vector_store %arg9[%1018, %c0_217], %987 {strides = array<i32>} : memref<64x32xf32, #tpu.memory_space<vmem>>, vector<8x16xf32>,
    %1020 = arith.index_cast %951 : i32 to index
    %c16_218 = arith.constant 16 : index
    %1021 = vector.load %arg9[%1020, %c16_218] : memref<64x32xf32, #tpu.memory_space<vmem>>, vector<8x16xf32>
    tpu.vector_store %arg9[%1020, %c16_218], %1017 {strides = array<i32>} : memref<64x32xf32, #tpu.memory_space<vmem>>, vector<8x16xf32>,
    %1022 = tpu.concatenate %987, %1017 in 1 : vector<8x16xf32>, vector<8x16xf32> -> vector<8x32xf32>
    %c5_i32_219 = arith.constant 5 : i32
    %c8_i32_220 = arith.constant 8 : i32
    %1023 = arith.muli %c5_i32_219, %c8_i32_220 : i32
    %1024 = tpu.assume_multiple %1023, 8 : i32
    %c7_i32_221 = arith.constant 7 : i32
    %1025 = arith.subi %c7_i32_221, %c5_i32_219 : i32
    %c8_i32_222 = arith.constant 8 : i32
    %1026 = arith.muli %1025, %c8_i32_222 : i32
    %1027 = tpu.assume_multiple %1026, 8 : i32
    %1028 = arith.truncf %1022 : vector<8x32xf32> to vector<8x32xbf16>
    %cst_223 = arith.constant dense<0.000000e+00> : vector<8x96xf32>
    %1029 = tpu.matmul %1028, %637, %cst_223 {dimension_numbers = #tpu.dot_dimension_numbers<[1], [0], [0], [1], [0, 0, 1, 1], [], []>} : vector<8x32xbf16>, vector<32x96xbf16>, vector<8x96xf32> -> vector<8x96xf32>
    %1030 = arith.index_cast %1024 : i32 to index
    %c0_224 = arith.constant 0 : index
    %1031 = vector.load %arg8[%1030, %c0_224] : memref<64x96xf32, #tpu.memory_space<vmem>>, vector<8x48xf32>
    %1032 = arith.index_cast %1027 : i32 to index
    %c48_225 = arith.constant 48 : index
    %1033 = vector.load %arg8[%1032, %c48_225] : memref<64x96xf32, #tpu.memory_space<vmem>>, vector<8x48xf32>
    %1034 = vector.extract_strided_slice %1029 {offsets = [0, 0], sizes = [8, 48], strides = [1, 1]} : vector<8x96xf32> to vector<8x48xf32>
    %1035 = vector.extract_strided_slice %1022 {offsets = [0, 0], sizes = [8, 16], strides = [1, 1]} : vector<8x32xf32> to vector<8x16xf32>
    %1036 = vector.extract_strided_slice %1031 {offsets = [0, 0], sizes = [8, 16], strides = [1, 1]} : vector<8x48xf32> to vector<8x16xf32>
    %1037 = vector.extract_strided_slice %1034 {offsets = [0, 0], sizes = [8, 16], strides = [1, 1]} : vector<8x48xf32> to vector<8x16xf32>
    %1038 = arith.addf %1036, %1037 : vector<8x16xf32>
    %1039 = arith.negf %1038 : vector<8x16xf32>
    %1040 = math.exp %1039 : vector<8x16xf32>
    %cst_226 = arith.constant 1.000000e+00 : f32
    %1041 = vector.broadcast %cst_226 : f32 to vector<8x16xf32>
    %1042 = arith.addf %1041, %1040 : vector<8x16xf32>
    %1043 = arith.divf %1041, %1042 : vector<8x16xf32>
    %1044 = vector.extract_strided_slice %1031 {offsets = [0, 16], sizes = [8, 16], strides = [1, 1]} : vector<8x48xf32> to vector<8x16xf32>
    %1045 = vector.extract_strided_slice %1034 {offsets = [0, 16], sizes = [8, 16], strides = [1, 1]} : vector<8x48xf32> to vector<8x16xf32>
    %1046 = arith.addf %1044, %1045 : vector<8x16xf32>
    %1047 = arith.negf %1046 : vector<8x16xf32>
    %1048 = math.exp %1047 : vector<8x16xf32>
    %cst_227 = arith.constant 1.000000e+00 : f32
    %1049 = vector.broadcast %cst_227 : f32 to vector<8x16xf32>
    %1050 = arith.addf %1049, %1048 : vector<8x16xf32>
    %1051 = arith.divf %1049, %1050 : vector<8x16xf32>
    %1052 = vector.extract_strided_slice %1031 {offsets = [0, 32], sizes = [8, 16], strides = [1, 1]} : vector<8x48xf32> to vector<8x16xf32>
    %1053 = vector.extract_strided_slice %1034 {offsets = [0, 32], sizes = [8, 16], strides = [1, 1]} : vector<8x48xf32> to vector<8x16xf32>
    %1054 = vector.broadcast %640 : vector<1x16xf32> to vector<8x16xf32>
    %1055 = arith.addf %1053, %1054 : vector<8x16xf32>
    %1056 = arith.mulf %1043, %1055 : vector<8x16xf32>
    %1057 = arith.addf %1052, %1056 : vector<8x16xf32>
    %1058 = math.tanh %1057 : vector<8x16xf32>
    %cst_228 = arith.constant 1.000000e+00 : f32
    %1059 = vector.broadcast %cst_228 : f32 to vector<8x16xf32>
    %1060 = arith.subf %1059, %1051 : vector<8x16xf32>
    %1061 = arith.mulf %1060, %1058 : vector<8x16xf32>
    %1062 = arith.mulf %1051, %1035 : vector<8x16xf32>
    %1063 = arith.addf %1061, %1062 : vector<8x16xf32>
    %1064 = vector.extract_strided_slice %1029 {offsets = [0, 48], sizes = [8, 48], strides = [1, 1]} : vector<8x96xf32> to vector<8x48xf32>
    %1065 = vector.extract_strided_slice %1022 {offsets = [0, 16], sizes = [8, 16], strides = [1, 1]} : vector<8x32xf32> to vector<8x16xf32>
    %1066 = vector.extract_strided_slice %1033 {offsets = [0, 0], sizes = [8, 16], strides = [1, 1]} : vector<8x48xf32> to vector<8x16xf32>
    %1067 = vector.extract_strided_slice %1064 {offsets = [0, 0], sizes = [8, 16], strides = [1, 1]} : vector<8x48xf32> to vector<8x16xf32>
    %1068 = arith.addf %1066, %1067 : vector<8x16xf32>
    %1069 = arith.negf %1068 : vector<8x16xf32>
    %1070 = math.exp %1069 : vector<8x16xf32>
    %cst_229 = arith.constant 1.000000e+00 : f32
    %1071 = vector.broadcast %cst_229 : f32 to vector<8x16xf32>
    %1072 = arith.addf %1071, %1070 : vector<8x16xf32>
    %1073 = arith.divf %1071, %1072 : vector<8x16xf32>
    %1074 = vector.extract_strided_slice %1033 {offsets = [0, 16], sizes = [8, 16], strides = [1, 1]} : vector<8x48xf32> to vector<8x16xf32>
    %1075 = vector.extract_strided_slice %1064 {offsets = [0, 16], sizes = [8, 16], strides = [1, 1]} : vector<8x48xf32> to vector<8x16xf32>
    %1076 = arith.addf %1074, %1075 : vector<8x16xf32>
    %1077 = arith.negf %1076 : vector<8x16xf32>
    %1078 = math.exp %1077 : vector<8x16xf32>
    %cst_230 = arith.constant 1.000000e+00 : f32
    %1079 = vector.broadcast %cst_230 : f32 to vector<8x16xf32>
    %1080 = arith.addf %1079, %1078 : vector<8x16xf32>
    %1081 = arith.divf %1079, %1080 : vector<8x16xf32>
    %1082 = vector.extract_strided_slice %1033 {offsets = [0, 32], sizes = [8, 16], strides = [1, 1]} : vector<8x48xf32> to vector<8x16xf32>
    %1083 = vector.extract_strided_slice %1064 {offsets = [0, 32], sizes = [8, 16], strides = [1, 1]} : vector<8x48xf32> to vector<8x16xf32>
    %1084 = vector.broadcast %641 : vector<1x16xf32> to vector<8x16xf32>
    %1085 = arith.addf %1083, %1084 : vector<8x16xf32>
    %1086 = arith.mulf %1073, %1085 : vector<8x16xf32>
    %1087 = arith.addf %1082, %1086 : vector<8x16xf32>
    %1088 = math.tanh %1087 : vector<8x16xf32>
    %cst_231 = arith.constant 1.000000e+00 : f32
    %1089 = vector.broadcast %cst_231 : f32 to vector<8x16xf32>
    %1090 = arith.subf %1089, %1081 : vector<8x16xf32>
    %1091 = arith.mulf %1090, %1088 : vector<8x16xf32>
    %1092 = arith.mulf %1081, %1065 : vector<8x16xf32>
    %1093 = arith.addf %1091, %1092 : vector<8x16xf32>
    %1094 = arith.index_cast %1024 : i32 to index
    %c0_232 = arith.constant 0 : index
    %1095 = vector.load %arg9[%1094, %c0_232] : memref<64x32xf32, #tpu.memory_space<vmem>>, vector<8x16xf32>
    tpu.vector_store %arg9[%1094, %c0_232], %1063 {strides = array<i32>} : memref<64x32xf32, #tpu.memory_space<vmem>>, vector<8x16xf32>,
    %1096 = arith.index_cast %1027 : i32 to index
    %c16_233 = arith.constant 16 : index
    %1097 = vector.load %arg9[%1096, %c16_233] : memref<64x32xf32, #tpu.memory_space<vmem>>, vector<8x16xf32>
    tpu.vector_store %arg9[%1096, %c16_233], %1093 {strides = array<i32>} : memref<64x32xf32, #tpu.memory_space<vmem>>, vector<8x16xf32>,
    %1098 = tpu.concatenate %1063, %1093 in 1 : vector<8x16xf32>, vector<8x16xf32> -> vector<8x32xf32>
    %c6_i32_234 = arith.constant 6 : i32
    %c8_i32_235 = arith.constant 8 : i32
    %1099 = arith.muli %c6_i32_234, %c8_i32_235 : i32
    %1100 = tpu.assume_multiple %1099, 8 : i32
    %c7_i32_236 = arith.constant 7 : i32
    %1101 = arith.subi %c7_i32_236, %c6_i32_234 : i32
    %c8_i32_237 = arith.constant 8 : i32
    %1102 = arith.muli %1101, %c8_i32_237 : i32
    %1103 = tpu.assume_multiple %1102, 8 : i32
    %1104 = arith.truncf %1098 : vector<8x32xf32> to vector<8x32xbf16>
    %cst_238 = arith.constant dense<0.000000e+00> : vector<8x96xf32>
    %1105 = tpu.matmul %1104, %637, %cst_238 {dimension_numbers = #tpu.dot_dimension_numbers<[1], [0], [0], [1], [0, 0, 1, 1], [], []>} : vector<8x32xbf16>, vector<32x96xbf16>, vector<8x96xf32> -> vector<8x96xf32>
    %1106 = arith.index_cast %1100 : i32 to index
    %c0_239 = arith.constant 0 : index
    %1107 = vector.load %arg8[%1106, %c0_239] : memref<64x96xf32, #tpu.memory_space<vmem>>, vector<8x48xf32>
    %1108 = arith.index_cast %1103 : i32 to index
    %c48_240 = arith.constant 48 : index
    %1109 = vector.load %arg8[%1108, %c48_240] : memref<64x96xf32, #tpu.memory_space<vmem>>, vector<8x48xf32>
    %1110 = vector.extract_strided_slice %1105 {offsets = [0, 0], sizes = [8, 48], strides = [1, 1]} : vector<8x96xf32> to vector<8x48xf32>
    %1111 = vector.extract_strided_slice %1098 {offsets = [0, 0], sizes = [8, 16], strides = [1, 1]} : vector<8x32xf32> to vector<8x16xf32>
    %1112 = vector.extract_strided_slice %1107 {offsets = [0, 0], sizes = [8, 16], strides = [1, 1]} : vector<8x48xf32> to vector<8x16xf32>
    %1113 = vector.extract_strided_slice %1110 {offsets = [0, 0], sizes = [8, 16], strides = [1, 1]} : vector<8x48xf32> to vector<8x16xf32>
    %1114 = arith.addf %1112, %1113 : vector<8x16xf32>
    %1115 = arith.negf %1114 : vector<8x16xf32>
    %1116 = math.exp %1115 : vector<8x16xf32>
    %cst_241 = arith.constant 1.000000e+00 : f32
    %1117 = vector.broadcast %cst_241 : f32 to vector<8x16xf32>
    %1118 = arith.addf %1117, %1116 : vector<8x16xf32>
    %1119 = arith.divf %1117, %1118 : vector<8x16xf32>
    %1120 = vector.extract_strided_slice %1107 {offsets = [0, 16], sizes = [8, 16], strides = [1, 1]} : vector<8x48xf32> to vector<8x16xf32>
    %1121 = vector.extract_strided_slice %1110 {offsets = [0, 16], sizes = [8, 16], strides = [1, 1]} : vector<8x48xf32> to vector<8x16xf32>
    %1122 = arith.addf %1120, %1121 : vector<8x16xf32>
    %1123 = arith.negf %1122 : vector<8x16xf32>
    %1124 = math.exp %1123 : vector<8x16xf32>
    %cst_242 = arith.constant 1.000000e+00 : f32
    %1125 = vector.broadcast %cst_242 : f32 to vector<8x16xf32>
    %1126 = arith.addf %1125, %1124 : vector<8x16xf32>
    %1127 = arith.divf %1125, %1126 : vector<8x16xf32>
    %1128 = vector.extract_strided_slice %1107 {offsets = [0, 32], sizes = [8, 16], strides = [1, 1]} : vector<8x48xf32> to vector<8x16xf32>
    %1129 = vector.extract_strided_slice %1110 {offsets = [0, 32], sizes = [8, 16], strides = [1, 1]} : vector<8x48xf32> to vector<8x16xf32>
    %1130 = vector.broadcast %640 : vector<1x16xf32> to vector<8x16xf32>
    %1131 = arith.addf %1129, %1130 : vector<8x16xf32>
    %1132 = arith.mulf %1119, %1131 : vector<8x16xf32>
    %1133 = arith.addf %1128, %1132 : vector<8x16xf32>
    %1134 = math.tanh %1133 : vector<8x16xf32>
    %cst_243 = arith.constant 1.000000e+00 : f32
    %1135 = vector.broadcast %cst_243 : f32 to vector<8x16xf32>
    %1136 = arith.subf %1135, %1127 : vector<8x16xf32>
    %1137 = arith.mulf %1136, %1134 : vector<8x16xf32>
    %1138 = arith.mulf %1127, %1111 : vector<8x16xf32>
    %1139 = arith.addf %1137, %1138 : vector<8x16xf32>
    %1140 = vector.extract_strided_slice %1105 {offsets = [0, 48], sizes = [8, 48], strides = [1, 1]} : vector<8x96xf32> to vector<8x48xf32>
    %1141 = vector.extract_strided_slice %1098 {offsets = [0, 16], sizes = [8, 16], strides = [1, 1]} : vector<8x32xf32> to vector<8x16xf32>
    %1142 = vector.extract_strided_slice %1109 {offsets = [0, 0], sizes = [8, 16], strides = [1, 1]} : vector<8x48xf32> to vector<8x16xf32>
    %1143 = vector.extract_strided_slice %1140 {offsets = [0, 0], sizes = [8, 16], strides = [1, 1]} : vector<8x48xf32> to vector<8x16xf32>
    %1144 = arith.addf %1142, %1143 : vector<8x16xf32>
    %1145 = arith.negf %1144 : vector<8x16xf32>
    %1146 = math.exp %1145 : vector<8x16xf32>
    %cst_244 = arith.constant 1.000000e+00 : f32
    %1147 = vector.broadcast %cst_244 : f32 to vector<8x16xf32>
    %1148 = arith.addf %1147, %1146 : vector<8x16xf32>
    %1149 = arith.divf %1147, %1148 : vector<8x16xf32>
    %1150 = vector.extract_strided_slice %1109 {offsets = [0, 16], sizes = [8, 16], strides = [1, 1]} : vector<8x48xf32> to vector<8x16xf32>
    %1151 = vector.extract_strided_slice %1140 {offsets = [0, 16], sizes = [8, 16], strides = [1, 1]} : vector<8x48xf32> to vector<8x16xf32>
    %1152 = arith.addf %1150, %1151 : vector<8x16xf32>
    %1153 = arith.negf %1152 : vector<8x16xf32>
    %1154 = math.exp %1153 : vector<8x16xf32>
    %cst_245 = arith.constant 1.000000e+00 : f32
    %1155 = vector.broadcast %cst_245 : f32 to vector<8x16xf32>
    %1156 = arith.addf %1155, %1154 : vector<8x16xf32>
    %1157 = arith.divf %1155, %1156 : vector<8x16xf32>
    %1158 = vector.extract_strided_slice %1109 {offsets = [0, 32], sizes = [8, 16], strides = [1, 1]} : vector<8x48xf32> to vector<8x16xf32>
    %1159 = vector.extract_strided_slice %1140 {offsets = [0, 32], sizes = [8, 16], strides = [1, 1]} : vector<8x48xf32> to vector<8x16xf32>
    %1160 = vector.broadcast %641 : vector<1x16xf32> to vector<8x16xf32>
    %1161 = arith.addf %1159, %1160 : vector<8x16xf32>
    %1162 = arith.mulf %1149, %1161 : vector<8x16xf32>
    %1163 = arith.addf %1158, %1162 : vector<8x16xf32>
    %1164 = math.tanh %1163 : vector<8x16xf32>
    %cst_246 = arith.constant 1.000000e+00 : f32
    %1165 = vector.broadcast %cst_246 : f32 to vector<8x16xf32>
    %1166 = arith.subf %1165, %1157 : vector<8x16xf32>
    %1167 = arith.mulf %1166, %1164 : vector<8x16xf32>
    %1168 = arith.mulf %1157, %1141 : vector<8x16xf32>
    %1169 = arith.addf %1167, %1168 : vector<8x16xf32>
    %1170 = arith.index_cast %1100 : i32 to index
    %c0_247 = arith.constant 0 : index
    %1171 = vector.load %arg9[%1170, %c0_247] : memref<64x32xf32, #tpu.memory_space<vmem>>, vector<8x16xf32>
    tpu.vector_store %arg9[%1170, %c0_247], %1139 {strides = array<i32>} : memref<64x32xf32, #tpu.memory_space<vmem>>, vector<8x16xf32>,
    %1172 = arith.index_cast %1103 : i32 to index
    %c16_248 = arith.constant 16 : index
    %1173 = vector.load %arg9[%1172, %c16_248] : memref<64x32xf32, #tpu.memory_space<vmem>>, vector<8x16xf32>
    tpu.vector_store %arg9[%1172, %c16_248], %1169 {strides = array<i32>} : memref<64x32xf32, #tpu.memory_space<vmem>>, vector<8x16xf32>,
    %1174 = tpu.concatenate %1139, %1169 in 1 : vector<8x16xf32>, vector<8x16xf32> -> vector<8x32xf32>
    %c7_i32_249 = arith.constant 7 : i32
    %c8_i32_250 = arith.constant 8 : i32
    %1175 = arith.muli %c7_i32_249, %c8_i32_250 : i32
    %1176 = tpu.assume_multiple %1175, 8 : i32
    %c7_i32_251 = arith.constant 7 : i32
    %1177 = arith.subi %c7_i32_251, %c7_i32_249 : i32
    %c8_i32_252 = arith.constant 8 : i32
    %1178 = arith.muli %1177, %c8_i32_252 : i32
    %1179 = tpu.assume_multiple %1178, 8 : i32
    %1180 = arith.truncf %1174 : vector<8x32xf32> to vector<8x32xbf16>
    %cst_253 = arith.constant dense<0.000000e+00> : vector<8x96xf32>
    %1181 = tpu.matmul %1180, %637, %cst_253 {dimension_numbers = #tpu.dot_dimension_numbers<[1], [0], [0], [1], [0, 0, 1, 1], [], []>} : vector<8x32xbf16>, vector<32x96xbf16>, vector<8x96xf32> -> vector<8x96xf32>
    %1182 = arith.index_cast %1176 : i32 to index
    %c0_254 = arith.constant 0 : index
    %1183 = vector.load %arg8[%1182, %c0_254] : memref<64x96xf32, #tpu.memory_space<vmem>>, vector<8x48xf32>
    %1184 = arith.index_cast %1179 : i32 to index
    %c48_255 = arith.constant 48 : index
    %1185 = vector.load %arg8[%1184, %c48_255] : memref<64x96xf32, #tpu.memory_space<vmem>>, vector<8x48xf32>
    %1186 = vector.extract_strided_slice %1181 {offsets = [0, 0], sizes = [8, 48], strides = [1, 1]} : vector<8x96xf32> to vector<8x48xf32>
    %1187 = vector.extract_strided_slice %1174 {offsets = [0, 0], sizes = [8, 16], strides = [1, 1]} : vector<8x32xf32> to vector<8x16xf32>
    %1188 = vector.extract_strided_slice %1183 {offsets = [0, 0], sizes = [8, 16], strides = [1, 1]} : vector<8x48xf32> to vector<8x16xf32>
    %1189 = vector.extract_strided_slice %1186 {offsets = [0, 0], sizes = [8, 16], strides = [1, 1]} : vector<8x48xf32> to vector<8x16xf32>
    %1190 = arith.addf %1188, %1189 : vector<8x16xf32>
    %1191 = arith.negf %1190 : vector<8x16xf32>
    %1192 = math.exp %1191 : vector<8x16xf32>
    %cst_256 = arith.constant 1.000000e+00 : f32
    %1193 = vector.broadcast %cst_256 : f32 to vector<8x16xf32>
    %1194 = arith.addf %1193, %1192 : vector<8x16xf32>
    %1195 = arith.divf %1193, %1194 : vector<8x16xf32>
    %1196 = vector.extract_strided_slice %1183 {offsets = [0, 16], sizes = [8, 16], strides = [1, 1]} : vector<8x48xf32> to vector<8x16xf32>
    %1197 = vector.extract_strided_slice %1186 {offsets = [0, 16], sizes = [8, 16], strides = [1, 1]} : vector<8x48xf32> to vector<8x16xf32>
    %1198 = arith.addf %1196, %1197 : vector<8x16xf32>
    %1199 = arith.negf %1198 : vector<8x16xf32>
    %1200 = math.exp %1199 : vector<8x16xf32>
    %cst_257 = arith.constant 1.000000e+00 : f32
    %1201 = vector.broadcast %cst_257 : f32 to vector<8x16xf32>
    %1202 = arith.addf %1201, %1200 : vector<8x16xf32>
    %1203 = arith.divf %1201, %1202 : vector<8x16xf32>
    %1204 = vector.extract_strided_slice %1183 {offsets = [0, 32], sizes = [8, 16], strides = [1, 1]} : vector<8x48xf32> to vector<8x16xf32>
    %1205 = vector.extract_strided_slice %1186 {offsets = [0, 32], sizes = [8, 16], strides = [1, 1]} : vector<8x48xf32> to vector<8x16xf32>
    %1206 = vector.broadcast %640 : vector<1x16xf32> to vector<8x16xf32>
    %1207 = arith.addf %1205, %1206 : vector<8x16xf32>
    %1208 = arith.mulf %1195, %1207 : vector<8x16xf32>
    %1209 = arith.addf %1204, %1208 : vector<8x16xf32>
    %1210 = math.tanh %1209 : vector<8x16xf32>
    %cst_258 = arith.constant 1.000000e+00 : f32
    %1211 = vector.broadcast %cst_258 : f32 to vector<8x16xf32>
    %1212 = arith.subf %1211, %1203 : vector<8x16xf32>
    %1213 = arith.mulf %1212, %1210 : vector<8x16xf32>
    %1214 = arith.mulf %1203, %1187 : vector<8x16xf32>
    %1215 = arith.addf %1213, %1214 : vector<8x16xf32>
    %1216 = vector.extract_strided_slice %1181 {offsets = [0, 48], sizes = [8, 48], strides = [1, 1]} : vector<8x96xf32> to vector<8x48xf32>
    %1217 = vector.extract_strided_slice %1174 {offsets = [0, 16], sizes = [8, 16], strides = [1, 1]} : vector<8x32xf32> to vector<8x16xf32>
    %1218 = vector.extract_strided_slice %1185 {offsets = [0, 0], sizes = [8, 16], strides = [1, 1]} : vector<8x48xf32> to vector<8x16xf32>
    %1219 = vector.extract_strided_slice %1216 {offsets = [0, 0], sizes = [8, 16], strides = [1, 1]} : vector<8x48xf32> to vector<8x16xf32>
    %1220 = arith.addf %1218, %1219 : vector<8x16xf32>
    %1221 = arith.negf %1220 : vector<8x16xf32>
    %1222 = math.exp %1221 : vector<8x16xf32>
    %cst_259 = arith.constant 1.000000e+00 : f32
    %1223 = vector.broadcast %cst_259 : f32 to vector<8x16xf32>
    %1224 = arith.addf %1223, %1222 : vector<8x16xf32>
    %1225 = arith.divf %1223, %1224 : vector<8x16xf32>
    %1226 = vector.extract_strided_slice %1185 {offsets = [0, 16], sizes = [8, 16], strides = [1, 1]} : vector<8x48xf32> to vector<8x16xf32>
    %1227 = vector.extract_strided_slice %1216 {offsets = [0, 16], sizes = [8, 16], strides = [1, 1]} : vector<8x48xf32> to vector<8x16xf32>
    %1228 = arith.addf %1226, %1227 : vector<8x16xf32>
    %1229 = arith.negf %1228 : vector<8x16xf32>
    %1230 = math.exp %1229 : vector<8x16xf32>
    %cst_260 = arith.constant 1.000000e+00 : f32
    %1231 = vector.broadcast %cst_260 : f32 to vector<8x16xf32>
    %1232 = arith.addf %1231, %1230 : vector<8x16xf32>
    %1233 = arith.divf %1231, %1232 : vector<8x16xf32>
    %1234 = vector.extract_strided_slice %1185 {offsets = [0, 32], sizes = [8, 16], strides = [1, 1]} : vector<8x48xf32> to vector<8x16xf32>
    %1235 = vector.extract_strided_slice %1216 {offsets = [0, 32], sizes = [8, 16], strides = [1, 1]} : vector<8x48xf32> to vector<8x16xf32>
    %1236 = vector.broadcast %641 : vector<1x16xf32> to vector<8x16xf32>
    %1237 = arith.addf %1235, %1236 : vector<8x16xf32>
    %1238 = arith.mulf %1225, %1237 : vector<8x16xf32>
    %1239 = arith.addf %1234, %1238 : vector<8x16xf32>
    %1240 = math.tanh %1239 : vector<8x16xf32>
    %cst_261 = arith.constant 1.000000e+00 : f32
    %1241 = vector.broadcast %cst_261 : f32 to vector<8x16xf32>
    %1242 = arith.subf %1241, %1233 : vector<8x16xf32>
    %1243 = arith.mulf %1242, %1240 : vector<8x16xf32>
    %1244 = arith.mulf %1233, %1217 : vector<8x16xf32>
    %1245 = arith.addf %1243, %1244 : vector<8x16xf32>
    %1246 = arith.index_cast %1176 : i32 to index
    %c0_262 = arith.constant 0 : index
    %1247 = vector.load %arg9[%1246, %c0_262] : memref<64x32xf32, #tpu.memory_space<vmem>>, vector<8x16xf32>
    tpu.vector_store %arg9[%1246, %c0_262], %1215 {strides = array<i32>} : memref<64x32xf32, #tpu.memory_space<vmem>>, vector<8x16xf32>,
    %1248 = arith.index_cast %1179 : i32 to index
    %c16_263 = arith.constant 16 : index
    %1249 = vector.load %arg9[%1248, %c16_263] : memref<64x32xf32, #tpu.memory_space<vmem>>, vector<8x16xf32>
    tpu.vector_store %arg9[%1248, %c16_263], %1245 {strides = array<i32>} : memref<64x32xf32, #tpu.memory_space<vmem>>, vector<8x16xf32>,
    %1250 = tpu.concatenate %1215, %1245 in 1 : vector<8x16xf32>, vector<8x16xf32> -> vector<8x32xf32>
    %c8_i32_264 = arith.constant 8 : i32
    %c0_265 = arith.constant 0 : index
    %c0_266 = arith.constant 0 : index
    %1251 = vector.load %arg9[%c0_265, %c0_266] : memref<64x32xf32, #tpu.memory_space<vmem>>, vector<64x32xf32>
    %cst_267 = arith.constant 0.000000e+00 : f32
    %1252 = vector.broadcast %cst_267 : f32 to vector<64x32xf32>
    %1253 = arith.cmpf oge, %1251, %1252 : vector<64x32xf32>
    %cst_268 = arith.constant 2.000000e-01 : f32
    %1254 = vector.broadcast %cst_268 : f32 to vector<64x32xf32>
    %1255 = arith.mulf %1254, %1251 : vector<64x32xf32>
    %1256 = arith.select %1253, %1251, %1255 : vector<64x32xi1>, vector<64x32xf32>
    %1257 = arith.truncf %1256 : vector<64x32xf32> to vector<64x32xbf16>
    %c0_269 = arith.constant 0 : index
    %c0_270 = arith.constant 0 : index
    %1258 = vector.load %arg5[%c0_269, %c0_270] : memref<32x24xbf16, #tpu.memory_space<vmem>>, vector<32x24xbf16>
    %cst_271 = arith.constant dense<0.000000e+00> : vector<64x24xf32>
    %1259 = tpu.matmul %1257, %1258, %cst_271 {dimension_numbers = #tpu.dot_dimension_numbers<[1], [0], [0], [1], [0, 0, 1, 1], [], []>} : vector<64x32xbf16>, vector<32x24xbf16>, vector<64x24xf32> -> vector<64x24xf32>
    %c0_272 = arith.constant 0 : index
    %c0_273 = arith.constant 0 : index
    %1260 = vector.load %arg6[%c0_272, %c0_273] : memref<1x24xf32, #tpu.memory_space<vmem>>, vector<1x24xf32>
    %1261 = vector.broadcast %1260 : vector<1x24xf32> to vector<64x24xf32>
    %1262 = arith.addf %1259, %1261 : vector<64x24xf32>
    %1263 = vector.shape_cast %1262 : vector<64x24xf32> to vector<8x8x24xf32>
    %c0_274 = arith.constant 0 : index
    %c0_275 = arith.constant 0 : index
    %c0_276 = arith.constant 0 : index
    %1264 = vector.load %arg7[%c0_274, %c0_275, %c0_276] : memref<8x8x24xf32, #tpu.memory_space<vmem>>, vector<8x8x24xf32>
    tpu.vector_store %arg7[%c0_274, %c0_275, %c0_276], %1263 {strides = array<i32>} : memref<8x8x24xf32, #tpu.memory_space<vmem>>, vector<8x8x24xf32>,
    return
  }
}

</mosaic_0001>

<llo_original>
// kernel: decoder_block_forward.1
$region0: #{decoder_block_forward.1}
  #allocation0 [shape = 'u32[]', space=smem, size = 0x4, offset = 0x4, fixed_abs, tag = 'smem constant byte address 0x4 - core index']
  #allocation1 [shape = 'u32[144,128]{1,0:T(1,128)}', space=vmem, size = 0x12000, scoped, tag = 'internal scratch']
  #allocation2 [shape = 'f32[64,96]{1,0:T(8,128)}', space=vmem, size = 0x8000, scoped, tag = 'scratch operand']
  #allocation3 [shape = 'f32[64,32]{1,0:T(8,128)}', space=vmem, size = 0x8000, scoped, tag = 'scratch operand']
  %s0 = inlined_call_operand.vmem [shape: f32[8,8,32], index: 0, kind: input, shape index: {}]
  %s1 = inlined_call_operand.vmem [shape: bf16[2,32,96], index: 1, kind: input, shape index: {}]
  %s2 = inlined_call_operand.vmem [shape: bf16[2,32,96], index: 2, kind: input, shape index: {}]
  %s3 = inlined_call_operand.vmem [shape: f32[2,1,96], index: 3, kind: input, shape index: {}]
  %s4 = inlined_call_operand.vmem [shape: f32[2,1,32], index: 4, kind: input, shape index: {}]
  %s5 = inlined_call_operand.vmem [shape: bf16[32,24], index: 5, kind: input, shape index: {}]
  %s6 = inlined_call_operand.vmem [shape: f32[1,24], index: 6, kind: input, shape index: {}]
  %s7 = inlined_call_operand.vmem [shape: f32[8,8,24], index: 7, kind: output, shape index: {}]
  %s8 = sld [smem:[#allocation0]]
  $region38: #{decoder_block_forward.1} parent=0
    _
  %s10 = ssub.s32 1, %s8
  %s11 = scalar_select 0, %s10, %s8
  // Predicated region
  $region2: #{decoder_block_forward.1} parent=0 // pred_check
    _
  $region3: #{decoder_block_forward.1} parent=0 // pred_check_branch
    %13 = sbr.rel (0) target = $region5
  $region4: #{decoder_block_forward.1} parent=0 // pred_region
    _
  $region5: #{decoder_block_forward.1} parent=0 // pred_fallthru
    _
  // Predicated region
  $region6: #{decoder_block_forward.1} parent=0 // pred_check
    _
  $region7: #{decoder_block_forward.1} parent=0 // pred_check_branch
    %15 = sbr.rel (0) target = $region9
  $region8: #{decoder_block_forward.1} parent=0 // pred_region
    _
  $region9: #{decoder_block_forward.1} parent=0 // pred_fallthru
    _
  // Predicated region
  $region10: #{decoder_block_forward.1} parent=0 // pred_check
    _
  $region11: #{decoder_block_forward.1} parent=0 // pred_check_branch
    %17 = sbr.rel (0) target = $region13
  $region12: #{decoder_block_forward.1} parent=0 // pred_region
    _
  $region13: #{decoder_block_forward.1} parent=0 // pred_fallthru
    _
  // Predicated region
  $region14: #{decoder_block_forward.1} parent=0 // pred_check
    _
  $region15: #{decoder_block_forward.1} parent=0 // pred_check_branch
    %19 = sbr.rel (0) target = $region17
  $region16: #{decoder_block_forward.1} parent=0 // pred_region
    _
  $region17: #{decoder_block_forward.1} parent=0 // pred_fallthru
    _
  // Predicated region
  $region18: #{decoder_block_forward.1} parent=0 // pred_check
    _
  $region19: #{decoder_block_forward.1} parent=0 // pred_check_branch
    %21 = sbr.rel (0) target = $region21
  $region20: #{decoder_block_forward.1} parent=0 // pred_region
    _
  $region21: #{decoder_block_forward.1} parent=0 // pred_fallthru
    _
  // Predicated region
  $region22: #{decoder_block_forward.1} parent=0 // pred_check
    _
  $region23: #{decoder_block_forward.1} parent=0 // pred_check_branch
    %23 = sbr.rel (0) target = $region25
  $region24: #{decoder_block_forward.1} parent=0 // pred_region
    _
  $region25: #{decoder_block_forward.1} parent=0 // pred_fallthru
    _
  // Predicated region
  $region26: #{decoder_block_forward.1} parent=0 // pred_check
    _
  $region27: #{decoder_block_forward.1} parent=0 // pred_check_branch
    %25 = sbr.rel (0) target = $region29
  $region28: #{decoder_block_forward.1} parent=0 // pred_region
    _
  $region29: #{decoder_block_forward.1} parent=0 // pred_fallthru
    _
  %v27 = vld [vmem:[%s0] sm:$0xff]
  %v28 = vld [vmem:[%s0 + $0x8] sm:$0xff]
  %v29 = vld [vmem:[%s0 + $0x10] sm:$0xff]
  %v30 = vld [vmem:[%s0 + $0x18] sm:$0xff]
  %v31 = vld [vmem:[%s0 + $0x20] sm:$0xff]
  %v32 = vld [vmem:[%s0 + $0x28] sm:$0xff]
  %v33 = vld [vmem:[%s0 + $0x30] sm:$0xff]
  %v34 = vld [vmem:[%s0 + $0x38] sm:$0xff]
  %v35 = vpack.c.bf16 %v28, %v27
  %v36 = vpack.c.bf16 %v30, %v29
  %v37 = vpack.c.bf16 %v32, %v31
  %v38 = vpack.c.bf16 %v34, %v33
  %v39 = vld [vmem:[%s1] sm:$0xf]
  %v40 = vld [vmem:[%s1 + $0x4] sm:$0xf]
  %v41 = vld [vmem:[%s1 + $0x8] sm:$0xf]
  %v42 = vld [vmem:[%s1 + $0xc] sm:$0xf]
  %v43 = vld [vmem:[%s3] sm:$0x1]
  %v45 = vlaneseq
  %v46 = vshrl.u32 %v45, 7
  %v47 = vsub.s32 0, %v46
  %v48 = vrot.slane %v43, %v47
  %v54 = vunpack.c.l.b16 %v39
  %v55 = vunpack.c.l.b16 %v40
  %v56 = vunpack.c.l.b16 %v41
  %v57 = vunpack.c.l.b16 %v42
  %v58 = vpack.c.b16 %v55, %v54
  %v59 = vpack.c.b16 %v57, %v56
  %vm62 = vcmask 261120
  %v64 = vsel %vm62, %v35, 0
  %v67 = vsel %vm62, %v36, 0
  %v70 = vsel %vm62, %v37, 0
  %v73 = vsel %vm62, %v38, 0
  %75 = vmatprep.subr.bf16.mxu0 0
  %76 = vmatpush1.bf16.msra.mxu0 %v58
  %77 = vmatprep.subr.bf16.mxu0 0
  %78 = vmatpush1.bf16.msra.mxu0 %v59
  %79 = vmatprep.subr.bf16.mxu0 0
  %80 = vmatpush1.bf16.msra.mxu0 0
  %81 = vmatprep.subr.bf16.mxu0 0
  %82 = vmatpush1.bf16.msra.mxu0 0
  %83 = vmatprep.subr.bf16.mxu0 0
  %84 = vmatpush1.bf16.msra.mxu0 0
  %85 = vmatprep.subr.bf16.mxu0 0
  %86 = vmatpush1.bf16.msra.mxu0 0
  %87 = vmatprep.subr.bf16.mxu0 0
  %88 = vmatpush1.bf16.msra.mxu0 0
  %89 = vmatprep.subr.bf16.mxu0 0
  %90 = vmatpush1.bf16.msra.mxu0 0
  %91 = vmatprep.subr.bf16.mxu0 0
  %92 = vmatpush1.bf16.msra.mxu0 0
  %93 = vmatprep.subr.bf16.mxu0 0
  %94 = vmatpush1.bf16.msra.mxu0 0
  %95 = vmatprep.subr.bf16.mxu0 0
  %96 = vmatpush1.bf16.msra.mxu0 0
  %97 = vmatprep.subr.bf16.mxu0 0
  %98 = vmatpush1.bf16.msra.mxu0 0
  %99 = vmatprep.subr.bf16.mxu0 0
  %100 = vmatpush1.bf16.msra.mxu0 0
  %101 = vmatprep.subr.bf16.mxu0 0
  %102 = vmatpush1.bf16.msra.mxu0 0
  %103 = vmatprep.subr.bf16.mxu0 0
  %104 = vmatpush1.bf16.msra.mxu0 0
  %105 = vmatprep.subr.bf16.mxu0 0
  %106 = vmatpush1.bf16.msra.mxu0 0
  %107 = vmatprep.mubr.bf16.mxu0 0
  %108 = vmatmul.mubr.bf16.gmra.mrb[0].mxu0 %v64
  %v109 = vpop.f32.mrb[0].mxu0
  %v110 = vadd.f32 %v48, %v109
  %v111 = vpop.f32.mrb[0].mxu0
  %v112 = vpop.f32.mrb[0].mxu0
  %v113 = vadd.f32 %v48, %v112
  %v114 = vpop.f32.mrb[0].mxu0
  %115 = vmatprep.mubr.bf16.mxu0 0
  %116 = vmatmul.mubr.bf16.gmra.mrb[0].mxu0 %v67
  %v117 = vpop.f32.mrb[0].mxu0
  %v118 = vadd.f32 %v48, %v117
  %v119 = vpop.f32.mrb[0].mxu0
  %v120 = vpop.f32.mrb[0].mxu0
  %v121 = vadd.f32 %v48, %v120
  %v122 = vpop.f32.mrb[0].mxu0
  %123 = vmatprep.mubr.bf16.mxu0 0
  %124 = vmatmul.mubr.bf16.gmra.mrb[0].mxu0 %v70
  %v125 = vpop.f32.mrb[0].mxu0
  %v126 = vadd.f32 %v48, %v125
  %v127 = vpop.f32.mrb[0].mxu0
  %v128 = vpop.f32.mrb[0].mxu0
  %v129 = vadd.f32 %v48, %v128
  %v130 = vpop.f32.mrb[0].mxu0
  %131 = vmatprep.mubr.bf16.mxu0 0
  %132 = vmatmul.mubr.bf16.gmra.mrb[0].mxu0 %v73
  %v133 = vpop.f32.mrb[0].mxu0
  %v134 = vadd.f32 %v48, %v133
  %v135 = vpop.f32.mrb[0].mxu0
  %v136 = vpop.f32.mrb[0].mxu0
  %v137 = vadd.f32 %v48, %v136
  %v138 = vpop.f32.mrb[0].mxu0
  %139 = vdwg.mxu0
  %vm140 = vcmask 785408
  %141 = vst.msk [vmem:[#allocation2] sm:$0xff] %vm140, %v110
  %142 = vst.msk [vmem:[#allocation2 + $0x8] sm:$0xff] %vm140, %v113
  %143 = vst.msk [vmem:[#allocation2 + $0x10] sm:$0xff] %vm140, %v118
  %144 = vst.msk [vmem:[#allocation2 + $0x18] sm:$0xff] %vm140, %v121
  %145 = vst.msk [vmem:[#allocation2 + $0x20] sm:$0xff] %vm140, %v126
  %146 = vst.msk [vmem:[#allocation2 + $0x28] sm:$0xff] %vm140, %v129
  %147 = vst.msk [vmem:[#allocation2 + $0x30] sm:$0xff] %vm140, %v134
  %148 = vst.msk [vmem:[#allocation2 + $0x38] sm:$0xff] %vm140, %v137
  %v149 = vld [vmem:[%s2] sm:$0xf]
  %v150 = vld [vmem:[%s2 + $0x4] sm:$0xf]
  %v151 = vld [vmem:[%s2 + $0x8] sm:$0xf]
  %v152 = vld [vmem:[%s2 + $0xc] sm:$0xf]
  %v153 = vld [vmem:[%s4] sm:$0x1]
  %v158 = vunpack.c.l.b16 %v149
  %v159 = vunpack.c.l.b16 %v150
  %v160 = vunpack.c.l.b16 %v151
  %v161 = vunpack.c.l.b16 %v152
  %v162 = vpack.c.b16 %v159, %v158
  %v163 = vpack.c.b16 %v161, %v160
  %v167 = vsel %vm62, 0, 0
  %169 = vmatprep.subr.bf16.mxu0 0
  %170 = vmatpush1.bf16.msra.mxu0 %v162
  %171 = vmatprep.subr.bf16.mxu0 0
  %172 = vmatpush1.bf16.msra.mxu0 %v163
  %173 = vmatprep.subr.bf16.mxu0 0
  %174 = vmatpush1.bf16.msra.mxu0 0
  %175 = vmatprep.subr.bf16.mxu0 0
  %176 = vmatpush1.bf16.msra.mxu0 0
  %177 = vmatprep.subr.bf16.mxu0 0
  %178 = vmatpush1.bf16.msra.mxu0 0
  %179 = vmatprep.subr.bf16.mxu0 0
  %180 = vmatpush1.bf16.msra.mxu0 0
  %181 = vmatprep.subr.bf16.mxu0 0
  %182 = vmatpush1.bf16.msra.mxu0 0
  %183 = vmatprep.subr.bf16.mxu0 0
  %184 = vmatpush1.bf16.msra.mxu0 0
  %185 = vmatprep.subr.bf16.mxu0 0
  %186 = vmatpush1.bf16.msra.mxu0 0
  %187 = vmatprep.subr.bf16.mxu0 0
  %188 = vmatpush1.bf16.msra.mxu0 0
  %189 = vmatprep.subr.bf16.mxu0 0
  %190 = vmatpush1.bf16.msra.mxu0 0
  %191 = vmatprep.subr.bf16.mxu0 0
  %192 = vmatpush1.bf16.msra.mxu0 0
  %193 = vmatprep.subr.bf16.mxu0 0
  %194 = vmatpush1.bf16.msra.mxu0 0
  %195 = vmatprep.subr.bf16.mxu0 0
  %196 = vmatpush1.bf16.msra.mxu0 0
  %197 = vmatprep.subr.bf16.mxu0 0
  %198 = vmatpush1.bf16.msra.mxu0 0
  %199 = vmatprep.subr.bf16.mxu0 0
  %200 = vmatpush1.bf16.msra.mxu0 0
  %201 = vmatprep.mubr.bf16.mxu0 0
  %202 = vmatmul.mubr.bf16.gmra.mrb[0].mxu0 %v167
  %v203 = vpop.f32.mrb[0].mxu0
  %v204 = vadd.f32 0.0, %v203
  %v205 = vpop.f32.mrb[0].mxu0
  %v206 = vpop.f32.mrb[0].mxu0
  %v207 = vpop.f32.mrb[0].mxu0
  %208 = vdwg.mxu0
  %v209 = vld [vmem:[#allocation2] sm:$0xff]
  %s210 = scalar_lea.vmem [#allocation2], 56
  %v211 = vld [vmem:[%s210] sm:$0xff]
  %v212 = vadd.f32 %v209, %v204
  %v213 = vxor.u32 %v212, 2147483648
  %v214 = vmul.f32 %v213, 1.442695
  %v215 = vpow.pop %v214
  %v216 = vadd.f32 %v215, 1.0
  %v217 = vrcp.pop %v216
  %v218 = vmul.f32 1.0, %v217
  %v220 = vlaneseq
  %v221 = vshrl.u32 %v220, 7
  %v222 = vsub.s32 0, %v221
  %v223 = vrot.slane %v153, %v222
  %224 = vrot.lane.b32.xlu0 %v223, 32
  %v225 = vpop.permute.xlu0 %224
  %v227 = vadd.f32 %v204, %v225
  %229 = vrot.lane.b32.xlu0 %v227, 96
  %v230 = vpop.permute.xlu0 %229
  %v232 = vmul.f32 %v218, %v230
  %234 = vrot.lane.b32.xlu0 %v232, 32
  %v235 = vpop.permute.xlu0 %234
  %v237 = vadd.f32 %v209, %v235
  %v238 = vtanh.pop %v237
  %v239 = vsub.f32 1.0, %v218
  %241 = vrot.lane.b32.xlu0 %v238, 112
  %v242 = vpop.permute.xlu0 %241
  %v244 = vmul.f32 %v239, %v242
  %v245 = vmul.f32 %v218, 0.0
  %v246 = vadd.f32 %v244, %v245
  %v247 = vadd.f32 %v211, %v204
  %v248 = vxor.u32 %v247, 2147483648
  %v249 = vmul.f32 %v248, 1.442695
  %v250 = vpow.pop %v249
  %v251 = vadd.f32 %v250, 1.0
  %v252 = vrcp.pop %v251
  %v253 = vmul.f32 1.0, %v252
  %254 = vrot.lane.b32.xlu0 %v223, 64
  %v255 = vpop.permute.xlu0 %254
  %v257 = vadd.f32 %v204, %v255
  %259 = vrot.lane.b32.xlu0 %v257, 96
  %v260 = vpop.permute.xlu0 %259
  %v262 = vmul.f32 %v253, %v260
  %264 = vrot.lane.b32.xlu0 %v262, 32
  %v265 = vpop.permute.xlu0 %264
  %v267 = vadd.f32 %v211, %v265
  %v268 = vtanh.pop %v267
  %v269 = vsub.f32 1.0, %v253
  %271 = vrot.lane.b32.xlu0 %v268, 112
  %v272 = vpop.permute.xlu0 %271
  %v274 = vmul.f32 %v269, %v272
  %v275 = vmul.f32 %v253, 0.0
  %v276 = vadd.f32 %v274, %v275
  %278 = vrot.lane.b32.xlu0 %v246, 112
  %v279 = vpop.permute.xlu0 %278
  %vm281 = vcmask 130048
  %282 = vst.msk [vmem:[#allocation3] sm:$0xff] %vm281, %v279
  %284 = vrot.lane.b32.xlu0 %v276, 80
  %v285 = vpop.permute.xlu0 %284
  %s287 = scalar_lea.vmem [#allocation3], 56
  %vm288 = vcmask 261248
  %289 = vst.msk [vmem:[%s287] sm:$0xff] %vm288, %v285
  %v290 = vsel %vm281, %v279, %v285
  %v291 = vpack.c.bf16 %v290, %v290
  %v293 = vsel %vm62, %v291, 0
  %295 = vmatprep.subr.bf16.mxu0 0
  %296 = vmatpush1.bf16.msra.mxu0 %v162
  %297 = vmatprep.subr.bf16.mxu0 0
  %298 = vmatpush1.bf16.msra.mxu0 %v163
  %299 = vmatprep.subr.bf16.mxu0 0
  %300 = vmatpush1.bf16.msra.mxu0 0
  %301 = vmatprep.subr.bf16.mxu0 0
  %302 = vmatpush1.bf16.msra.mxu0 0
  %303 = vmatprep.subr.bf16.mxu0 0
  %304 = vmatpush1.bf16.msra.mxu0 0
  %305 = vmatprep.subr.bf16.mxu0 0
  %306 = vmatpush1.bf16.msra.mxu0 0
  %307 = vmatprep.subr.bf16.mxu0 0
  %308 = vmatpush1.bf16.msra.mxu0 0
  %309 = vmatprep.subr.bf16.mxu0 0
  %310 = vmatpush1.bf16.msra.mxu0 0
  %311 = vmatprep.subr.bf16.mxu0 0
  %312 = vmatpush1.bf16.msra.mxu0 0
  %313 = vmatprep.subr.bf16.mxu0 0
  %314 = vmatpush1.bf16.msra.mxu0 0
  %315 = vmatprep.subr.bf16.mxu0 0
  %316 = vmatpush1.bf16.msra.mxu0 0
  %317 = vmatprep.subr.bf16.mxu0 0
  %318 = vmatpush1.bf16.msra.mxu0 0
  %319 = vmatprep.subr.bf16.mxu0 0
  %320 = vmatpush1.bf16.msra.mxu0 0
  %321 = vmatprep.subr.bf16.mxu0 0
  %322 = vmatpush1.bf16.msra.mxu0 0
  %323 = vmatprep.subr.bf16.mxu0 0
  %324 = vmatpush1.bf16.msra.mxu0 0
  %325 = vmatprep.subr.bf16.mxu0 0
  %326 = vmatpush1.bf16.msra.mxu0 0
  %327 = vmatprep.mubr.bf16.mxu0 0
  %328 = vmatmul.mubr.bf16.gmra.mrb[0].mxu0 %v293
  %v329 = vpop.f32.mrb[0].mxu0
  %v330 = vadd.f32 0.0, %v329
  %v331 = vpop.f32.mrb[0].mxu0
  %v332 = vpop.f32.mrb[0].mxu0
  %v333 = vpop.f32.mrb[0].mxu0
  %334 = vdwg.mxu0
  %s335 = scalar_lea.vmem [#allocation2], 8
  %v336 = vld [vmem:[%s335] sm:$0xff]
  %s337 = scalar_lea.vmem [#allocation2], 48
  %v338 = vld [vmem:[%s337] sm:$0xff]
  %v339 = vadd.f32 %v336, %v330
  %v340 = vxor.u32 %v339, 2147483648
  %v341 = vmul.f32 %v340, 1.442695
  %v342 = vpow.pop %v341
  %v343 = vadd.f32 %v342, 1.0
  %v344 = vrcp.pop %v343
  %v345 = vmul.f32 1.0, %v344
  %v346 = vadd.f32 %v330, %v225
  %348 = vrot.lane.b32.xlu0 %v346, 96
  %v349 = vpop.permute.xlu0 %348
  %v351 = vmul.f32 %v345, %v349
  %353 = vrot.lane.b32.xlu0 %v351, 32
  %v354 = vpop.permute.xlu0 %353
  %v356 = vadd.f32 %v336, %v354
  %v357 = vtanh.pop %v356
  %v358 = vsub.f32 1.0, %v345
  %360 = vrot.lane.b32.xlu0 %v357, 112
  %v361 = vpop.permute.xlu0 %360
  %v363 = vmul.f32 %v358, %v361
  %365 = vrot.lane.b32.xlu0 %v290, 16
  %v366 = vpop.permute.xlu0 %365
  %v368 = vmul.f32 %v345, %v366
  %v369 = vadd.f32 %v363, %v368
  %v370 = vadd.f32 %v338, %v330
  %v371 = vxor.u32 %v370, 2147483648
  %v372 = vmul.f32 %v371, 1.442695
  %v373 = vpow.pop %v372
  %v374 = vadd.f32 %v373, 1.0
  %v375 = vrcp.pop %v374
  %v376 = vmul.f32 1.0, %v375
  %v377 = vadd.f32 %v330, %v255
  %379 = vrot.lane.b32.xlu0 %v377, 96
  %v380 = vpop.permute.xlu0 %379
  %v382 = vmul.f32 %v376, %v380
  %384 = vrot.lane.b32.xlu0 %v382, 32
  %v385 = vpop.permute.xlu0 %384
  %v387 = vadd.f32 %v338, %v385
  %v388 = vtanh.pop %v387
  %v389 = vsub.f32 1.0, %v376
  %391 = vrot.lane.b32.xlu0 %v388, 112
  %v392 = vpop.permute.xlu0 %391
  %v394 = vmul.f32 %v389, %v392
  %395 = vrot.lane.b32.xlu0 %v290, 48
  %v396 = vpop.permute.xlu0 %395
  %v398 = vmul.f32 %v376, %v396
  %v399 = vadd.f32 %v394, %v398
  %401 = vrot.lane.b32.xlu0 %v369, 112
  %v402 = vpop.permute.xlu0 %401
  %s404 = scalar_lea.vmem [#allocation3], 8
  %405 = vst.msk [vmem:[%s404] sm:$0xff] %vm281, %v402
  %407 = vrot.lane.b32.xlu0 %v399, 80
  %v408 = vpop.permute.xlu0 %407
  %s410 = scalar_lea.vmem [#allocation3], 48
  %411 = vst.msk [vmem:[%s410] sm:$0xff] %vm288, %v408
  %v412 = vsel %vm281, %v402, %v408
  %v413 = vpack.c.bf16 %v412, %v412
  %v415 = vsel %vm62, %v413, 0
  %417 = vmatprep.subr.bf16.mxu0 0
  %418 = vmatpush1.bf16.msra.mxu0 %v162
  %419 = vmatprep.subr.bf16.mxu0 0
  %420 = vmatpush1.bf16.msra.mxu0 %v163
  %421 = vmatprep.subr.bf16.mxu0 0
  %422 = vmatpush1.bf16.msra.mxu0 0
  %423 = vmatprep.subr.bf16.mxu0 0
  %424 = vmatpush1.bf16.msra.mxu0 0
  %425 = vmatprep.subr.bf16.mxu0 0
  %426 = vmatpush1.bf16.msra.mxu0 0
  %427 = vmatprep.subr.bf16.mxu0 0
  %428 = vmatpush1.bf16.msra.mxu0 0
  %429 = vmatprep.subr.bf16.mxu0 0
  %430 = vmatpush1.bf16.msra.mxu0 0
  %431 = vmatprep.subr.bf16.mxu0 0
  %432 = vmatpush1.bf16.msra.mxu0 0
  %433 = vmatprep.subr.bf16.mxu0 0
  %434 = vmatpush1.bf16.msra.mxu0 0
  %435 = vmatprep.subr.bf16.mxu0 0
  %436 = vmatpush1.bf16.msra.mxu0 0
  %437 = vmatprep.subr.bf16.mxu0 0
  %438 = vmatpush1.bf16.msra.mxu0 0
  %439 = vmatprep.subr.bf16.mxu0 0
  %440 = vmatpush1.bf16.msra.mxu0 0
  %441 = vmatprep.subr.bf16.mxu0 0
  %442 = vmatpush1.bf16.msra.mxu0 0
  %443 = vmatprep.subr.bf16.mxu0 0
  %444 = vmatpush1.bf16.msra.mxu0 0
  %445 = vmatprep.subr.bf16.mxu0 0
  %446 = vmatpush1.bf16.msra.mxu0 0
  %447 = vmatprep.subr.bf16.mxu0 0
  %448 = vmatpush1.bf16.msra.mxu0 0
  %449 = vmatprep.mubr.bf16.mxu0 0
  %450 = vmatmul.mubr.bf16.gmra.mrb[0].mxu0 %v415
  %v451 = vpop.f32.mrb[0].mxu0
  %v452 = vadd.f32 0.0, %v451
  %v453 = vpop.f32.mrb[0].mxu0
  %v454 = vpop.f32.mrb[0].mxu0
  %v455 = vpop.f32.mrb[0].mxu0
  %456 = vdwg.mxu0
  %s457 = scalar_lea.vmem [#allocation2], 16
  %v458 = vld [vmem:[%s457] sm:$0xff]
  %s459 = scalar_lea.vmem [#allocation2], 40
  %v460 = vld [vmem:[%s459] sm:$0xff]
  %v461 = vadd.f32 %v458, %v452
  %v462 = vxor.u32 %v461, 2147483648
  %v463 = vmul.f32 %v462, 1.442695
  %v464 = vpow.pop %v463
  %v465 = vadd.f32 %v464, 1.0
  %v466 = vrcp.pop %v465
  %v467 = vmul.f32 1.0, %v466
  %v468 = vadd.f32 %v452, %v225
  %470 = vrot.lane.b32.xlu0 %v468, 96
  %v471 = vpop.permute.xlu0 %470
  %v473 = vmul.f32 %v467, %v471
  %475 = vrot.lane.b32.xlu0 %v473, 32
  %v476 = vpop.permute.xlu0 %475
  %v478 = vadd.f32 %v458, %v476
  %v479 = vtanh.pop %v478
  %v480 = vsub.f32 1.0, %v467
  %482 = vrot.lane.b32.xlu0 %v479, 112
  %v483 = vpop.permute.xlu0 %482
  %v485 = vmul.f32 %v480, %v483
  %487 = vrot.lane.b32.xlu0 %v412, 16
  %v488 = vpop.permute.xlu0 %487
  %v490 = vmul.f32 %v467, %v488
  %v491 = vadd.f32 %v485, %v490
  %v492 = vadd.f32 %v460, %v452
  %v493 = vxor.u32 %v492, 2147483648
  %v494 = vmul.f32 %v493, 1.442695
  %v495 = vpow.pop %v494
  %v496 = vadd.f32 %v495, 1.0
  %v497 = vrcp.pop %v496
  %v498 = vmul.f32 1.0, %v497
  %v499 = vadd.f32 %v452, %v255
  %501 = vrot.lane.b32.xlu0 %v499, 96
  %v502 = vpop.permute.xlu0 %501
  %v504 = vmul.f32 %v498, %v502
  %506 = vrot.lane.b32.xlu0 %v504, 32
  %v507 = vpop.permute.xlu0 %506
  %v509 = vadd.f32 %v460, %v507
  %v510 = vtanh.pop %v509
  %v511 = vsub.f32 1.0, %v498
  %513 = vrot.lane.b32.xlu0 %v510, 112
  %v514 = vpop.permute.xlu0 %513
  %v516 = vmul.f32 %v511, %v514
  %517 = vrot.lane.b32.xlu0 %v412, 48
  %v518 = vpop.permute.xlu0 %517
  %v520 = vmul.f32 %v498, %v518
  %v521 = vadd.f32 %v516, %v520
  %523 = vrot.lane.b32.xlu0 %v491, 112
  %v524 = vpop.permute.xlu0 %523
  %s526 = scalar_lea.vmem [#allocation3], 16
  %527 = vst.msk [vmem:[%s526] sm:$0xff] %vm281, %v524
  %529 = vrot.lane.b32.xlu0 %v521, 80
  %v530 = vpop.permute.xlu0 %529
  %s532 = scalar_lea.vmem [#allocation3], 40
  %533 = vst.msk [vmem:[%s532] sm:$0xff] %vm288, %v530
  %v534 = vsel %vm281, %v524, %v530
  %v535 = vpack.c.bf16 %v534, %v534
  %v537 = vsel %vm62, %v535, 0
  %539 = vmatprep.subr.bf16.mxu0 0
  %540 = vmatpush1.bf16.msra.mxu0 %v162
  %541 = vmatprep.subr.bf16.mxu0 0
  %542 = vmatpush1.bf16.msra.mxu0 %v163
  %543 = vmatprep.subr.bf16.mxu0 0
  %544 = vmatpush1.bf16.msra.mxu0 0
  %545 = vmatprep.subr.bf16.mxu0 0
  %546 = vmatpush1.bf16.msra.mxu0 0
  %547 = vmatprep.subr.bf16.mxu0 0
  %548 = vmatpush1.bf16.msra.mxu0 0
  %549 = vmatprep.subr.bf16.mxu0 0
  %550 = vmatpush1.bf16.msra.mxu0 0
  %551 = vmatprep.subr.bf16.mxu0 0
  %552 = vmatpush1.bf16.msra.mxu0 0
  %553 = vmatprep.subr.bf16.mxu0 0
  %554 = vmatpush1.bf16.msra.mxu0 0
  %555 = vmatprep.subr.bf16.mxu0 0
  %556 = vmatpush1.bf16.msra.mxu0 0
  %557 = vmatprep.subr.bf16.mxu0 0
  %558 = vmatpush1.bf16.msra.mxu0 0
  %559 = vmatprep.subr.bf16.mxu0 0
  %560 = vmatpush1.bf16.msra.mxu0 0
  %561 = vmatprep.subr.bf16.mxu0 0
  %562 = vmatpush1.bf16.msra.mxu0 0
  %563 = vmatprep.subr.bf16.mxu0 0
  %564 = vmatpush1.bf16.msra.mxu0 0
  %565 = vmatprep.subr.bf16.mxu0 0
  %566 = vmatpush1.bf16.msra.mxu0 0
  %567 = vmatprep.subr.bf16.mxu0 0
  %568 = vmatpush1.bf16.msra.mxu0 0
  %569 = vmatprep.subr.bf16.mxu0 0
  %570 = vmatpush1.bf16.msra.mxu0 0
  %571 = vmatprep.mubr.bf16.mxu0 0
  %572 = vmatmul.mubr.bf16.gmra.mrb[0].mxu0 %v537
  %v573 = vpop.f32.mrb[0].mxu0
  %v574 = vadd.f32 0.0, %v573
  %v575 = vpop.f32.mrb[0].mxu0
  %v576 = vpop.f32.mrb[0].mxu0
  %v577 = vpop.f32.mrb[0].mxu0
  %578 = vdwg.mxu0
  %s579 = scalar_lea.vmem [#allocation2], 24
  %v580 = vld [vmem:[%s579] sm:$0xff]
  %s581 = scalar_lea.vmem [#allocation2], 32
  %v582 = vld [vmem:[%s581] sm:$0xff]
  %v583 = vadd.f32 %v580, %v574
  %v584 = vxor.u32 %v583, 2147483648
  %v585 = vmul.f32 %v584, 1.442695
  %v586 = vpow.pop %v585
  %v587 = vadd.f32 %v586, 1.0
  %v588 = vrcp.pop %v587
  %v589 = vmul.f32 1.0, %v588
  %v590 = vadd.f32 %v574, %v225
  %592 = vrot.lane.b32.xlu0 %v590, 96
  %v593 = vpop.permute.xlu0 %592
  %v595 = vmul.f32 %v589, %v593
  %597 = vrot.lane.b32.xlu0 %v595, 32
  %v598 = vpop.permute.xlu0 %597
  %v600 = vadd.f32 %v580, %v598
  %v601 = vtanh.pop %v600
  %v602 = vsub.f32 1.0, %v589
  %604 = vrot.lane.b32.xlu0 %v601, 112
  %v605 = vpop.permute.xlu0 %604
  %v607 = vmul.f32 %v602, %v605
  %609 = vrot.lane.b32.xlu0 %v534, 16
  %v610 = vpop.permute.xlu0 %609
  %v612 = vmul.f32 %v589, %v610
  %v613 = vadd.f32 %v607, %v612
  %v614 = vadd.f32 %v582, %v574
  %v615 = vxor.u32 %v614, 2147483648
  %v616 = vmul.f32 %v615, 1.442695
  %v617 = vpow.pop %v616
  %v618 = vadd.f32 %v617, 1.0
  %v619 = vrcp.pop %v618
  %v620 = vmul.f32 1.0, %v619
  %v621 = vadd.f32 %v574, %v255
  %623 = vrot.lane.b32.xlu0 %v621, 96
  %v624 = vpop.permute.xlu0 %623
  %v626 = vmul.f32 %v620, %v624
  %628 = vrot.lane.b32.xlu0 %v626, 32
  %v629 = vpop.permute.xlu0 %628
  %v631 = vadd.f32 %v582, %v629
  %v632 = vtanh.pop %v631
  %v633 = vsub.f32 1.0, %v620
  %635 = vrot.lane.b32.xlu0 %v632, 112
  %v636 = vpop.permute.xlu0 %635
  %v638 = vmul.f32 %v633, %v636
  %639 = vrot.lane.b32.xlu0 %v534, 48
  %v640 = vpop.permute.xlu0 %639
  %v642 = vmul.f32 %v620, %v640
  %v643 = vadd.f32 %v638, %v642
  %645 = vrot.lane.b32.xlu0 %v613, 112
  %v646 = vpop.permute.xlu0 %645
  %s648 = scalar_lea.vmem [#allocation3], 24
  %649 = vst.msk [vmem:[%s648] sm:$0xff] %vm281, %v646
  %651 = vrot.lane.b32.xlu0 %v643, 80
  %v652 = vpop.permute.xlu0 %651
  %s654 = scalar_lea.vmem [#allocation3], 32
  %655 = vst.msk [vmem:[%s654] sm:$0xff] %vm288, %v652
  %v656 = vsel %vm281, %v646, %v652
  %v657 = vpack.c.bf16 %v656, %v656
  %v659 = vsel %vm62, %v657, 0
  %661 = vmatprep.subr.bf16.mxu0 0
  %662 = vmatpush1.bf16.msra.mxu0 %v162
  %663 = vmatprep.subr.bf16.mxu0 0
  %664 = vmatpush1.bf16.msra.mxu0 %v163
  %665 = vmatprep.subr.bf16.mxu0 0
  %666 = vmatpush1.bf16.msra.mxu0 0
  %667 = vmatprep.subr.bf16.mxu0 0
  %668 = vmatpush1.bf16.msra.mxu0 0
  %669 = vmatprep.subr.bf16.mxu0 0
  %670 = vmatpush1.bf16.msra.mxu0 0
  %671 = vmatprep.subr.bf16.mxu0 0
  %672 = vmatpush1.bf16.msra.mxu0 0
  %673 = vmatprep.subr.bf16.mxu0 0
  %674 = vmatpush1.bf16.msra.mxu0 0
  %675 = vmatprep.subr.bf16.mxu0 0
  %676 = vmatpush1.bf16.msra.mxu0 0
  %677 = vmatprep.subr.bf16.mxu0 0
  %678 = vmatpush1.bf16.msra.mxu0 0
  %679 = vmatprep.subr.bf16.mxu0 0
  %680 = vmatpush1.bf16.msra.mxu0 0
  %681 = vmatprep.subr.bf16.mxu0 0
  %682 = vmatpush1.bf16.msra.mxu0 0
  %683 = vmatprep.subr.bf16.mxu0 0
  %684 = vmatpush1.bf16.msra.mxu0 0
  %685 = vmatprep.subr.bf16.mxu0 0
  %686 = vmatpush1.bf16.msra.mxu0 0
  %687 = vmatprep.subr.bf16.mxu0 0
  %688 = vmatpush1.bf16.msra.mxu0 0
  %689 = vmatprep.subr.bf16.mxu0 0
  %690 = vmatpush1.bf16.msra.mxu0 0
  %691 = vmatprep.subr.bf16.mxu0 0
  %692 = vmatpush1.bf16.msra.mxu0 0
  %693 = vmatprep.mubr.bf16.mxu0 0
  %694 = vmatmul.mubr.bf16.gmra.mrb[0].mxu0 %v659
  %v695 = vpop.f32.mrb[0].mxu0
  %v696 = vadd.f32 0.0, %v695
  %v697 = vpop.f32.mrb[0].mxu0
  %v698 = vpop.f32.mrb[0].mxu0
  %v699 = vpop.f32.mrb[0].mxu0
  %700 = vdwg.mxu0
  %v701 = vld [vmem:[%s581] sm:$0xff]
  %v702 = vld [vmem:[%s579] sm:$0xff]
  %v703 = vadd.f32 %v701, %v696
  %v704 = vxor.u32 %v703, 2147483648
  %v705 = vmul.f32 %v704, 1.442695
  %v706 = vpow.pop %v705
  %v707 = vadd.f32 %v706, 1.0
  %v708 = vrcp.pop %v707
  %v709 = vmul.f32 1.0, %v708
  %v710 = vadd.f32 %v696, %v225
  %712 = vrot.lane.b32.xlu0 %v710, 96
  %v713 = vpop.permute.xlu0 %712
  %v715 = vmul.f32 %v709, %v713
  %717 = vrot.lane.b32.xlu0 %v715, 32
  %v718 = vpop.permute.xlu0 %717
  %v720 = vadd.f32 %v701, %v718
  %v721 = vtanh.pop %v720
  %v722 = vsub.f32 1.0, %v709
  %724 = vrot.lane.b32.xlu0 %v721, 112
  %v725 = vpop.permute.xlu0 %724
  %v727 = vmul.f32 %v722, %v725
  %729 = vrot.lane.b32.xlu0 %v656, 16
  %v730 = vpop.permute.xlu0 %729
  %v732 = vmul.f32 %v709, %v730
  %v733 = vadd.f32 %v727, %v732
  %v734 = vadd.f32 %v702, %v696
  %v735 = vxor.u32 %v734, 2147483648
  %v736 = vmul.f32 %v735, 1.442695
  %v737 = vpow.pop %v736
  %v738 = vadd.f32 %v737, 1.0
  %v739 = vrcp.pop %v738
  %v740 = vmul.f32 1.0, %v739
  %v741 = vadd.f32 %v696, %v255
  %743 = vrot.lane.b32.xlu0 %v741, 96
  %v744 = vpop.permute.xlu0 %743
  %v746 = vmul.f32 %v740, %v744
  %748 = vrot.lane.b32.xlu0 %v746, 32
  %v749 = vpop.permute.xlu0 %748
  %v751 = vadd.f32 %v702, %v749
  %v752 = vtanh.pop %v751
  %v753 = vsub.f32 1.0, %v740
  %755 = vrot.lane.b32.xlu0 %v752, 112
  %v756 = vpop.permute.xlu0 %755
  %v758 = vmul.f32 %v753, %v756
  %759 = vrot.lane.b32.xlu0 %v656, 48
  %v760 = vpop.permute.xlu0 %759
  %v762 = vmul.f32 %v740, %v760
  %v763 = vadd.f32 %v758, %v762
  %765 = vrot.lane.b32.xlu0 %v733, 112
  %v766 = vpop.permute.xlu0 %765
  %768 = vst.msk [vmem:[%s654] sm:$0xff] %vm281, %v766
  %770 = vrot.lane.b32.xlu0 %v763, 80
  %v771 = vpop.permute.xlu0 %770
  %773 = vst.msk [vmem:[%s648] sm:$0xff] %vm288, %v771
  %v774 = vsel %vm281, %v766, %v771
  %v775 = vpack.c.bf16 %v774, %v774
  %v777 = vsel %vm62, %v775, 0
  %779 = vmatprep.subr.bf16.mxu0 0
  %780 = vmatpush1.bf16.msra.mxu0 %v162
  %781 = vmatprep.subr.bf16.mxu0 0
  %782 = vmatpush1.bf16.msra.mxu0 %v163
  %783 = vmatprep.subr.bf16.mxu0 0
  %784 = vmatpush1.bf16.msra.mxu0 0
  %785 = vmatprep.subr.bf16.mxu0 0
  %786 = vmatpush1.bf16.msra.mxu0 0
  %787 = vmatprep.subr.bf16.mxu0 0
  %788 = vmatpush1.bf16.msra.mxu0 0
  %789 = vmatprep.subr.bf16.mxu0 0
  %790 = vmatpush1.bf16.msra.mxu0 0
  %791 = vmatprep.subr.bf16.mxu0 0
  %792 = vmatpush1.bf16.msra.mxu0 0
  %793 = vmatprep.subr.bf16.mxu0 0
  %794 = vmatpush1.bf16.msra.mxu0 0
  %795 = vmatprep.subr.bf16.mxu0 0
  %796 = vmatpush1.bf16.msra.mxu0 0
  %797 = vmatprep.subr.bf16.mxu0 0
  %798 = vmatpush1.bf16.msra.mxu0 0
  %799 = vmatprep.subr.bf16.mxu0 0
  %800 = vmatpush1.bf16.msra.mxu0 0
  %801 = vmatprep.subr.bf16.mxu0 0
  %802 = vmatpush1.bf16.msra.mxu0 0
  %803 = vmatprep.subr.bf16.mxu0 0
  %804 = vmatpush1.bf16.msra.mxu0 0
  %805 = vmatprep.subr.bf16.mxu0 0
  %806 = vmatpush1.bf16.msra.mxu0 0
  %807 = vmatprep.subr.bf16.mxu0 0
  %808 = vmatpush1.bf16.msra.mxu0 0
  %809 = vmatprep.subr.bf16.mxu0 0
  %810 = vmatpush1.bf16.msra.mxu0 0
  %811 = vmatprep.mubr.bf16.mxu0 0
  %812 = vmatmul.mubr.bf16.gmra.mrb[0].mxu0 %v777
  %v813 = vpop.f32.mrb[0].mxu0
  %v814 = vadd.f32 0.0, %v813
  %v815 = vpop.f32.mrb[0].mxu0
  %v816 = vpop.f32.mrb[0].mxu0
  %v817 = vpop.f32.mrb[0].mxu0
  %818 = vdwg.mxu0
  %v819 = vld [vmem:[%s459] sm:$0xff]
  %v820 = vld [vmem:[%s457] sm:$0xff]
  %v821 = vadd.f32 %v819, %v814
  %v822 = vxor.u32 %v821, 2147483648
  %v823 = vmul.f32 %v822, 1.442695
  %v824 = vpow.pop %v823
  %v825 = vadd.f32 %v824, 1.0
  %v826 = vrcp.pop %v825
  %v827 = vmul.f32 1.0, %v826
  %v828 = vadd.f32 %v814, %v225
  %830 = vrot.lane.b32.xlu0 %v828, 96
  %v831 = vpop.permute.xlu0 %830
  %v833 = vmul.f32 %v827, %v831
  %835 = vrot.lane.b32.xlu0 %v833, 32
  %v836 = vpop.permute.xlu0 %835
  %v838 = vadd.f32 %v819, %v836
  %v839 = vtanh.pop %v838
  %v840 = vsub.f32 1.0, %v827
  %842 = vrot.lane.b32.xlu0 %v839, 112
  %v843 = vpop.permute.xlu0 %842
  %v845 = vmul.f32 %v840, %v843
  %847 = vrot.lane.b32.xlu0 %v774, 16
  %v848 = vpop.permute.xlu0 %847
  %v850 = vmul.f32 %v827, %v848
  %v851 = vadd.f32 %v845, %v850
  %v852 = vadd.f32 %v820, %v814
  %v853 = vxor.u32 %v852, 2147483648
  %v854 = vmul.f32 %v853, 1.442695
  %v855 = vpow.pop %v854
  %v856 = vadd.f32 %v855, 1.0
  %v857 = vrcp.pop %v856
  %v858 = vmul.f32 1.0, %v857
  %v859 = vadd.f32 %v814, %v255
  %861 = vrot.lane.b32.xlu0 %v859, 96
  %v862 = vpop.permute.xlu0 %861
  %v864 = vmul.f32 %v858, %v862
  %866 = vrot.lane.b32.xlu0 %v864, 32
  %v867 = vpop.permute.xlu0 %866
  %v869 = vadd.f32 %v820, %v867
  %v870 = vtanh.pop %v869
  %v871 = vsub.f32 1.0, %v858
  %873 = vrot.lane.b32.xlu0 %v870, 112
  %v874 = vpop.permute.xlu0 %873
  %v876 = vmul.f32 %v871, %v874
  %877 = vrot.lane.b32.xlu0 %v774, 48
  %v878 = vpop.permute.xlu0 %877
  %v880 = vmul.f32 %v858, %v878
  %v881 = vadd.f32 %v876, %v880
  %883 = vrot.lane.b32.xlu0 %v851, 112
  %v884 = vpop.permute.xlu0 %883
  %886 = vst.msk [vmem:[%s532] sm:$0xff] %vm281, %v884
  %888 = vrot.lane.b32.xlu0 %v881, 80
  %v889 = vpop.permute.xlu0 %888
  %891 = vst.msk [vmem:[%s526] sm:$0xff] %vm288, %v889
  %v892 = vsel %vm281, %v884, %v889
  %v893 = vpack.c.bf16 %v892, %v892
  %v895 = vsel %vm62, %v893, 0
  %897 = vmatprep.subr.bf16.mxu0 0
  %898 = vmatpush1.bf16.msra.mxu0 %v162
  %899 = vmatprep.subr.bf16.mxu0 0
  %900 = vmatpush1.bf16.msra.mxu0 %v163
  %901 = vmatprep.subr.bf16.mxu0 0
  %902 = vmatpush1.bf16.msra.mxu0 0
  %903 = vmatprep.subr.bf16.mxu0 0
  %904 = vmatpush1.bf16.msra.mxu0 0
  %905 = vmatprep.subr.bf16.mxu0 0
  %906 = vmatpush1.bf16.msra.mxu0 0
  %907 = vmatprep.subr.bf16.mxu0 0
  %908 = vmatpush1.bf16.msra.mxu0 0
  %909 = vmatprep.subr.bf16.mxu0 0
  %910 = vmatpush1.bf16.msra.mxu0 0
  %911 = vmatprep.subr.bf16.mxu0 0
  %912 = vmatpush1.bf16.msra.mxu0 0
  %913 = vmatprep.subr.bf16.mxu0 0
  %914 = vmatpush1.bf16.msra.mxu0 0
  %915 = vmatprep.subr.bf16.mxu0 0
  %916 = vmatpush1.bf16.msra.mxu0 0
  %917 = vmatprep.subr.bf16.mxu0 0
  %918 = vmatpush1.bf16.msra.mxu0 0
  %919 = vmatprep.subr.bf16.mxu0 0
  %920 = vmatpush1.bf16.msra.mxu0 0
  %921 = vmatprep.subr.bf16.mxu0 0
  %922 = vmatpush1.bf16.msra.mxu0 0
  %923 = vmatprep.subr.bf16.mxu0 0
  %924 = vmatpush1.bf16.msra.mxu0 0
  %925 = vmatprep.subr.bf16.mxu0 0
  %926 = vmatpush1.bf16.msra.mxu0 0
  %927 = vmatprep.subr.bf16.mxu0 0
  %928 = vmatpush1.bf16.msra.mxu0 0
  %929 = vmatprep.mubr.bf16.mxu0 0
  %930 = vmatmul.mubr.bf16.gmra.mrb[0].mxu0 %v895
  %v931 = vpop.f32.mrb[0].mxu0
  %v932 = vadd.f32 0.0, %v931
  %v933 = vpop.f32.mrb[0].mxu0
  %v934 = vpop.f32.mrb[0].mxu0
  %v935 = vpop.f32.mrb[0].mxu0
  %936 = vdwg.mxu0
  %v937 = vld [vmem:[%s337] sm:$0xff]
  %v938 = vld [vmem:[%s335] sm:$0xff]
  %v939 = vadd.f32 %v937, %v932
  %v940 = vxor.u32 %v939, 2147483648
  %v941 = vmul.f32 %v940, 1.442695
  %v942 = vpow.pop %v941
  %v943 = vadd.f32 %v942, 1.0
  %v944 = vrcp.pop %v943
  %v945 = vmul.f32 1.0, %v944
  %v946 = vadd.f32 %v932, %v225
  %948 = vrot.lane.b32.xlu0 %v946, 96
  %v949 = vpop.permute.xlu0 %948
  %v951 = vmul.f32 %v945, %v949
  %953 = vrot.lane.b32.xlu0 %v951, 32
  %v954 = vpop.permute.xlu0 %953
  %v956 = vadd.f32 %v937, %v954
  %v957 = vtanh.pop %v956
  %v958 = vsub.f32 1.0, %v945
  %960 = vrot.lane.b32.xlu0 %v957, 112
  %v961 = vpop.permute.xlu0 %960
  %v963 = vmul.f32 %v958, %v961
  %965 = vrot.lane.b32.xlu0 %v892, 16
  %v966 = vpop.permute.xlu0 %965
  %v968 = vmul.f32 %v945, %v966
  %v969 = vadd.f32 %v963, %v968
  %v970 = vadd.f32 %v938, %v932
  %v971 = vxor.u32 %v970, 2147483648
  %v972 = vmul.f32 %v971, 1.442695
  %v973 = vpow.pop %v972
  %v974 = vadd.f32 %v973, 1.0
  %v975 = vrcp.pop %v974
  %v976 = vmul.f32 1.0, %v975
  %v977 = vadd.f32 %v932, %v255
  %979 = vrot.lane.b32.xlu0 %v977, 96
  %v980 = vpop.permute.xlu0 %979
  %v982 = vmul.f32 %v976, %v980
  %984 = vrot.lane.b32.xlu0 %v982, 32
  %v985 = vpop.permute.xlu0 %984
  %v987 = vadd.f32 %v938, %v985
  %v988 = vtanh.pop %v987
  %v989 = vsub.f32 1.0, %v976
  %991 = vrot.lane.b32.xlu0 %v988, 112
  %v992 = vpop.permute.xlu0 %991
  %v994 = vmul.f32 %v989, %v992
  %995 = vrot.lane.b32.xlu0 %v892, 48
  %v996 = vpop.permute.xlu0 %995
  %v998 = vmul.f32 %v976, %v996
  %v999 = vadd.f32 %v994, %v998
  %1001 = vrot.lane.b32.xlu0 %v969, 112
  %v1002 = vpop.permute.xlu0 %1001
  %1004 = vst.msk [vmem:[%s410] sm:$0xff] %vm281, %v1002
  %1006 = vrot.lane.b32.xlu0 %v999, 80
  %v1007 = vpop.permute.xlu0 %1006
  %1009 = vst.msk [vmem:[%s404] sm:$0xff] %vm288, %v1007
  %v1010 = vsel %vm281, %v1002, %v1007
  %v1011 = vpack.c.bf16 %v1010, %v1010
  %v1013 = vsel %vm62, %v1011, 0
  %1015 = vmatprep.subr.bf16.mxu0 0
  %1016 = vmatpush1.bf16.msra.mxu0 %v162
  %1017 = vmatprep.subr.bf16.mxu0 0
  %1018 = vmatpush1.bf16.msra.mxu0 %v163
  %1019 = vmatprep.subr.bf16.mxu0 0
  %1020 = vmatpush1.bf16.msra.mxu0 0
  %1021 = vmatprep.subr.bf16.mxu0 0
  %1022 = vmatpush1.bf16.msra.mxu0 0
  %1023 = vmatprep.subr.bf16.mxu0 0
  %1024 = vmatpush1.bf16.msra.mxu0 0
  %1025 = vmatprep.subr.bf16.mxu0 0
  %1026 = vmatpush1.bf16.msra.mxu0 0
  %1027 = vmatprep.subr.bf16.mxu0 0
  %1028 = vmatpush1.bf16.msra.mxu0 0
  %1029 = vmatprep.subr.bf16.mxu0 0
  %1030 = vmatpush1.bf16.msra.mxu0 0
  %1031 = vmatprep.subr.bf16.mxu0 0
  %1032 = vmatpush1.bf16.msra.mxu0 0
  %1033 = vmatprep.subr.bf16.mxu0 0
  %1034 = vmatpush1.bf16.msra.mxu0 0
  %1035 = vmatprep.subr.bf16.mxu0 0
  %1036 = vmatpush1.bf16.msra.mxu0 0
  %1037 = vmatprep.subr.bf16.mxu0 0
  %1038 = vmatpush1.bf16.msra.mxu0 0
  %1039 = vmatprep.subr.bf16.mxu0 0
  %1040 = vmatpush1.bf16.msra.mxu0 0
  %1041 = vmatprep.subr.bf16.mxu0 0
  %1042 = vmatpush1.bf16.msra.mxu0 0
  %1043 = vmatprep.subr.bf16.mxu0 0
  %1044 = vmatpush1.bf16.msra.mxu0 0
  %1045 = vmatprep.subr.bf16.mxu0 0
  %1046 = vmatpush1.bf16.msra.mxu0 0
  %1047 = vmatprep.mubr.bf16.mxu0 0
  %1048 = vmatmul.mubr.bf16.gmra.mrb[0].mxu0 %v1013
  %v1049 = vpop.f32.mrb[0].mxu0
  %v1050 = vadd.f32 0.0, %v1049
  %v1051 = vpop.f32.mrb[0].mxu0
  %v1052 = vpop.f32.mrb[0].mxu0
  %v1053 = vpop.f32.mrb[0].mxu0
  %1054 = vdwg.mxu0
  %v1055 = vld [vmem:[%s210] sm:$0xff]
  %v1056 = vld [vmem:[#allocation2] sm:$0xff]
  %v1057 = vadd.f32 %v1055, %v1050
  %v1058 = vxor.u32 %v1057, 2147483648
  %v1059 = vmul.f32 %v1058, 1.442695
  %v1060 = vpow.pop %v1059
  %v1061 = vadd.f32 %v1060, 1.0
  %v1062 = vrcp.pop %v1061
  %v1063 = vmul.f32 1.0, %v1062
  %v1064 = vadd.f32 %v1050, %v225
  %1066 = vrot.lane.b32.xlu0 %v1064, 96
  %v1067 = vpop.permute.xlu0 %1066
  %v1069 = vmul.f32 %v1063, %v1067
  %1071 = vrot.lane.b32.xlu0 %v1069, 32
  %v1072 = vpop.permute.xlu0 %1071
  %v1074 = vadd.f32 %v1055, %v1072
  %v1075 = vtanh.pop %v1074
  %v1076 = vsub.f32 1.0, %v1063
  %1078 = vrot.lane.b32.xlu0 %v1075, 112
  %v1079 = vpop.permute.xlu0 %1078
  %v1081 = vmul.f32 %v1076, %v1079
  %1083 = vrot.lane.b32.xlu0 %v1010, 16
  %v1084 = vpop.permute.xlu0 %1083
  %v1086 = vmul.f32 %v1063, %v1084
  %v1087 = vadd.f32 %v1081, %v1086
  %v1088 = vadd.f32 %v1056, %v1050
  %v1089 = vxor.u32 %v1088, 2147483648
  %v1090 = vmul.f32 %v1089, 1.442695
  %v1091 = vpow.pop %v1090
  %v1092 = vadd.f32 %v1091, 1.0
  %v1093 = vrcp.pop %v1092
  %v1094 = vmul.f32 1.0, %v1093
  %v1095 = vadd.f32 %v1050, %v255
  %1097 = vrot.lane.b32.xlu0 %v1095, 96
  %v1098 = vpop.permute.xlu0 %1097
  %v1100 = vmul.f32 %v1094, %v1098
  %1102 = vrot.lane.b32.xlu0 %v1100, 32
  %v1103 = vpop.permute.xlu0 %1102
  %v1105 = vadd.f32 %v1056, %v1103
  %v1106 = vtanh.pop %v1105
  %v1107 = vsub.f32 1.0, %v1094
  %1109 = vrot.lane.b32.xlu0 %v1106, 112
  %v1110 = vpop.permute.xlu0 %1109
  %v1112 = vmul.f32 %v1107, %v1110
  %1113 = vrot.lane.b32.xlu0 %v1010, 48
  %v1114 = vpop.permute.xlu0 %1113
  %v1116 = vmul.f32 %v1094, %v1114
  %v1117 = vadd.f32 %v1112, %v1116
  %1119 = vrot.lane.b32.xlu0 %v1087, 112
  %v1120 = vpop.permute.xlu0 %1119
  %1122 = vst.msk [vmem:[%s287] sm:$0xff] %vm281, %v1120
  %1124 = vrot.lane.b32.xlu0 %v1117, 80
  %v1125 = vpop.permute.xlu0 %1124
  %1127 = vst.msk [vmem:[#allocation3] sm:$0xff] %vm288, %v1125
  %v1128 = vld [vmem:[#allocation3] sm:$0xff]
  %v1129 = vld [vmem:[#allocation3 + $0x8] sm:$0xff]
  %v1130 = vld [vmem:[#allocation3 + $0x10] sm:$0xff]
  %v1131 = vld [vmem:[#allocation3 + $0x18] sm:$0xff]
  %v1132 = vld [vmem:[#allocation3 + $0x20] sm:$0xff]
  %v1133 = vld [vmem:[#allocation3 + $0x28] sm:$0xff]
  %v1134 = vld [vmem:[#allocation3 + $0x30] sm:$0xff]
  %v1135 = vld [vmem:[#allocation3 + $0x38] sm:$0xff]
  %v1136 = vpack.c.bf16 %v1129, %v1128
  %v1137 = vpack.c.bf16 %v1131, %v1130
  %v1138 = vpack.c.bf16 %v1133, %v1132
  %v1139 = vpack.c.bf16 %v1135, %v1134
  %s1140 = scalar_lea.vmem %s1, 16
  %v1141 = vld [vmem:[%s1140] sm:$0xf]
  %v1142 = vld [vmem:[%s1140 + $0x4] sm:$0xf]
  %v1143 = vld [vmem:[%s1140 + $0x8] sm:$0xf]
  %v1144 = vld [vmem:[%s1140 + $0xc] sm:$0xf]
  %s1145 = scalar_lea.vmem %s3, 1
  %v1146 = vld [vmem:[%s1145] sm:$0x1]
  %v1148 = vlaneseq
  %v1149 = vshrl.u32 %v1148, 7
  %v1150 = vsub.s32 0, %v1149
  %v1151 = vrot.slane %v1146, %v1150
  %v1157 = vunpack.c.l.b16 %v1141
  %v1158 = vunpack.c.l.b16 %v1142
  %v1159 = vunpack.c.l.b16 %v1143
  %v1160 = vunpack.c.l.b16 %v1144
  %v1161 = vpack.c.b16 %v1158, %v1157
  %v1162 = vpack.c.b16 %v1160, %v1159
  %v1166 = vsel %vm62, %v1136, 0
  %v1169 = vsel %vm62, %v1137, 0
  %v1172 = vsel %vm62, %v1138, 0
  %v1175 = vsel %vm62, %v1139, 0
  %1177 = vmatprep.subr.bf16.mxu0 0
  %1178 = vmatpush1.bf16.msra.mxu0 %v1161
  %1179 = vmatprep.subr.bf16.mxu0 0
  %1180 = vmatpush1.bf16.msra.mxu0 %v1162
  %1181 = vmatprep.subr.bf16.mxu0 0
  %1182 = vmatpush1.bf16.msra.mxu0 0
  %1183 = vmatprep.subr.bf16.mxu0 0
  %1184 = vmatpush1.bf16.msra.mxu0 0
  %1185 = vmatprep.subr.bf16.mxu0 0
  %1186 = vmatpush1.bf16.msra.mxu0 0
  %1187 = vmatprep.subr.bf16.mxu0 0
  %1188 = vmatpush1.bf16.msra.mxu0 0
  %1189 = vmatprep.subr.bf16.mxu0 0
  %1190 = vmatpush1.bf16.msra.mxu0 0
  %1191 = vmatprep.subr.bf16.mxu0 0
  %1192 = vmatpush1.bf16.msra.mxu0 0
  %1193 = vmatprep.subr.bf16.mxu0 0
  %1194 = vmatpush1.bf16.msra.mxu0 0
  %1195 = vmatprep.subr.bf16.mxu0 0
  %1196 = vmatpush1.bf16.msra.mxu0 0
  %1197 = vmatprep.subr.bf16.mxu0 0
  %1198 = vmatpush1.bf16.msra.mxu0 0
  %1199 = vmatprep.subr.bf16.mxu0 0
  %1200 = vmatpush1.bf16.msra.mxu0 0
  %1201 = vmatprep.subr.bf16.mxu0 0
  %1202 = vmatpush1.bf16.msra.mxu0 0
  %1203 = vmatprep.subr.bf16.mxu0 0
  %1204 = vmatpush1.bf16.msra.mxu0 0
  %1205 = vmatprep.subr.bf16.mxu0 0
  %1206 = vmatpush1.bf16.msra.mxu0 0
  %1207 = vmatprep.subr.bf16.mxu0 0
  %1208 = vmatpush1.bf16.msra.mxu0 0
  %1209 = vmatprep.mubr.bf16.mxu0 0
  %1210 = vmatmul.mubr.bf16.gmra.mrb[0].mxu0 %v1166
  %v1211 = vpop.f32.mrb[0].mxu0
  %v1212 = vadd.f32 %v1151, %v1211
  %v1213 = vpop.f32.mrb[0].mxu0
  %v1214 = vpop.f32.mrb[0].mxu0
  %v1215 = vadd.f32 %v1151, %v1214
  %v1216 = vpop.f32.mrb[0].mxu0
  %1217 = vmatprep.mubr.bf16.mxu0 0
  %1218 = vmatmul.mubr.bf16.gmra.mrb[0].mxu0 %v1169
  %v1219 = vpop.f32.mrb[0].mxu0
  %v1220 = vadd.f32 %v1151, %v1219
  %v1221 = vpop.f32.mrb[0].mxu0
  %v1222 = vpop.f32.mrb[0].mxu0
  %v1223 = vadd.f32 %v1151, %v1222
  %v1224 = vpop.f32.mrb[0].mxu0
  %1225 = vmatprep.mubr.bf16.mxu0 0
  %1226 = vmatmul.mubr.bf16.gmra.mrb[0].mxu0 %v1172
  %v1227 = vpop.f32.mrb[0].mxu0
  %v1228 = vadd.f32 %v1151, %v1227
  %v1229 = vpop.f32.mrb[0].mxu0
  %v1230 = vpop.f32.mrb[0].mxu0
  %v1231 = vadd.f32 %v1151, %v1230
  %v1232 = vpop.f32.mrb[0].mxu0
  %1233 = vmatprep.mubr.bf16.mxu0 0
  %1234 = vmatmul.mubr.bf16.gmra.mrb[0].mxu0 %v1175
  %v1235 = vpop.f32.mrb[0].mxu0
  %v1236 = vadd.f32 %v1151, %v1235
  %v1237 = vpop.f32.mrb[0].mxu0
  %v1238 = vpop.f32.mrb[0].mxu0
  %v1239 = vadd.f32 %v1151, %v1238
  %v1240 = vpop.f32.mrb[0].mxu0
  %1241 = vdwg.mxu0
  %1242 = vst.msk [vmem:[#allocation2] sm:$0xff] %vm140, %v1212
  %1243 = vst.msk [vmem:[#allocation2 + $0x8] sm:$0xff] %vm140, %v1215
  %1244 = vst.msk [vmem:[#allocation2 + $0x10] sm:$0xff] %vm140, %v1220
  %1245 = vst.msk [vmem:[#allocation2 + $0x18] sm:$0xff] %vm140, %v1223
  %1246 = vst.msk [vmem:[#allocation2 + $0x20] sm:$0xff] %vm140, %v1228
  %1247 = vst.msk [vmem:[#allocation2 + $0x28] sm:$0xff] %vm140, %v1231
  %1248 = vst.msk [vmem:[#allocation2 + $0x30] sm:$0xff] %vm140, %v1236
  %1249 = vst.msk [vmem:[#allocation2 + $0x38] sm:$0xff] %vm140, %v1239
  %s1250 = scalar_lea.vmem %s2, 16
  %v1251 = vld [vmem:[%s1250] sm:$0xf]
  %v1252 = vld [vmem:[%s1250 + $0x4] sm:$0xf]
  %v1253 = vld [vmem:[%s1250 + $0x8] sm:$0xf]
  %v1254 = vld [vmem:[%s1250 + $0xc] sm:$0xf]
  %s1255 = scalar_lea.vmem %s4, 1
  %v1256 = vld [vmem:[%s1255] sm:$0x1]
  %v1261 = vunpack.c.l.b16 %v1251
  %v1262 = vunpack.c.l.b16 %v1252
  %v1263 = vunpack.c.l.b16 %v1253
  %v1264 = vunpack.c.l.b16 %v1254
  %v1265 = vpack.c.b16 %v1262, %v1261
  %v1266 = vpack.c.b16 %v1264, %v1263
  %1269 = vmatprep.subr.bf16.mxu0 0
  %1270 = vmatpush1.bf16.msra.mxu0 %v1265
  %1271 = vmatprep.subr.bf16.mxu0 0
  %1272 = vmatpush1.bf16.msra.mxu0 %v1266
  %1273 = vmatprep.subr.bf16.mxu0 0
  %1274 = vmatpush1.bf16.msra.mxu0 0
  %1275 = vmatprep.subr.bf16.mxu0 0
  %1276 = vmatpush1.bf16.msra.mxu0 0
  %1277 = vmatprep.subr.bf16.mxu0 0
  %1278 = vmatpush1.bf16.msra.mxu0 0
  %1279 = vmatprep.subr.bf16.mxu0 0
  %1280 = vmatpush1.bf16.msra.mxu0 0
  %1281 = vmatprep.subr.bf16.mxu0 0
  %1282 = vmatpush1.bf16.msra.mxu0 0
  %1283 = vmatprep.subr.bf16.mxu0 0
  %1284 = vmatpush1.bf16.msra.mxu0 0
  %1285 = vmatprep.subr.bf16.mxu0 0
  %1286 = vmatpush1.bf16.msra.mxu0 0
  %1287 = vmatprep.subr.bf16.mxu0 0
  %1288 = vmatpush1.bf16.msra.mxu0 0
  %1289 = vmatprep.subr.bf16.mxu0 0
  %1290 = vmatpush1.bf16.msra.mxu0 0
  %1291 = vmatprep.subr.bf16.mxu0 0
  %1292 = vmatpush1.bf16.msra.mxu0 0
  %1293 = vmatprep.subr.bf16.mxu0 0
  %1294 = vmatpush1.bf16.msra.mxu0 0
  %1295 = vmatprep.subr.bf16.mxu0 0
  %1296 = vmatpush1.bf16.msra.mxu0 0
  %1297 = vmatprep.subr.bf16.mxu0 0
  %1298 = vmatpush1.bf16.msra.mxu0 0
  %1299 = vmatprep.subr.bf16.mxu0 0
  %1300 = vmatpush1.bf16.msra.mxu0 0
  %1301 = vmatprep.mubr.bf16.mxu0 0
  %1302 = vmatmul.mubr.bf16.gmra.mrb[0].mxu0 %v167
  %v1303 = vpop.f32.mrb[0].mxu0
  %v1304 = vadd.f32 0.0, %v1303
  %v1305 = vpop.f32.mrb[0].mxu0
  %v1306 = vpop.f32.mrb[0].mxu0
  %v1307 = vpop.f32.mrb[0].mxu0
  %1308 = vdwg.mxu0
  %v1309 = vld [vmem:[#allocation2] sm:$0xff]
  %v1310 = vld [vmem:[%s210] sm:$0xff]
  %v1311 = vadd.f32 %v1309, %v1304
  %v1312 = vxor.u32 %v1311, 2147483648
  %v1313 = vmul.f32 %v1312, 1.442695
  %v1314 = vpow.pop %v1313
  %v1315 = vadd.f32 %v1314, 1.0
  %v1316 = vrcp.pop %v1315
  %v1317 = vmul.f32 1.0, %v1316
  %v1319 = vlaneseq
  %v1320 = vshrl.u32 %v1319, 7
  %v1321 = vsub.s32 0, %v1320
  %v1322 = vrot.slane %v1256, %v1321
  %1323 = vrot.lane.b32.xlu0 %v1322, 32
  %v1324 = vpop.permute.xlu0 %1323
  %v1326 = vadd.f32 %v1304, %v1324
  %1328 = vrot.lane.b32.xlu0 %v1326, 96
  %v1329 = vpop.permute.xlu0 %1328
  %v1331 = vmul.f32 %v1317, %v1329
  %1333 = vrot.lane.b32.xlu0 %v1331, 32
  %v1334 = vpop.permute.xlu0 %1333
  %v1336 = vadd.f32 %v1309, %v1334
  %v1337 = vtanh.pop %v1336
  %v1338 = vsub.f32 1.0, %v1317
  %1340 = vrot.lane.b32.xlu0 %v1337, 112
  %v1341 = vpop.permute.xlu0 %1340
  %v1343 = vmul.f32 %v1338, %v1341
  %v1344 = vmul.f32 %v1317, 0.0
  %v1345 = vadd.f32 %v1343, %v1344
  %v1346 = vadd.f32 %v1310, %v1304
  %v1347 = vxor.u32 %v1346, 2147483648
  %v1348 = vmul.f32 %v1347, 1.442695
  %v1349 = vpow.pop %v1348
  %v1350 = vadd.f32 %v1349, 1.0
  %v1351 = vrcp.pop %v1350
  %v1352 = vmul.f32 1.0, %v1351
  %1353 = vrot.lane.b32.xlu0 %v1322, 64
  %v1354 = vpop.permute.xlu0 %1353
  %v1356 = vadd.f32 %v1304, %v1354
  %1358 = vrot.lane.b32.xlu0 %v1356, 96
  %v1359 = vpop.permute.xlu0 %1358
  %v1361 = vmul.f32 %v1352, %v1359
  %1363 = vrot.lane.b32.xlu0 %v1361, 32
  %v1364 = vpop.permute.xlu0 %1363
  %v1366 = vadd.f32 %v1310, %v1364
  %v1367 = vtanh.pop %v1366
  %v1368 = vsub.f32 1.0, %v1352
  %1370 = vrot.lane.b32.xlu0 %v1367, 112
  %v1371 = vpop.permute.xlu0 %1370
  %v1373 = vmul.f32 %v1368, %v1371
  %v1374 = vmul.f32 %v1352, 0.0
  %v1375 = vadd.f32 %v1373, %v1374
  %1377 = vrot.lane.b32.xlu0 %v1345, 112
  %v1378 = vpop.permute.xlu0 %1377
  %1380 = vst.msk [vmem:[#allocation3] sm:$0xff] %vm281, %v1378
  %1382 = vrot.lane.b32.xlu0 %v1375, 80
  %v1383 = vpop.permute.xlu0 %1382
  %1385 = vst.msk [vmem:[%s287] sm:$0xff] %vm288, %v1383
  %v1386 = vsel %vm281, %v1378, %v1383
  %v1387 = vpack.c.bf16 %v1386, %v1386
  %v1389 = vsel %vm62, %v1387, 0
  %1391 = vmatprep.subr.bf16.mxu0 0
  %1392 = vmatpush1.bf16.msra.mxu0 %v1265
  %1393 = vmatprep.subr.bf16.mxu0 0
  %1394 = vmatpush1.bf16.msra.mxu0 %v1266
  %1395 = vmatprep.subr.bf16.mxu0 0
  %1396 = vmatpush1.bf16.msra.mxu0 0
  %1397 = vmatprep.subr.bf16.mxu0 0
  %1398 = vmatpush1.bf16.msra.mxu0 0
  %1399 = vmatprep.subr.bf16.mxu0 0
  %1400 = vmatpush1.bf16.msra.mxu0 0
  %1401 = vmatprep.subr.bf16.mxu0 0
  %1402 = vmatpush1.bf16.msra.mxu0 0
  %1403 = vmatprep.subr.bf16.mxu0 0
  %1404 = vmatpush1.bf16.msra.mxu0 0
  %1405 = vmatprep.subr.bf16.mxu0 0
  %1406 = vmatpush1.bf16.msra.mxu0 0
  %1407 = vmatprep.subr.bf16.mxu0 0
  %1408 = vmatpush1.bf16.msra.mxu0 0
  %1409 = vmatprep.subr.bf16.mxu0 0
  %1410 = vmatpush1.bf16.msra.mxu0 0
  %1411 = vmatprep.subr.bf16.mxu0 0
  %1412 = vmatpush1.bf16.msra.mxu0 0
  %1413 = vmatprep.subr.bf16.mxu0 0
  %1414 = vmatpush1.bf16.msra.mxu0 0
  %1415 = vmatprep.subr.bf16.mxu0 0
  %1416 = vmatpush1.bf16.msra.mxu0 0
  %1417 = vmatprep.subr.bf16.mxu0 0
  %1418 = vmatpush1.bf16.msra.mxu0 0
  %1419 = vmatprep.subr.bf16.mxu0 0
  %1420 = vmatpush1.bf16.msra.mxu0 0
  %1421 = vmatprep.subr.bf16.mxu0 0
  %1422 = vmatpush1.bf16.msra.mxu0 0
  %1423 = vmatprep.mubr.bf16.mxu0 0
  %1424 = vmatmul.mubr.bf16.gmra.mrb[0].mxu0 %v1389
  %v1425 = vpop.f32.mrb[0].mxu0
  %v1426 = vadd.f32 0.0, %v1425
  %v1427 = vpop.f32.mrb[0].mxu0
  %v1428 = vpop.f32.mrb[0].mxu0
  %v1429 = vpop.f32.mrb[0].mxu0
  %1430 = vdwg.mxu0
  %v1431 = vld [vmem:[%s335] sm:$0xff]
  %v1432 = vld [vmem:[%s337] sm:$0xff]
  %v1433 = vadd.f32 %v1431, %v1426
  %v1434 = vxor.u32 %v1433, 2147483648
  %v1435 = vmul.f32 %v1434, 1.442695
  %v1436 = vpow.pop %v1435
  %v1437 = vadd.f32 %v1436, 1.0
  %v1438 = vrcp.pop %v1437
  %v1439 = vmul.f32 1.0, %v1438
  %v1440 = vadd.f32 %v1426, %v1324
  %1442 = vrot.lane.b32.xlu0 %v1440, 96
  %v1443 = vpop.permute.xlu0 %1442
  %v1445 = vmul.f32 %v1439, %v1443
  %1447 = vrot.lane.b32.xlu0 %v1445, 32
  %v1448 = vpop.permute.xlu0 %1447
  %v1450 = vadd.f32 %v1431, %v1448
  %v1451 = vtanh.pop %v1450
  %v1452 = vsub.f32 1.0, %v1439
  %1454 = vrot.lane.b32.xlu0 %v1451, 112
  %v1455 = vpop.permute.xlu0 %1454
  %v1457 = vmul.f32 %v1452, %v1455
  %1459 = vrot.lane.b32.xlu0 %v1386, 16
  %v1460 = vpop.permute.xlu0 %1459
  %v1462 = vmul.f32 %v1439, %v1460
  %v1463 = vadd.f32 %v1457, %v1462
  %v1464 = vadd.f32 %v1432, %v1426
  %v1465 = vxor.u32 %v1464, 2147483648
  %v1466 = vmul.f32 %v1465, 1.442695
  %v1467 = vpow.pop %v1466
  %v1468 = vadd.f32 %v1467, 1.0
  %v1469 = vrcp.pop %v1468
  %v1470 = vmul.f32 1.0, %v1469
  %v1471 = vadd.f32 %v1426, %v1354
  %1473 = vrot.lane.b32.xlu0 %v1471, 96
  %v1474 = vpop.permute.xlu0 %1473
  %v1476 = vmul.f32 %v1470, %v1474
  %1478 = vrot.lane.b32.xlu0 %v1476, 32
  %v1479 = vpop.permute.xlu0 %1478
  %v1481 = vadd.f32 %v1432, %v1479
  %v1482 = vtanh.pop %v1481
  %v1483 = vsub.f32 1.0, %v1470
  %1485 = vrot.lane.b32.xlu0 %v1482, 112
  %v1486 = vpop.permute.xlu0 %1485
  %v1488 = vmul.f32 %v1483, %v1486
  %1489 = vrot.lane.b32.xlu0 %v1386, 48
  %v1490 = vpop.permute.xlu0 %1489
  %v1492 = vmul.f32 %v1470, %v1490
  %v1493 = vadd.f32 %v1488, %v1492
  %1495 = vrot.lane.b32.xlu0 %v1463, 112
  %v1496 = vpop.permute.xlu0 %1495
  %1498 = vst.msk [vmem:[%s404] sm:$0xff] %vm281, %v1496
  %1500 = vrot.lane.b32.xlu0 %v1493, 80
  %v1501 = vpop.permute.xlu0 %1500
  %1503 = vst.msk [vmem:[%s410] sm:$0xff] %vm288, %v1501
  %v1504 = vsel %vm281, %v1496, %v1501
  %v1505 = vpack.c.bf16 %v1504, %v1504
  %v1507 = vsel %vm62, %v1505, 0
  %1509 = vmatprep.subr.bf16.mxu0 0
  %1510 = vmatpush1.bf16.msra.mxu0 %v1265
  %1511 = vmatprep.subr.bf16.mxu0 0
  %1512 = vmatpush1.bf16.msra.mxu0 %v1266
  %1513 = vmatprep.subr.bf16.mxu0 0
  %1514 = vmatpush1.bf16.msra.mxu0 0
  %1515 = vmatprep.subr.bf16.mxu0 0
  %1516 = vmatpush1.bf16.msra.mxu0 0
  %1517 = vmatprep.subr.bf16.mxu0 0
  %1518 = vmatpush1.bf16.msra.mxu0 0
  %1519 = vmatprep.subr.bf16.mxu0 0
  %1520 = vmatpush1.bf16.msra.mxu0 0
  %1521 = vmatprep.subr.bf16.mxu0 0
  %1522 = vmatpush1.bf16.msra.mxu0 0
  %1523 = vmatprep.subr.bf16.mxu0 0
  %1524 = vmatpush1.bf16.msra.mxu0 0
  %1525 = vmatprep.subr.bf16.mxu0 0
  %1526 = vmatpush1.bf16.msra.mxu0 0
  %1527 = vmatprep.subr.bf16.mxu0 0
  %1528 = vmatpush1.bf16.msra.mxu0 0
  %1529 = vmatprep.subr.bf16.mxu0 0
  %1530 = vmatpush1.bf16.msra.mxu0 0
  %1531 = vmatprep.subr.bf16.mxu0 0
  %1532 = vmatpush1.bf16.msra.mxu0 0
  %1533 = vmatprep.subr.bf16.mxu0 0
  %1534 = vmatpush1.bf16.msra.mxu0 0
  %1535 = vmatprep.subr.bf16.mxu0 0
  %1536 = vmatpush1.bf16.msra.mxu0 0
  %1537 = vmatprep.subr.bf16.mxu0 0
  %1538 = vmatpush1.bf16.msra.mxu0 0
  %1539 = vmatprep.subr.bf16.mxu0 0
  %1540 = vmatpush1.bf16.msra.mxu0 0
  %1541 = vmatprep.mubr.bf16.mxu0 0
  %1542 = vmatmul.mubr.bf16.gmra.mrb[0].mxu0 %v1507
  %v1543 = vpop.f32.mrb[0].mxu0
  %v1544 = vadd.f32 0.0, %v1543
  %v1545 = vpop.f32.mrb[0].mxu0
  %v1546 = vpop.f32.mrb[0].mxu0
  %v1547 = vpop.f32.mrb[0].mxu0
  %1548 = vdwg.mxu0
  %v1549 = vld [vmem:[%s457] sm:$0xff]
  %v1550 = vld [vmem:[%s459] sm:$0xff]
  %v1551 = vadd.f32 %v1549, %v1544
  %v1552 = vxor.u32 %v1551, 2147483648
  %v1553 = vmul.f32 %v1552, 1.442695
  %v1554 = vpow.pop %v1553
  %v1555 = vadd.f32 %v1554, 1.0
  %v1556 = vrcp.pop %v1555
  %v1557 = vmul.f32 1.0, %v1556
  %v1558 = vadd.f32 %v1544, %v1324
  %1560 = vrot.lane.b32.xlu0 %v1558, 96
  %v1561 = vpop.permute.xlu0 %1560
  %v1563 = vmul.f32 %v1557, %v1561
  %1565 = vrot.lane.b32.xlu0 %v1563, 32
  %v1566 = vpop.permute.xlu0 %1565
  %v1568 = vadd.f32 %v1549, %v1566
  %v1569 = vtanh.pop %v1568
  %v1570 = vsub.f32 1.0, %v1557
  %1572 = vrot.lane.b32.xlu0 %v1569, 112
  %v1573 = vpop.permute.xlu0 %1572
  %v1575 = vmul.f32 %v1570, %v1573
  %1577 = vrot.lane.b32.xlu0 %v1504, 16
  %v1578 = vpop.permute.xlu0 %1577
  %v1580 = vmul.f32 %v1557, %v1578
  %v1581 = vadd.f32 %v1575, %v1580
  %v1582 = vadd.f32 %v1550, %v1544
  %v1583 = vxor.u32 %v1582, 2147483648
  %v1584 = vmul.f32 %v1583, 1.442695
  %v1585 = vpow.pop %v1584
  %v1586 = vadd.f32 %v1585, 1.0
  %v1587 = vrcp.pop %v1586
  %v1588 = vmul.f32 1.0, %v1587
  %v1589 = vadd.f32 %v1544, %v1354
  %1591 = vrot.lane.b32.xlu0 %v1589, 96
  %v1592 = vpop.permute.xlu0 %1591
  %v1594 = vmul.f32 %v1588, %v1592
  %1596 = vrot.lane.b32.xlu0 %v1594, 32
  %v1597 = vpop.permute.xlu0 %1596
  %v1599 = vadd.f32 %v1550, %v1597
  %v1600 = vtanh.pop %v1599
  %v1601 = vsub.f32 1.0, %v1588
  %1603 = vrot.lane.b32.xlu0 %v1600, 112
  %v1604 = vpop.permute.xlu0 %1603
  %v1606 = vmul.f32 %v1601, %v1604
  %1607 = vrot.lane.b32.xlu0 %v1504, 48
  %v1608 = vpop.permute.xlu0 %1607
  %v1610 = vmul.f32 %v1588, %v1608
  %v1611 = vadd.f32 %v1606, %v1610
  %1613 = vrot.lane.b32.xlu0 %v1581, 112
  %v1614 = vpop.permute.xlu0 %1613
  %1616 = vst.msk [vmem:[%s526] sm:$0xff] %vm281, %v1614
  %1618 = vrot.lane.b32.xlu0 %v1611, 80
  %v1619 = vpop.permute.xlu0 %1618
  %1621 = vst.msk [vmem:[%s532] sm:$0xff] %vm288, %v1619
  %v1622 = vsel %vm281, %v1614, %v1619
  %v1623 = vpack.c.bf16 %v1622, %v1622
  %v1625 = vsel %vm62, %v1623, 0
  %1627 = vmatprep.subr.bf16.mxu0 0
  %1628 = vmatpush1.bf16.msra.mxu0 %v1265
  %1629 = vmatprep.subr.bf16.mxu0 0
  %1630 = vmatpush1.bf16.msra.mxu0 %v1266
  %1631 = vmatprep.subr.bf16.mxu0 0
  %1632 = vmatpush1.bf16.msra.mxu0 0
  %1633 = vmatprep.subr.bf16.mxu0 0
  %1634 = vmatpush1.bf16.msra.mxu0 0
  %1635 = vmatprep.subr.bf16.mxu0 0
  %1636 = vmatpush1.bf16.msra.mxu0 0
  %1637 = vmatprep.subr.bf16.mxu0 0
  %1638 = vmatpush1.bf16.msra.mxu0 0
  %1639 = vmatprep.subr.bf16.mxu0 0
  %1640 = vmatpush1.bf16.msra.mxu0 0
  %1641 = vmatprep.subr.bf16.mxu0 0
  %1642 = vmatpush1.bf16.msra.mxu0 0
  %1643 = vmatprep.subr.bf16.mxu0 0
  %1644 = vmatpush1.bf16.msra.mxu0 0
  %1645 = vmatprep.subr.bf16.mxu0 0
  %1646 = vmatpush1.bf16.msra.mxu0 0
  %1647 = vmatprep.subr.bf16.mxu0 0
  %1648 = vmatpush1.bf16.msra.mxu0 0
  %1649 = vmatprep.subr.bf16.mxu0 0
  %1650 = vmatpush1.bf16.msra.mxu0 0
  %1651 = vmatprep.subr.bf16.mxu0 0
  %1652 = vmatpush1.bf16.msra.mxu0 0
  %1653 = vmatprep.subr.bf16.mxu0 0
  %1654 = vmatpush1.bf16.msra.mxu0 0
  %1655 = vmatprep.subr.bf16.mxu0 0
  %1656 = vmatpush1.bf16.msra.mxu0 0
  %1657 = vmatprep.subr.bf16.mxu0 0
  %1658 = vmatpush1.bf16.msra.mxu0 0
  %1659 = vmatprep.mubr.bf16.mxu0 0
  %1660 = vmatmul.mubr.bf16.gmra.mrb[0].mxu0 %v1625
  %v1661 = vpop.f32.mrb[0].mxu0
  %v1662 = vadd.f32 0.0, %v1661
  %v1663 = vpop.f32.mrb[0].mxu0
  %v1664 = vpop.f32.mrb[0].mxu0
  %v1665 = vpop.f32.mrb[0].mxu0
  %1666 = vdwg.mxu0
  %v1667 = vld [vmem:[%s579] sm:$0xff]
  %v1668 = vld [vmem:[%s581] sm:$0xff]
  %v1669 = vadd.f32 %v1667, %v1662
  %v1670 = vxor.u32 %v1669, 2147483648
  %v1671 = vmul.f32 %v1670, 1.442695
  %v1672 = vpow.pop %v1671
  %v1673 = vadd.f32 %v1672, 1.0
  %v1674 = vrcp.pop %v1673
  %v1675 = vmul.f32 1.0, %v1674
  %v1676 = vadd.f32 %v1662, %v1324
  %1678 = vrot.lane.b32.xlu0 %v1676, 96
  %v1679 = vpop.permute.xlu0 %1678
  %v1681 = vmul.f32 %v1675, %v1679
  %1683 = vrot.lane.b32.xlu0 %v1681, 32
  %v1684 = vpop.permute.xlu0 %1683
  %v1686 = vadd.f32 %v1667, %v1684
  %v1687 = vtanh.pop %v1686
  %v1688 = vsub.f32 1.0, %v1675
  %1690 = vrot.lane.b32.xlu0 %v1687, 112
  %v1691 = vpop.permute.xlu0 %1690
  %v1693 = vmul.f32 %v1688, %v1691
  %1695 = vrot.lane.b32.xlu0 %v1622, 16
  %v1696 = vpop.permute.xlu0 %1695
  %v1698 = vmul.f32 %v1675, %v1696
  %v1699 = vadd.f32 %v1693, %v1698
  %v1700 = vadd.f32 %v1668, %v1662
  %v1701 = vxor.u32 %v1700, 2147483648
  %v1702 = vmul.f32 %v1701, 1.442695
  %v1703 = vpow.pop %v1702
  %v1704 = vadd.f32 %v1703, 1.0
  %v1705 = vrcp.pop %v1704
  %v1706 = vmul.f32 1.0, %v1705
  %v1707 = vadd.f32 %v1662, %v1354
  %1709 = vrot.lane.b32.xlu0 %v1707, 96
  %v1710 = vpop.permute.xlu0 %1709
  %v1712 = vmul.f32 %v1706, %v1710
  %1714 = vrot.lane.b32.xlu0 %v1712, 32
  %v1715 = vpop.permute.xlu0 %1714
  %v1717 = vadd.f32 %v1668, %v1715
  %v1718 = vtanh.pop %v1717
  %v1719 = vsub.f32 1.0, %v1706
  %1721 = vrot.lane.b32.xlu0 %v1718, 112
  %v1722 = vpop.permute.xlu0 %1721
  %v1724 = vmul.f32 %v1719, %v1722
  %1725 = vrot.lane.b32.xlu0 %v1622, 48
  %v1726 = vpop.permute.xlu0 %1725
  %v1728 = vmul.f32 %v1706, %v1726
  %v1729 = vadd.f32 %v1724, %v1728
  %1731 = vrot.lane.b32.xlu0 %v1699, 112
  %v1732 = vpop.permute.xlu0 %1731
  %1734 = vst.msk [vmem:[%s648] sm:$0xff] %vm281, %v1732
  %1736 = vrot.lane.b32.xlu0 %v1729, 80
  %v1737 = vpop.permute.xlu0 %1736
  %1739 = vst.msk [vmem:[%s654] sm:$0xff] %vm288, %v1737
  %v1740 = vsel %vm281, %v1732, %v1737
  %v1741 = vpack.c.bf16 %v1740, %v1740
  %v1743 = vsel %vm62, %v1741, 0
  %1745 = vmatprep.subr.bf16.mxu0 0
  %1746 = vmatpush1.bf16.msra.mxu0 %v1265
  %1747 = vmatprep.subr.bf16.mxu0 0
  %1748 = vmatpush1.bf16.msra.mxu0 %v1266
  %1749 = vmatprep.subr.bf16.mxu0 0
  %1750 = vmatpush1.bf16.msra.mxu0 0
  %1751 = vmatprep.subr.bf16.mxu0 0
  %1752 = vmatpush1.bf16.msra.mxu0 0
  %1753 = vmatprep.subr.bf16.mxu0 0
  %1754 = vmatpush1.bf16.msra.mxu0 0
  %1755 = vmatprep.subr.bf16.mxu0 0
  %1756 = vmatpush1.bf16.msra.mxu0 0
  %1757 = vmatprep.subr.bf16.mxu0 0
  %1758 = vmatpush1.bf16.msra.mxu0 0
  %1759 = vmatprep.subr.bf16.mxu0 0
  %1760 = vmatpush1.bf16.msra.mxu0 0
  %1761 = vmatprep.subr.bf16.mxu0 0
  %1762 = vmatpush1.bf16.msra.mxu0 0
  %1763 = vmatprep.subr.bf16.mxu0 0
  %1764 = vmatpush1.bf16.msra.mxu0 0
  %1765 = vmatprep.subr.bf16.mxu0 0
  %1766 = vmatpush1.bf16.msra.mxu0 0
  %1767 = vmatprep.subr.bf16.mxu0 0
  %1768 = vmatpush1.bf16.msra.mxu0 0
  %1769 = vmatprep.subr.bf16.mxu0 0
  %1770 = vmatpush1.bf16.msra.mxu0 0
  %1771 = vmatprep.subr.bf16.mxu0 0
  %1772 = vmatpush1.bf16.msra.mxu0 0
  %1773 = vmatprep.subr.bf16.mxu0 0
  %1774 = vmatpush1.bf16.msra.mxu0 0
  %1775 = vmatprep.subr.bf16.mxu0 0
  %1776 = vmatpush1.bf16.msra.mxu0 0
  %1777 = vmatprep.mubr.bf16.mxu0 0
  %1778 = vmatmul.mubr.bf16.gmra.mrb[0].mxu0 %v1743
  %v1779 = vpop.f32.mrb[0].mxu0
  %v1780 = vadd.f32 0.0, %v1779
  %v1781 = vpop.f32.mrb[0].mxu0
  %v1782 = vpop.f32.mrb[0].mxu0
  %v1783 = vpop.f32.mrb[0].mxu0
  %1784 = vdwg.mxu0
  %v1785 = vld [vmem:[%s581] sm:$0xff]
  %v1786 = vld [vmem:[%s579] sm:$0xff]
  %v1787 = vadd.f32 %v1785, %v1780
  %v1788 = vxor.u32 %v1787, 2147483648
  %v1789 = vmul.f32 %v1788, 1.442695
  %v1790 = vpow.pop %v1789
  %v1791 = vadd.f32 %v1790, 1.0
  %v1792 = vrcp.pop %v1791
  %v1793 = vmul.f32 1.0, %v1792
  %v1794 = vadd.f32 %v1780, %v1324
  %1796 = vrot.lane.b32.xlu0 %v1794, 96
  %v1797 = vpop.permute.xlu0 %1796
  %v1799 = vmul.f32 %v1793, %v1797
  %1801 = vrot.lane.b32.xlu0 %v1799, 32
  %v1802 = vpop.permute.xlu0 %1801
  %v1804 = vadd.f32 %v1785, %v1802
  %v1805 = vtanh.pop %v1804
  %v1806 = vsub.f32 1.0, %v1793
  %1808 = vrot.lane.b32.xlu0 %v1805, 112
  %v1809 = vpop.permute.xlu0 %1808
  %v1811 = vmul.f32 %v1806, %v1809
  %1813 = vrot.lane.b32.xlu0 %v1740, 16
  %v1814 = vpop.permute.xlu0 %1813
  %v1816 = vmul.f32 %v1793, %v1814
  %v1817 = vadd.f32 %v1811, %v1816
  %v1818 = vadd.f32 %v1786, %v1780
  %v1819 = vxor.u32 %v1818, 2147483648
  %v1820 = vmul.f32 %v1819, 1.442695
  %v1821 = vpow.pop %v1820
  %v1822 = vadd.f32 %v1821, 1.0
  %v1823 = vrcp.pop %v1822
  %v1824 = vmul.f32 1.0, %v1823
  %v1825 = vadd.f32 %v1780, %v1354
  %1827 = vrot.lane.b32.xlu0 %v1825, 96
  %v1828 = vpop.permute.xlu0 %1827
  %v1830 = vmul.f32 %v1824, %v1828
  %1832 = vrot.lane.b32.xlu0 %v1830, 32
  %v1833 = vpop.permute.xlu0 %1832
  %v1835 = vadd.f32 %v1786, %v1833
  %v1836 = vtanh.pop %v1835
  %v1837 = vsub.f32 1.0, %v1824
  %1839 = vrot.lane.b32.xlu0 %v1836, 112
  %v1840 = vpop.permute.xlu0 %1839
  %v1842 = vmul.f32 %v1837, %v1840
  %1843 = vrot.lane.b32.xlu0 %v1740, 48
  %v1844 = vpop.permute.xlu0 %1843
  %v1846 = vmul.f32 %v1824, %v1844
  %v1847 = vadd.f32 %v1842, %v1846
  %1849 = vrot.lane.b32.xlu0 %v1817, 112
  %v1850 = vpop.permute.xlu0 %1849
  %1852 = vst.msk [vmem:[%s654] sm:$0xff] %vm281, %v1850
  %1854 = vrot.lane.b32.xlu0 %v1847, 80
  %v1855 = vpop.permute.xlu0 %1854
  %1857 = vst.msk [vmem:[%s648] sm:$0xff] %vm288, %v1855
  %v1858 = vsel %vm281, %v1850, %v1855
  %v1859 = vpack.c.bf16 %v1858, %v1858
  %v1861 = vsel %vm62, %v1859, 0
  %1863 = vmatprep.subr.bf16.mxu0 0
  %1864 = vmatpush1.bf16.msra.mxu0 %v1265
  %1865 = vmatprep.subr.bf16.mxu0 0
  %1866 = vmatpush1.bf16.msra.mxu0 %v1266
  %1867 = vmatprep.subr.bf16.mxu0 0
  %1868 = vmatpush1.bf16.msra.mxu0 0
  %1869 = vmatprep.subr.bf16.mxu0 0
  %1870 = vmatpush1.bf16.msra.mxu0 0
  %1871 = vmatprep.subr.bf16.mxu0 0
  %1872 = vmatpush1.bf16.msra.mxu0 0
  %1873 = vmatprep.subr.bf16.mxu0 0
  %1874 = vmatpush1.bf16.msra.mxu0 0
  %1875 = vmatprep.subr.bf16.mxu0 0
  %1876 = vmatpush1.bf16.msra.mxu0 0
  %1877 = vmatprep.subr.bf16.mxu0 0
  %1878 = vmatpush1.bf16.msra.mxu0 0
  %1879 = vmatprep.subr.bf16.mxu0 0
  %1880 = vmatpush1.bf16.msra.mxu0 0
  %1881 = vmatprep.subr.bf16.mxu0 0
  %1882 = vmatpush1.bf16.msra.mxu0 0
  %1883 = vmatprep.subr.bf16.mxu0 0
  %1884 = vmatpush1.bf16.msra.mxu0 0
  %1885 = vmatprep.subr.bf16.mxu0 0
  %1886 = vmatpush1.bf16.msra.mxu0 0
  %1887 = vmatprep.subr.bf16.mxu0 0
  %1888 = vmatpush1.bf16.msra.mxu0 0
  %1889 = vmatprep.subr.bf16.mxu0 0
  %1890 = vmatpush1.bf16.msra.mxu0 0
  %1891 = vmatprep.subr.bf16.mxu0 0
  %1892 = vmatpush1.bf16.msra.mxu0 0
  %1893 = vmatprep.subr.bf16.mxu0 0
  %1894 = vmatpush1.bf16.msra.mxu0 0
  %1895 = vmatprep.mubr.bf16.mxu0 0
  %1896 = vmatmul.mubr.bf16.gmra.mrb[0].mxu0 %v1861
  %v1897 = vpop.f32.mrb[0].mxu0
  %v1898 = vadd.f32 0.0, %v1897
  %v1899 = vpop.f32.mrb[0].mxu0
  %v1900 = vpop.f32.mrb[0].mxu0
  %v1901 = vpop.f32.mrb[0].mxu0
  %1902 = vdwg.mxu0
  %v1903 = vld [vmem:[%s459] sm:$0xff]
  %v1904 = vld [vmem:[%s457] sm:$0xff]
  %v1905 = vadd.f32 %v1903, %v1898
  %v1906 = vxor.u32 %v1905, 2147483648
  %v1907 = vmul.f32 %v1906, 1.442695
  %v1908 = vpow.pop %v1907
  %v1909 = vadd.f32 %v1908, 1.0
  %v1910 = vrcp.pop %v1909
  %v1911 = vmul.f32 1.0, %v1910
  %v1912 = vadd.f32 %v1898, %v1324
  %1914 = vrot.lane.b32.xlu0 %v1912, 96
  %v1915 = vpop.permute.xlu0 %1914
  %v1917 = vmul.f32 %v1911, %v1915
  %1919 = vrot.lane.b32.xlu0 %v1917, 32
  %v1920 = vpop.permute.xlu0 %1919
  %v1922 = vadd.f32 %v1903, %v1920
  %v1923 = vtanh.pop %v1922
  %v1924 = vsub.f32 1.0, %v1911
  %1926 = vrot.lane.b32.xlu0 %v1923, 112
  %v1927 = vpop.permute.xlu0 %1926
  %v1929 = vmul.f32 %v1924, %v1927
  %1931 = vrot.lane.b32.xlu0 %v1858, 16
  %v1932 = vpop.permute.xlu0 %1931
  %v1934 = vmul.f32 %v1911, %v1932
  %v1935 = vadd.f32 %v1929, %v1934
  %v1936 = vadd.f32 %v1904, %v1898
  %v1937 = vxor.u32 %v1936, 2147483648
  %v1938 = vmul.f32 %v1937, 1.442695
  %v1939 = vpow.pop %v1938
  %v1940 = vadd.f32 %v1939, 1.0
  %v1941 = vrcp.pop %v1940
  %v1942 = vmul.f32 1.0, %v1941
  %v1943 = vadd.f32 %v1898, %v1354
  %1945 = vrot.lane.b32.xlu0 %v1943, 96
  %v1946 = vpop.permute.xlu0 %1945
  %v1948 = vmul.f32 %v1942, %v1946
  %1950 = vrot.lane.b32.xlu0 %v1948, 32
  %v1951 = vpop.permute.xlu0 %1950
  %v1953 = vadd.f32 %v1904, %v1951
  %v1954 = vtanh.pop %v1953
  %v1955 = vsub.f32 1.0, %v1942
  %1957 = vrot.lane.b32.xlu0 %v1954, 112
  %v1958 = vpop.permute.xlu0 %1957
  %v1960 = vmul.f32 %v1955, %v1958
  %1961 = vrot.lane.b32.xlu0 %v1858, 48
  %v1962 = vpop.permute.xlu0 %1961
  %v1964 = vmul.f32 %v1942, %v1962
  %v1965 = vadd.f32 %v1960, %v1964
  %1967 = vrot.lane.b32.xlu0 %v1935, 112
  %v1968 = vpop.permute.xlu0 %1967
  %1970 = vst.msk [vmem:[%s532] sm:$0xff] %vm281, %v1968
  %1972 = vrot.lane.b32.xlu0 %v1965, 80
  %v1973 = vpop.permute.xlu0 %1972
  %1975 = vst.msk [vmem:[%s526] sm:$0xff] %vm288, %v1973
  %v1976 = vsel %vm281, %v1968, %v1973
  %v1977 = vpack.c.bf16 %v1976, %v1976
  %v1979 = vsel %vm62, %v1977, 0
  %1981 = vmatprep.subr.bf16.mxu0 0
  %1982 = vmatpush1.bf16.msra.mxu0 %v1265
  %1983 = vmatprep.subr.bf16.mxu0 0
  %1984 = vmatpush1.bf16.msra.mxu0 %v1266
  %1985 = vmatprep.subr.bf16.mxu0 0
  %1986 = vmatpush1.bf16.msra.mxu0 0
  %1987 = vmatprep.subr.bf16.mxu0 0
  %1988 = vmatpush1.bf16.msra.mxu0 0
  %1989 = vmatprep.subr.bf16.mxu0 0
  %1990 = vmatpush1.bf16.msra.mxu0 0
  %1991 = vmatprep.subr.bf16.mxu0 0
  %1992 = vmatpush1.bf16.msra.mxu0 0
  %1993 = vmatprep.subr.bf16.mxu0 0
  %1994 = vmatpush1.bf16.msra.mxu0 0
  %1995 = vmatprep.subr.bf16.mxu0 0
  %1996 = vmatpush1.bf16.msra.mxu0 0
  %1997 = vmatprep.subr.bf16.mxu0 0
  %1998 = vmatpush1.bf16.msra.mxu0 0
  %1999 = vmatprep.subr.bf16.mxu0 0
  %2000 = vmatpush1.bf16.msra.mxu0 0
  %2001 = vmatprep.subr.bf16.mxu0 0
  %2002 = vmatpush1.bf16.msra.mxu0 0
  %2003 = vmatprep.subr.bf16.mxu0 0
  %2004 = vmatpush1.bf16.msra.mxu0 0
  %2005 = vmatprep.subr.bf16.mxu0 0
  %2006 = vmatpush1.bf16.msra.mxu0 0
  %2007 = vmatprep.subr.bf16.mxu0 0
  %2008 = vmatpush1.bf16.msra.mxu0 0
  %2009 = vmatprep.subr.bf16.mxu0 0
  %2010 = vmatpush1.bf16.msra.mxu0 0
  %2011 = vmatprep.subr.bf16.mxu0 0
  %2012 = vmatpush1.bf16.msra.mxu0 0
  %2013 = vmatprep.mubr.bf16.mxu0 0
  %2014 = vmatmul.mubr.bf16.gmra.mrb[0].mxu0 %v1979
  %v2015 = vpop.f32.mrb[0].mxu0
  %v2016 = vadd.f32 0.0, %v2015
  %v2017 = vpop.f32.mrb[0].mxu0
  %v2018 = vpop.f32.mrb[0].mxu0
  %v2019 = vpop.f32.mrb[0].mxu0
  %2020 = vdwg.mxu0
  %v2021 = vld [vmem:[%s337] sm:$0xff]
  %v2022 = vld [vmem:[%s335] sm:$0xff]
  %v2023 = vadd.f32 %v2021, %v2016
  %v2024 = vxor.u32 %v2023, 2147483648
  %v2025 = vmul.f32 %v2024, 1.442695
  %v2026 = vpow.pop %v2025
  %v2027 = vadd.f32 %v2026, 1.0
  %v2028 = vrcp.pop %v2027
  %v2029 = vmul.f32 1.0, %v2028
  %v2030 = vadd.f32 %v2016, %v1324
  %2032 = vrot.lane.b32.xlu0 %v2030, 96
  %v2033 = vpop.permute.xlu0 %2032
  %v2035 = vmul.f32 %v2029, %v2033
  %2037 = vrot.lane.b32.xlu0 %v2035, 32
  %v2038 = vpop.permute.xlu0 %2037
  %v2040 = vadd.f32 %v2021, %v2038
  %v2041 = vtanh.pop %v2040
  %v2042 = vsub.f32 1.0, %v2029
  %2044 = vrot.lane.b32.xlu0 %v2041, 112
  %v2045 = vpop.permute.xlu0 %2044
  %v2047 = vmul.f32 %v2042, %v2045
  %2049 = vrot.lane.b32.xlu0 %v1976, 16
  %v2050 = vpop.permute.xlu0 %2049
  %v2052 = vmul.f32 %v2029, %v2050
  %v2053 = vadd.f32 %v2047, %v2052
  %v2054 = vadd.f32 %v2022, %v2016
  %v2055 = vxor.u32 %v2054, 2147483648
  %v2056 = vmul.f32 %v2055, 1.442695
  %v2057 = vpow.pop %v2056
  %v2058 = vadd.f32 %v2057, 1.0
  %v2059 = vrcp.pop %v2058
  %v2060 = vmul.f32 1.0, %v2059
  %v2061 = vadd.f32 %v2016, %v1354
  %2063 = vrot.lane.b32.xlu0 %v2061, 96
  %v2064 = vpop.permute.xlu0 %2063
  %v2066 = vmul.f32 %v2060, %v2064
  %2068 = vrot.lane.b32.xlu0 %v2066, 32
  %v2069 = vpop.permute.xlu0 %2068
  %v2071 = vadd.f32 %v2022, %v2069
  %v2072 = vtanh.pop %v2071
  %v2073 = vsub.f32 1.0, %v2060
  %2075 = vrot.lane.b32.xlu0 %v2072, 112
  %v2076 = vpop.permute.xlu0 %2075
  %v2078 = vmul.f32 %v2073, %v2076
  %2079 = vrot.lane.b32.xlu0 %v1976, 48
  %v2080 = vpop.permute.xlu0 %2079
  %v2082 = vmul.f32 %v2060, %v2080
  %v2083 = vadd.f32 %v2078, %v2082
  %2085 = vrot.lane.b32.xlu0 %v2053, 112
  %v2086 = vpop.permute.xlu0 %2085
  %2088 = vst.msk [vmem:[%s410] sm:$0xff] %vm281, %v2086
  %2090 = vrot.lane.b32.xlu0 %v2083, 80
  %v2091 = vpop.permute.xlu0 %2090
  %2093 = vst.msk [vmem:[%s404] sm:$0xff] %vm288, %v2091
  %v2094 = vsel %vm281, %v2086, %v2091
  %v2095 = vpack.c.bf16 %v2094, %v2094
  %v2097 = vsel %vm62, %v2095, 0
  %2099 = vmatprep.subr.bf16.mxu0 0
  %2100 = vmatpush1.bf16.msra.mxu0 %v1265
  %2101 = vmatprep.subr.bf16.mxu0 0
  %2102 = vmatpush1.bf16.msra.mxu0 %v1266
  %2103 = vmatprep.subr.bf16.mxu0 0
  %2104 = vmatpush1.bf16.msra.mxu0 0
  %2105 = vmatprep.subr.bf16.mxu0 0
  %2106 = vmatpush1.bf16.msra.mxu0 0
  %2107 = vmatprep.subr.bf16.mxu0 0
  %2108 = vmatpush1.bf16.msra.mxu0 0
  %2109 = vmatprep.subr.bf16.mxu0 0
  %2110 = vmatpush1.bf16.msra.mxu0 0
  %2111 = vmatprep.subr.bf16.mxu0 0
  %2112 = vmatpush1.bf16.msra.mxu0 0
  %2113 = vmatprep.subr.bf16.mxu0 0
  %2114 = vmatpush1.bf16.msra.mxu0 0
  %2115 = vmatprep.subr.bf16.mxu0 0
  %2116 = vmatpush1.bf16.msra.mxu0 0
  %2117 = vmatprep.subr.bf16.mxu0 0
  %2118 = vmatpush1.bf16.msra.mxu0 0
  %2119 = vmatprep.subr.bf16.mxu0 0
  %2120 = vmatpush1.bf16.msra.mxu0 0
  %2121 = vmatprep.subr.bf16.mxu0 0
  %2122 = vmatpush1.bf16.msra.mxu0 0
  %2123 = vmatprep.subr.bf16.mxu0 0
  %2124 = vmatpush1.bf16.msra.mxu0 0
  %2125 = vmatprep.subr.bf16.mxu0 0
  %2126 = vmatpush1.bf16.msra.mxu0 0
  %2127 = vmatprep.subr.bf16.mxu0 0
  %2128 = vmatpush1.bf16.msra.mxu0 0
  %2129 = vmatprep.subr.bf16.mxu0 0
  %2130 = vmatpush1.bf16.msra.mxu0 0
  %2131 = vmatprep.mubr.bf16.mxu0 0
  %2132 = vmatmul.mubr.bf16.gmra.mrb[0].mxu0 %v2097
  %v2133 = vpop.f32.mrb[0].mxu0
  %v2134 = vadd.f32 0.0, %v2133
  %v2135 = vpop.f32.mrb[0].mxu0
  %v2136 = vpop.f32.mrb[0].mxu0
  %v2137 = vpop.f32.mrb[0].mxu0
  %2138 = vdwg.mxu0
  %v2139 = vld [vmem:[%s210] sm:$0xff]
  %v2140 = vld [vmem:[#allocation2] sm:$0xff]
  %v2141 = vadd.f32 %v2139, %v2134
  %v2142 = vxor.u32 %v2141, 2147483648
  %v2143 = vmul.f32 %v2142, 1.442695
  %v2144 = vpow.pop %v2143
  %v2145 = vadd.f32 %v2144, 1.0
  %v2146 = vrcp.pop %v2145
  %v2147 = vmul.f32 1.0, %v2146
  %v2148 = vadd.f32 %v2134, %v1324
  %2150 = vrot.lane.b32.xlu0 %v2148, 96
  %v2151 = vpop.permute.xlu0 %2150
  %v2153 = vmul.f32 %v2147, %v2151
  %2155 = vrot.lane.b32.xlu0 %v2153, 32
  %v2156 = vpop.permute.xlu0 %2155
  %v2158 = vadd.f32 %v2139, %v2156
  %v2159 = vtanh.pop %v2158
  %v2160 = vsub.f32 1.0, %v2147
  %2162 = vrot.lane.b32.xlu0 %v2159, 112
  %v2163 = vpop.permute.xlu0 %2162
  %v2165 = vmul.f32 %v2160, %v2163
  %2167 = vrot.lane.b32.xlu0 %v2094, 16
  %v2168 = vpop.permute.xlu0 %2167
  %v2170 = vmul.f32 %v2147, %v2168
  %v2171 = vadd.f32 %v2165, %v2170
  %v2172 = vadd.f32 %v2140, %v2134
  %v2173 = vxor.u32 %v2172, 2147483648
  %v2174 = vmul.f32 %v2173, 1.442695
  %v2175 = vpow.pop %v2174
  %v2176 = vadd.f32 %v2175, 1.0
  %v2177 = vrcp.pop %v2176
  %v2178 = vmul.f32 1.0, %v2177
  %v2179 = vadd.f32 %v2134, %v1354
  %2181 = vrot.lane.b32.xlu0 %v2179, 96
  %v2182 = vpop.permute.xlu0 %2181
  %v2184 = vmul.f32 %v2178, %v2182
  %2186 = vrot.lane.b32.xlu0 %v2184, 32
  %v2187 = vpop.permute.xlu0 %2186
  %v2189 = vadd.f32 %v2140, %v2187
  %v2190 = vtanh.pop %v2189
  %v2191 = vsub.f32 1.0, %v2178
  %2193 = vrot.lane.b32.xlu0 %v2190, 112
  %v2194 = vpop.permute.xlu0 %2193
  %v2196 = vmul.f32 %v2191, %v2194
  %2197 = vrot.lane.b32.xlu0 %v2094, 48
  %v2198 = vpop.permute.xlu0 %2197
  %v2200 = vmul.f32 %v2178, %v2198
  %v2201 = vadd.f32 %v2196, %v2200
  %2203 = vrot.lane.b32.xlu0 %v2171, 112
  %v2204 = vpop.permute.xlu0 %2203
  %2206 = vst.msk [vmem:[%s287] sm:$0xff] %vm281, %v2204
  %2208 = vrot.lane.b32.xlu0 %v2201, 80
  %v2209 = vpop.permute.xlu0 %2208
  %2211 = vst.msk [vmem:[#allocation3] sm:$0xff] %vm288, %v2209
  %v2212 = vld [vmem:[#allocation3] sm:$0xff]
  %v2213 = vld [vmem:[#allocation3 + $0x8] sm:$0xff]
  %v2214 = vld [vmem:[#allocation3 + $0x10] sm:$0xff]
  %v2215 = vld [vmem:[#allocation3 + $0x18] sm:$0xff]
  %v2216 = vld [vmem:[#allocation3 + $0x20] sm:$0xff]
  %v2217 = vld [vmem:[#allocation3 + $0x28] sm:$0xff]
  %v2218 = vld [vmem:[#allocation3 + $0x30] sm:$0xff]
  %v2219 = vld [vmem:[#allocation3 + $0x38] sm:$0xff]
  %vm2220 = vcmp.ge.f32.partialorder %v2212, 0.0
  %vm2221 = vcmp.ge.f32.partialorder %v2213, 0.0
  %vm2222 = vcmp.ge.f32.partialorder %v2214, 0.0
  %vm2223 = vcmp.ge.f32.partialorder %v2215, 0.0
  %vm2224 = vcmp.ge.f32.partialorder %v2216, 0.0
  %vm2225 = vcmp.ge.f32.partialorder %v2217, 0.0
  %vm2226 = vcmp.ge.f32.partialorder %v2218, 0.0
  %vm2227 = vcmp.ge.f32.partialorder %v2219, 0.0
  %v2228 = vmul.f32 %v2212, 0.2
  %v2229 = vmul.f32 %v2213, 0.2
  %v2230 = vmul.f32 %v2214, 0.2
  %v2231 = vmul.f32 %v2215, 0.2
  %v2232 = vmul.f32 %v2216, 0.2
  %v2233 = vmul.f32 %v2217, 0.2
  %v2234 = vmul.f32 %v2218, 0.2
  %v2235 = vmul.f32 %v2219, 0.2
  %v2236 = vsel %vm2220, %v2212, %v2228
  %v2237 = vsel %vm2221, %v2213, %v2229
  %v2238 = vsel %vm2222, %v2214, %v2230
  %v2239 = vsel %vm2223, %v2215, %v2231
  %v2240 = vsel %vm2224, %v2216, %v2232
  %v2241 = vsel %vm2225, %v2217, %v2233
  %v2242 = vsel %vm2226, %v2218, %v2234
  %v2243 = vsel %vm2227, %v2219, %v2235
  %v2244 = vpack.c.bf16 %v2237, %v2236
  %v2245 = vpack.c.bf16 %v2239, %v2238
  %v2246 = vpack.c.bf16 %v2241, %v2240
  %v2247 = vpack.c.bf16 %v2243, %v2242
  %v2248 = vld [vmem:[%s5] sm:$0xf]
  %v2249 = vld [vmem:[%s5 + $0x4] sm:$0xf]
  %v2250 = vld [vmem:[%s5 + $0x8] sm:$0xf]
  %v2251 = vld [vmem:[%s5 + $0xc] sm:$0xf]
  %v2252 = vld [vmem:[%s6] sm:$0x1]
  %v2254 = vlaneseq
  %v2255 = vshrl.u32 %v2254, 7
  %v2256 = vsub.s32 0, %v2255
  %v2257 = vrot.slane %v2252, %v2256
  %v2263 = vunpack.c.l.b16 %v2248
  %v2264 = vunpack.c.l.b16 %v2249
  %v2265 = vunpack.c.l.b16 %v2250
  %v2266 = vunpack.c.l.b16 %v2251
  %v2267 = vpack.c.b16 %v2264, %v2263
  %v2268 = vpack.c.b16 %v2266, %v2265
  %v2272 = vsel %vm62, %v2244, 0
  %v2275 = vsel %vm62, %v2245, 0
  %v2278 = vsel %vm62, %v2246, 0
  %v2281 = vsel %vm62, %v2247, 0
  %2283 = vmatprep.subr.bf16.mxu0 0
  %2284 = vmatpush1.bf16.msra.mxu0 %v2267
  %2285 = vmatprep.subr.bf16.mxu0 0
  %2286 = vmatpush1.bf16.msra.mxu0 %v2268
  %2287 = vmatprep.subr.bf16.mxu0 0
  %2288 = vmatpush1.bf16.msra.mxu0 0
  %2289 = vmatprep.subr.bf16.mxu0 0
  %2290 = vmatpush1.bf16.msra.mxu0 0
  %2291 = vmatprep.subr.bf16.mxu0 0
  %2292 = vmatpush1.bf16.msra.mxu0 0
  %2293 = vmatprep.subr.bf16.mxu0 0
  %2294 = vmatpush1.bf16.msra.mxu0 0
  %2295 = vmatprep.subr.bf16.mxu0 0
  %2296 = vmatpush1.bf16.msra.mxu0 0
  %2297 = vmatprep.subr.bf16.mxu0 0
  %2298 = vmatpush1.bf16.msra.mxu0 0
  %2299 = vmatprep.subr.bf16.mxu0 0
  %2300 = vmatpush1.bf16.msra.mxu0 0
  %2301 = vmatprep.subr.bf16.mxu0 0
  %2302 = vmatpush1.bf16.msra.mxu0 0
  %2303 = vmatprep.subr.bf16.mxu0 0
  %2304 = vmatpush1.bf16.msra.mxu0 0
  %2305 = vmatprep.subr.bf16.mxu0 0
  %2306 = vmatpush1.bf16.msra.mxu0 0
  %2307 = vmatprep.subr.bf16.mxu0 0
  %2308 = vmatpush1.bf16.msra.mxu0 0
  %2309 = vmatprep.subr.bf16.mxu0 0
  %2310 = vmatpush1.bf16.msra.mxu0 0
  %2311 = vmatprep.subr.bf16.mxu0 0
  %2312 = vmatpush1.bf16.msra.mxu0 0
  %2313 = vmatprep.subr.bf16.mxu0 0
  %2314 = vmatpush1.bf16.msra.mxu0 0
  %2315 = vmatprep.mubr.bf16.mxu0 0
  %2316 = vmatmul.mubr.bf16.gmra.mrb[0].mxu0 %v2272
  %v2317 = vpop.f32.mrb[0].mxu0
  %v2318 = vadd.f32 %v2257, %v2317
  %v2319 = vpop.f32.mrb[0].mxu0
  %v2320 = vpop.f32.mrb[0].mxu0
  %v2321 = vadd.f32 %v2257, %v2320
  %v2322 = vpop.f32.mrb[0].mxu0
  %2323 = vmatprep.mubr.bf16.mxu0 0
  %2324 = vmatmul.mubr.bf16.gmra.mrb[0].mxu0 %v2275
  %v2325 = vpop.f32.mrb[0].mxu0
  %v2326 = vadd.f32 %v2257, %v2325
  %v2327 = vpop.f32.mrb[0].mxu0
  %v2328 = vpop.f32.mrb[0].mxu0
  %v2329 = vadd.f32 %v2257, %v2328
  %v2330 = vpop.f32.mrb[0].mxu0
  %2331 = vmatprep.mubr.bf16.mxu0 0
  %2332 = vmatmul.mubr.bf16.gmra.mrb[0].mxu0 %v2278
  %v2333 = vpop.f32.mrb[0].mxu0
  %v2334 = vadd.f32 %v2257, %v2333
  %v2335 = vpop.f32.mrb[0].mxu0
  %v2336 = vpop.f32.mrb[0].mxu0
  %v2337 = vadd.f32 %v2257, %v2336
  %v2338 = vpop.f32.mrb[0].mxu0
  %2339 = vmatprep.mubr.bf16.mxu0 0
  %2340 = vmatmul.mubr.bf16.gmra.mrb[0].mxu0 %v2281
  %v2341 = vpop.f32.mrb[0].mxu0
  %v2342 = vadd.f32 %v2257, %v2341
  %v2343 = vpop.f32.mrb[0].mxu0
  %v2344 = vpop.f32.mrb[0].mxu0
  %v2345 = vadd.f32 %v2257, %v2344
  %v2346 = vpop.f32.mrb[0].mxu0
  %2347 = vdwg.mxu0
  %vm2348 = vcmask 195584
  %2349 = vst.msk [vmem:[%s7] sm:$0xff] %vm2348, %v2318
  %2350 = vst.msk [vmem:[%s7 + $0x8] sm:$0xff] %vm2348, %v2321
  %2351 = vst.msk [vmem:[%s7 + $0x10] sm:$0xff] %vm2348, %v2326
  %2352 = vst.msk [vmem:[%s7 + $0x18] sm:$0xff] %vm2348, %v2329
  %2353 = vst.msk [vmem:[%s7 + $0x20] sm:$0xff] %vm2348, %v2334
  %2354 = vst.msk [vmem:[%s7 + $0x28] sm:$0xff] %vm2348, %v2337
  %2355 = vst.msk [vmem:[%s7 + $0x30] sm:$0xff] %vm2348, %v2342
  %2356 = vst.msk [vmem:[%s7 + $0x38] sm:$0xff] %vm2348, %v2345
  // Predicated region
  $region30: #{decoder_block_forward.1} parent=0 // pred_check
    _
  $region31: #{decoder_block_forward.1} parent=0 // pred_check_branch
    %2358 = sbr.rel (0) target = $region33
  $region32: #{decoder_block_forward.1} parent=0 // pred_region
    _
  $region33: #{decoder_block_forward.1} parent=0 // pred_fallthru
    _
  // Predicated region
  $region34: #{decoder_block_forward.1} parent=0 // pred_check
    _
  $region35: #{decoder_block_forward.1} parent=0 // pred_check_branch
    %2360 = sbr.rel (0) target = $region37
  $region36: #{decoder_block_forward.1} parent=0 // pred_region
    _
  $region37: #{decoder_block_forward.1} parent=0 // pred_fallthru
    _

</llo_original>
